<compile_context>
chip_gen: v7x
topology: tpu7x:2x2x1
jax: 0.10.0
libtpu: 0.0.40
codegen_flags: <defaults>
</compile_context>

<pallas_src>
import functools
import math

import jax
import jax.numpy as jnp
from jax.experimental import pallas as pl
from jax.experimental.pallas import tpu as pltpu


def _make_kernel(num_lstm_layers, num_mlp_hidden, hidden_size, chunk):
    """Fused FCLSTMSubNet forward: one grid step == `chunk` timesteps."""
    H = hidden_size
    L = num_lstm_layers
    C = chunk

    def kernel(*refs):
        # ---- parse refs: inputs..., outputs..., scratch ----
        h0_ref, c0_ref, x_ref = refs[0], refs[1], refs[2]
        idx = 3
        lstm_p = []
        for _ in range(L):
            # (in_dim,4H) bf16, (H,4H) bf16, (1,4H) f32   (g cols pre-scaled x2)
            lstm_p.append((refs[idx], refs[idx + 1], refs[idx + 2]))
            idx += 3
        mlp_ws = [refs[idx + i] for i in range(num_mlp_hidden)]
        idx += num_mlp_hidden
        w_out, b_out = refs[idx], refs[idx + 1]
        idx += 2
        y_ref, h_out_ref, c_out_ref = refs[idx], refs[idx + 1], refs[idx + 2]
        idx += 3
        h_sc, c_sc = refs[idx], refs[idx + 1]          # (L, B, H) f32 state carry

        tc = pl.program_id(0)

        @pl.when(tc == 0)
        def _():
            h_sc[...] = h0_ref[...]
            c_sc[...] = c0_ref[...]

        # ---- C consecutive timesteps, statically unrolled in one trace ----
        for i in range(C):
            x = x_ref[i]                                # (B, dim) f32
            # stacked LSTM, one timestep (x.unsqueeze(0) in the PyTorch module)
            for l in range(L):
                w_ih, w_hh, b = lstm_p[l]
                h = h_sc[l]                             # (B, H) leading-axis view
                c = c_sc[l]
                z = (jnp.dot(x.astype(jnp.bfloat16), w_ih[...],
                             preferred_element_type=jnp.float32)
                     + jnp.dot(h.astype(jnp.bfloat16), w_hh[...],
                               preferred_element_type=jnp.float32)
                     + b[...])
                # ONE full-width sigmoid over (B, 4H); g-gate columns of the
                # weights/bias were pre-scaled by 2, so 2*sigmoid(2 z_g) - 1
                # reproduces tanh(z_g) exactly (math identity).
                sg = jax.nn.sigmoid(z)
                # PyTorch gate order: i, f, g, o
                i_g = sg[:, 0:H]
                f_g = sg[:, H:2 * H]
                g_g = 2.0 * sg[:, 2 * H:3 * H] - 1.0
                o_g = sg[:, 3 * H:4 * H]
                c_new = f_g * c + i_g * g_g
                h_new = o_g * jnp.tanh(c_new)
                h_sc[l] = h_new
                c_sc[l] = c_new
                x = h_new

            # bias-free Linear + Tanh stack
            for w in mlp_ws:
                x = jnp.tanh(jnp.dot(x.astype(jnp.bfloat16), w[...],
                                     preferred_element_type=jnp.float32))

            # final Linear (bias); `/dim` already folded into w_out / b_out
            y_ref[i] = jnp.dot(x.astype(jnp.bfloat16), w_out[...],
                               preferred_element_type=jnp.float32) + b_out[...]

        @pl.when(tc == pl.num_programs(0) - 1)
        def _():
            h_out_ref[...] = h_sc[...]
            c_out_ref[...] = c_sc[...]

    return kernel


def fclstm_forward_seq(x_seq, h0, c0, lstm_params, mlp_ws, w_out, b_out,
                       *, dim, hidden_size, max_chunk=16):
    """Apply FCLSTMSubNet.forward to every timestep of x_seq in one pallas_call.

    x_seq: (T, B, dim);  h0/c0: (L, B, H) (PyTorch LSTM layout).
    Returns (y_seq (T, B, dim), (h_n, c_n) each (L, B, H)).  Per-step semantics
    match the PyTorch module called T times with the hidden state threaded
    through (T=1 reproduces a single module call).
    """
    T, B, _ = x_seq.shape
    L = h0.shape[0]
    H = hidden_size
    assert T >= 1, "need at least one timestep (h_n/c_n undefined for T == 0)"

    # chunk size: largest divisor of T that is <= max_chunk, so no padded
    # timestep ever touches the recurrent state.
    C = max(d for d in range(1, min(T, max_chunk) + 1) if T % d == 0)
    n_chunks = T // C

    # ---- one-time parameter glue (layout only; scalings are exact math) ----
    def scale_g(a):
        # multiply the g-gate columns (2H:3H) by 2 (power-of-two -> exact,
        # commutes with the bf16 cast).  Enables the sigmoid-only gate trick.
        return a.at[:, 2 * H:3 * H].multiply(2.0)

    lstm_in = []
    for (w_ih_t, w_hh_t, b) in lstm_params:
        lstm_in += [scale_g(w_ih_t).astype(jnp.bfloat16),
                    scale_g(w_hh_t).astype(jnp.bfloat16),
                    scale_g(b).astype(jnp.float32)]
    mlp_bf = [w.astype(jnp.bfloat16) for w in mlp_ws]
    w_out_s = (w_out / jnp.float32(dim)).astype(jnp.bfloat16)  # exact: dim = 2^k
    b_out_s = (b_out / jnp.float32(dim)).astype(jnp.float32)

    inputs = [h0, c0, x_seq] + lstm_in + mlp_bf + [w_out_s, b_out_s]

    def const_spec(shape):
        # constant block index -> array DMA'd once, resident in VMEM all grid
        return pl.BlockSpec(shape, lambda tc: (0,) * len(shape))

    in_specs = [
        const_spec((L, B, H)),                               # h0
        const_spec((L, B, H)),                               # c0
        pl.BlockSpec((C, B, dim), lambda tc: (tc, 0, 0)),    # x chunk per step
    ]
    in_specs += [const_spec(a.shape) for a in lstm_in]
    in_specs += [const_spec(w.shape) for w in mlp_bf]
    in_specs += [const_spec(w_out_s.shape), const_spec(b_out_s.shape)]

    out_shapes = (
        jax.ShapeDtypeStruct((T, B, dim), jnp.float32),
        jax.ShapeDtypeStruct((L, B, H), jnp.float32),
        jax.ShapeDtypeStruct((L, B, H), jnp.float32),
    )
    out_specs = (
        pl.BlockSpec((C, B, dim), lambda tc: (tc, 0, 0)),    # y chunk per step
        const_spec((L, B, H)),
        const_spec((L, B, H)),
    )

    # advisory cost hint so XLA schedules surrounding ops around the custom call
    mm_elems = ((dim + H) * 4 * H
                + (L - 1) * (2 * H) * 4 * H
                + sum(w.shape[0] * w.shape[1] for w in mlp_ws)
                + w_out.shape[0] * w_out.shape[1])
    flops = 2 * B * T * mm_elems
    transcendentals = B * T * (L * 5 * H + sum(w.shape[1] for w in mlp_ws))
    bytes_accessed = sum(int(a.size) * a.dtype.itemsize for a in inputs)
    bytes_accessed += sum(math.prod(s.shape) * jnp.dtype(s.dtype).itemsize
                          for s in out_shapes)

    # VMEM budget: weights + one x/y chunk + state, double-buffer headroom,
    # floored generously for tiny configs, capped below v7x's 64 MiB physical.
    vmem_est = 4 * (bytes_accessed // max(1, n_chunks)
                    + sum(int(a.size) * a.dtype.itemsize for a in inputs[:2] + lstm_in)
                    + 2 * L * B * H * 4)
    vmem_limit = int(min(48 << 20, max(16 << 20, vmem_est)))

    kernel = _make_kernel(L, len(mlp_ws), H, C)
    y_seq, h_n, c_n = pl.pallas_call(
        kernel,
        out_shape=out_shapes,
        grid_spec=pltpu.PrefetchScalarGridSpec(
            num_scalar_prefetch=0,
            grid=(n_chunks,),
            in_specs=in_specs,
            out_specs=out_specs,
            scratch_shapes=[pltpu.VMEM((L, B, H), jnp.float32),
                            pltpu.VMEM((L, B, H), jnp.float32)],
        ),
        compiler_params=pltpu.CompilerParams(
            dimension_semantics=("arbitrary",),        # sequential recurrence
            vmem_limit_bytes=vmem_limit),
        cost_estimate=pl.CostEstimate(
            flops=flops, transcendentals=transcendentals,
            bytes_accessed=bytes_accessed),
    )(*inputs)

    return y_seq, (h_n, c_n)


def _ref_forward_seq(x_seq, h0, c0, lstm_params, mlp_ws, w_out, b_out, dim,
                     matmul_dtype=jnp.float32):
    """Module-faithful pure-JAX reference: one FCLSTMSubNet.forward per timestep."""
    if matmul_dtype == jnp.bfloat16:
        mm = lambda a, b: jnp.dot(a.astype(jnp.bfloat16), b.astype(jnp.bfloat16),
                                  preferred_element_type=jnp.float32)
    else:
        # pinned precision so the f32 reference doesn't silently run at bf16 default
        mm = lambda a, b: jnp.dot(a, b, precision=jax.lax.Precision.HIGHEST)

    L = h0.shape[0]
    H = lstm_params[0][1].shape[0]
    h = [h0[l] for l in range(L)]
    c = [c0[l] for l in range(L)]
    ys = []
    for t in range(x_seq.shape[0]):
        a = x_seq[t]
        for l, (w_ih, w_hh, b) in enumerate(lstm_params):
            z = mm(a, w_ih) + mm(h[l], w_hh) + b
            i = jax.nn.sigmoid(z[:, :H])
            f = jax.nn.sigmoid(z[:, H:2 * H])
            g = jnp.tanh(z[:, 2 * H:3 * H])
            o = jax.nn.sigmoid(z[:, 3 * H:])
            c[l] = f * c[l] + i * g
            h[l] = o * jnp.tanh(c[l])
            a = h[l]
        for w in mlp_ws:
            a = jnp.tanh(mm(a, w))
        ys.append((mm(a, w_out) + b_out) / dim)
    return jnp.stack(ys), jnp.stack(h), jnp.stack(c)


def init_params(key, dim, hidden_size, num_hiddens, num_lstm_layers):
    """Deterministic synthetic parameters (PyTorch-style U(-1/sqrt(H), 1/sqrt(H)))."""
    H = hidden_size
    layer_dims = [dim, H] + list(num_hiddens)
    scale = 1.0 / jnp.sqrt(jnp.float32(H))

    def unif(k, shape):
        return jax.random.uniform(k, shape, jnp.float32, -scale, scale)

    keys = iter(jax.random.split(key, 4 * num_lstm_layers + len(layer_dims) + 4))
    lstm_params = []
    for l in range(num_lstm_layers):
        in_dim = dim if l == 0 else H
        w_ih_t = unif(next(keys), (in_dim, 4 * H))            # transposed weight_ih_l{l}
        w_hh_t = unif(next(keys), (H, 4 * H))                 # transposed weight_hh_l{l}
        b = unif(next(keys), (1, 4 * H)) + unif(next(keys), (1, 4 * H))  # b_ih + b_hh
        lstm_params.append((w_ih_t, w_hh_t, b))

    mlp_ws = []
    for i in range(1, len(layer_dims) - 1):                   # bias-free Linears
        mlp_ws.append(unif(next(keys), (layer_dims[i], layer_dims[i + 1])))

    w_out = unif(next(keys), (layer_dims[-1], dim))           # final Linear (with bias)
    b_out = unif(next(keys), (1, dim))
    return lstm_params, mlp_ws, w_out, b_out


if __name__ == "__main__":
    # config: dim=8, lstm_hidden_size=32, num_hiddens=[32, 16], lstm_num_layers=2
    DIM, H, NUM_HIDDENS, L, B, T = 8, 32, [32, 16], 2, 8, 8

    key = jax.random.PRNGKey(0)
    k_x, k_h, k_c, k_p = jax.random.split(key, 4)
    x_seq = jax.random.normal(k_x, (T, B, DIM), jnp.float32)   # one x per timestep
    h0 = jax.random.normal(k_h, (L, B, H), jnp.float32)
    c0 = jax.random.normal(k_c, (L, B, H), jnp.float32)

    lstm_params, mlp_ws, w_out, b_out = init_params(k_p, DIM, H, NUM_HIDDENS, L)

    fwd = jax.jit(functools.partial(fclstm_forward_seq, dim=DIM, hidden_size=H))
    y_seq, (h_n, c_n) = fwd(x_seq, h0, c0, lstm_params, mlp_ws, w_out, b_out)
    jax.block_until_ready((y_seq, h_n, c_n))

    # 1) matched-precision reference (bf16 MXU operands, f32 gate math): tight tol
    y_m, h_m, c_m = _ref_forward_seq(x_seq, h0, c0, lstm_params, mlp_ws,
                                     w_out, b_out, DIM, matmul_dtype=jnp.bfloat16)
    assert jnp.allclose(y_seq, y_m, atol=5e-3, rtol=5e-3)
    assert jnp.allclose(h_n, h_m, atol=5e-3, rtol=5e-3)
    assert jnp.allclose(c_n, c_m, atol=5e-3, rtol=5e-3)

    # 2) full-f32 module-faithful reference: looser tol covers bf16 matmul operands
    y_r, h_r, c_r = _ref_forward_seq(x_seq, h0, c0, lstm_params, mlp_ws,
                                     w_out, b_out, DIM, matmul_dtype=jnp.float32)
    assert jnp.allclose(y_seq, y_r, atol=3e-2, rtol=3e-2)
    assert jnp.allclose(h_n, h_r, atol=3e-2, rtol=3e-2)
    assert jnp.allclose(c_n, c_r, atol=3e-2, rtol=3e-2)

    print("KERNEL_OK")
</pallas_src>

<mosaic_0001>
module attributes {stable_mosaic.version = 11 : i64} {
  func.func @kernel(%arg0: i32, %arg1: memref<2x8x32xf32, #tpu.memory_space<vmem>>, %arg2: memref<2x8x32xf32, #tpu.memory_space<vmem>>, %arg3: memref<8x8x8xf32, #tpu.memory_space<vmem>>, %arg4: memref<8x128xbf16, #tpu.memory_space<vmem>>, %arg5: memref<32x128xbf16, #tpu.memory_space<vmem>>, %arg6: memref<1x128xf32, #tpu.memory_space<vmem>>, %arg7: memref<32x128xbf16, #tpu.memory_space<vmem>>, %arg8: memref<32x128xbf16, #tpu.memory_space<vmem>>, %arg9: memref<1x128xf32, #tpu.memory_space<vmem>>, %arg10: memref<32x32xbf16, #tpu.memory_space<vmem>>, %arg11: memref<32x16xbf16, #tpu.memory_space<vmem>>, %arg12: memref<16x8xbf16, #tpu.memory_space<vmem>>, %arg13: memref<1x8xf32, #tpu.memory_space<vmem>>, %arg14: memref<8x8x8xf32, #tpu.memory_space<vmem>>, %arg15: memref<2x8x32xf32, #tpu.memory_space<vmem>>, %arg16: memref<2x8x32xf32, #tpu.memory_space<vmem>>, %arg17: memref<2x8x32xf32, #tpu.memory_space<vmem>>, %arg18: memref<2x8x32xf32, #tpu.memory_space<vmem>>) attributes {dimension_semantics = [#tpu.dimension_semantics<arbitrary>], iteration_bounds = array<i64: 1>, scalar_prefetch = 0 : i64, scratch_operands = 2 : i64, tpu.core_type = #tpu.core_type<tc>, window_params = [{pipeline_mode = #tpu.pipeline_mode<synchronous>, transform_indices = @transform_0, window_bounds = array<i64: 2, 8, 32>}, {pipeline_mode = #tpu.pipeline_mode<synchronous>, transform_indices = @transform_1, window_bounds = array<i64: 2, 8, 32>}, {transform_indices = @transform_2, window_bounds = array<i64: 8, 8, 8>}, {pipeline_mode = #tpu.pipeline_mode<synchronous>, transform_indices = @transform_3, window_bounds = array<i64: 8, 128>}, {pipeline_mode = #tpu.pipeline_mode<synchronous>, transform_indices = @transform_4, window_bounds = array<i64: 32, 128>}, {pipeline_mode = #tpu.pipeline_mode<synchronous>, transform_indices = @transform_5, window_bounds = array<i64: 1, 128>}, {pipeline_mode = #tpu.pipeline_mode<synchronous>, transform_indices = @transform_6, window_bounds = array<i64: 32, 128>}, {pipeline_mode = #tpu.pipeline_mode<synchronous>, transform_indices = @transform_7, window_bounds = array<i64: 32, 128>}, {pipeline_mode = #tpu.pipeline_mode<synchronous>, transform_indices = @transform_8, window_bounds = array<i64: 1, 128>}, {pipeline_mode = #tpu.pipeline_mode<synchronous>, transform_indices = @transform_9, window_bounds = array<i64: 32, 32>}, {pipeline_mode = #tpu.pipeline_mode<synchronous>, transform_indices = @transform_10, window_bounds = array<i64: 32, 16>}, {pipeline_mode = #tpu.pipeline_mode<synchronous>, transform_indices = @transform_11, window_bounds = array<i64: 16, 8>}, {pipeline_mode = #tpu.pipeline_mode<synchronous>, transform_indices = @transform_12, window_bounds = array<i64: 1, 8>}, {transform_indices = @transform_13, window_bounds = array<i64: 8, 8, 8>}, {pipeline_mode = #tpu.pipeline_mode<synchronous>, transform_indices = @transform_14, window_bounds = array<i64: 2, 8, 32>}, {pipeline_mode = #tpu.pipeline_mode<synchronous>, transform_indices = @transform_15, window_bounds = array<i64: 2, 8, 32>}]} {
    %c0_i32 = arith.constant 0 : i32
    %0 = arith.cmpi eq, %arg0, %c0_i32 : i32
    %1 = arith.extui %0 : i1 to i32
    %c0_i32_0 = arith.constant 0 : i32
    %2 = arith.cmpi ne, %1, %c0_i32_0 : i32
    scf.if %2 {
      %c0_498 = arith.constant 0 : index
      %c0_499 = arith.constant 0 : index
      %c0_500 = arith.constant 0 : index
      %766 = vector.load %arg1[%c0_498, %c0_499, %c0_500] : memref<2x8x32xf32, #tpu.memory_space<vmem>>, vector<2x8x32xf32>
      %c0_501 = arith.constant 0 : index
      %c0_502 = arith.constant 0 : index
      %c0_503 = arith.constant 0 : index
      %767 = vector.load %arg17[%c0_501, %c0_502, %c0_503] : memref<2x8x32xf32, #tpu.memory_space<vmem>>, vector<2x8x32xf32>
      tpu.vector_store %arg17[%c0_501, %c0_502, %c0_503], %766 {strides = array<i32>} : memref<2x8x32xf32, #tpu.memory_space<vmem>>, vector<2x8x32xf32>,
      %c0_504 = arith.constant 0 : index
      %c0_505 = arith.constant 0 : index
      %c0_506 = arith.constant 0 : index
      %768 = vector.load %arg2[%c0_504, %c0_505, %c0_506] : memref<2x8x32xf32, #tpu.memory_space<vmem>>, vector<2x8x32xf32>
      %c0_507 = arith.constant 0 : index
      %c0_508 = arith.constant 0 : index
      %c0_509 = arith.constant 0 : index
      %769 = vector.load %arg18[%c0_507, %c0_508, %c0_509] : memref<2x8x32xf32, #tpu.memory_space<vmem>>, vector<2x8x32xf32>
      tpu.vector_store %arg18[%c0_507, %c0_508, %c0_509], %768 {strides = array<i32>} : memref<2x8x32xf32, #tpu.memory_space<vmem>>, vector<2x8x32xf32>,
    } else {
    }
    %c0 = arith.constant 0 : index
    %c0_1 = arith.constant 0 : index
    %c0_2 = arith.constant 0 : index
    %3 = vector.load %arg3[%c0, %c0_1, %c0_2] : memref<8x8x8xf32, #tpu.memory_space<vmem>>, vector<1x8x8xf32>
    %4 = vector.shape_cast %3 : vector<1x8x8xf32> to vector<8x8xf32>
    %c0_3 = arith.constant 0 : index
    %c0_4 = arith.constant 0 : index
    %c0_5 = arith.constant 0 : index
    %5 = vector.load %arg17[%c0_3, %c0_4, %c0_5] : memref<2x8x32xf32, #tpu.memory_space<vmem>>, vector<1x8x32xf32>
    %6 = vector.shape_cast %5 : vector<1x8x32xf32> to vector<8x32xf32>
    %c0_6 = arith.constant 0 : index
    %c0_7 = arith.constant 0 : index
    %c0_8 = arith.constant 0 : index
    %7 = vector.load %arg18[%c0_6, %c0_7, %c0_8] : memref<2x8x32xf32, #tpu.memory_space<vmem>>, vector<1x8x32xf32>
    %8 = vector.shape_cast %7 : vector<1x8x32xf32> to vector<8x32xf32>
    %9 = arith.truncf %4 : vector<8x8xf32> to vector<8x8xbf16>
    %c0_9 = arith.constant 0 : index
    %c0_10 = arith.constant 0 : index
    %10 = vector.load %arg4[%c0_9, %c0_10] : memref<8x128xbf16, #tpu.memory_space<vmem>>, vector<8x128xbf16>
    %cst = arith.constant dense<0.000000e+00> : vector<8x128xf32>
    %11 = tpu.matmul %9, %10, %cst {dimension_numbers = #tpu.dot_dimension_numbers<[1], [0], [0], [1], [0, 0, 1, 1], [], []>} : vector<8x8xbf16>, vector<8x128xbf16>, vector<8x128xf32> -> vector<8x128xf32>
    %12 = arith.truncf %6 : vector<8x32xf32> to vector<8x32xbf16>
    %c0_11 = arith.constant 0 : index
    %c0_12 = arith.constant 0 : index
    %13 = vector.load %arg5[%c0_11, %c0_12] : memref<32x128xbf16, #tpu.memory_space<vmem>>, vector<32x128xbf16>
    %cst_13 = arith.constant dense<0.000000e+00> : vector<8x128xf32>
    %14 = tpu.matmul %12, %13, %cst_13 {dimension_numbers = #tpu.dot_dimension_numbers<[1], [0], [0], [1], [0, 0, 1, 1], [], []>} : vector<8x32xbf16>, vector<32x128xbf16>, vector<8x128xf32> -> vector<8x128xf32>
    %15 = arith.addf %11, %14 : vector<8x128xf32>
    %c0_14 = arith.constant 0 : index
    %c0_15 = arith.constant 0 : index
    %16 = vector.load %arg6[%c0_14, %c0_15] : memref<1x128xf32, #tpu.memory_space<vmem>>, vector<1x128xf32>
    %17 = vector.broadcast %16 : vector<1x128xf32> to vector<8x128xf32>
    %18 = arith.addf %15, %17 : vector<8x128xf32>
    %19 = arith.negf %18 : vector<8x128xf32>
    %20 = math.exp %19 : vector<8x128xf32>
    %cst_16 = arith.constant 1.000000e+00 : f32
    %21 = vector.broadcast %cst_16 : f32 to vector<8x128xf32>
    %22 = arith.addf %21, %20 : vector<8x128xf32>
    %23 = arith.divf %21, %22 : vector<8x128xf32>
    %24 = vector.extract_strided_slice %23 {offsets = [0, 0], sizes = [8, 32], strides = [1, 1]} : vector<8x128xf32> to vector<8x32xf32>
    %25 = vector.extract_strided_slice %23 {offsets = [0, 32], sizes = [8, 32], strides = [1, 1]} : vector<8x128xf32> to vector<8x32xf32>
    %26 = vector.extract_strided_slice %23 {offsets = [0, 64], sizes = [8, 32], strides = [1, 1]} : vector<8x128xf32> to vector<8x32xf32>
    %cst_17 = arith.constant 2.000000e+00 : f32
    %27 = vector.broadcast %cst_17 : f32 to vector<8x32xf32>
    %28 = arith.mulf %27, %26 : vector<8x32xf32>
    %cst_18 = arith.constant 1.000000e+00 : f32
    %29 = vector.broadcast %cst_18 : f32 to vector<8x32xf32>
    %30 = arith.subf %28, %29 : vector<8x32xf32>
    %31 = vector.extract_strided_slice %23 {offsets = [0, 96], sizes = [8, 32], strides = [1, 1]} : vector<8x128xf32> to vector<8x32xf32>
    %32 = arith.mulf %25, %8 : vector<8x32xf32>
    %33 = arith.mulf %24, %30 : vector<8x32xf32>
    %34 = arith.addf %32, %33 : vector<8x32xf32>
    %35 = math.tanh %34 : vector<8x32xf32>
    %36 = arith.mulf %31, %35 : vector<8x32xf32>
    %c0_19 = arith.constant 0 : index
    %c0_20 = arith.constant 0 : index
    %c0_21 = arith.constant 0 : index
    %37 = vector.load %arg17[%c0_19, %c0_20, %c0_21] : memref<2x8x32xf32, #tpu.memory_space<vmem>>, vector<1x8x32xf32>
    %38 = vector.shape_cast %37 : vector<1x8x32xf32> to vector<8x32xf32>
    %39 = vector.shape_cast %36 : vector<8x32xf32> to vector<1x8x32xf32>
    tpu.vector_store %arg17[%c0_19, %c0_20, %c0_21], %39 {strides = array<i32>} : memref<2x8x32xf32, #tpu.memory_space<vmem>>, vector<1x8x32xf32>,
    %c0_22 = arith.constant 0 : index
    %c0_23 = arith.constant 0 : index
    %c0_24 = arith.constant 0 : index
    %40 = vector.load %arg18[%c0_22, %c0_23, %c0_24] : memref<2x8x32xf32, #tpu.memory_space<vmem>>, vector<1x8x32xf32>
    %41 = vector.shape_cast %40 : vector<1x8x32xf32> to vector<8x32xf32>
    %42 = vector.shape_cast %34 : vector<8x32xf32> to vector<1x8x32xf32>
    tpu.vector_store %arg18[%c0_22, %c0_23, %c0_24], %42 {strides = array<i32>} : memref<2x8x32xf32, #tpu.memory_space<vmem>>, vector<1x8x32xf32>,
    %c1 = arith.constant 1 : index
    %c0_25 = arith.constant 0 : index
    %c0_26 = arith.constant 0 : index
    %43 = vector.load %arg17[%c1, %c0_25, %c0_26] : memref<2x8x32xf32, #tpu.memory_space<vmem>>, vector<1x8x32xf32>
    %44 = vector.shape_cast %43 : vector<1x8x32xf32> to vector<8x32xf32>
    %c1_27 = arith.constant 1 : index
    %c0_28 = arith.constant 0 : index
    %c0_29 = arith.constant 0 : index
    %45 = vector.load %arg18[%c1_27, %c0_28, %c0_29] : memref<2x8x32xf32, #tpu.memory_space<vmem>>, vector<1x8x32xf32>
    %46 = vector.shape_cast %45 : vector<1x8x32xf32> to vector<8x32xf32>
    %47 = arith.truncf %36 : vector<8x32xf32> to vector<8x32xbf16>
    %c0_30 = arith.constant 0 : index
    %c0_31 = arith.constant 0 : index
    %48 = vector.load %arg7[%c0_30, %c0_31] : memref<32x128xbf16, #tpu.memory_space<vmem>>, vector<32x128xbf16>
    %cst_32 = arith.constant dense<0.000000e+00> : vector<8x128xf32>
    %49 = tpu.matmul %47, %48, %cst_32 {dimension_numbers = #tpu.dot_dimension_numbers<[1], [0], [0], [1], [0, 0, 1, 1], [], []>} : vector<8x32xbf16>, vector<32x128xbf16>, vector<8x128xf32> -> vector<8x128xf32>
    %50 = arith.truncf %44 : vector<8x32xf32> to vector<8x32xbf16>
    %c0_33 = arith.constant 0 : index
    %c0_34 = arith.constant 0 : index
    %51 = vector.load %arg8[%c0_33, %c0_34] : memref<32x128xbf16, #tpu.memory_space<vmem>>, vector<32x128xbf16>
    %cst_35 = arith.constant dense<0.000000e+00> : vector<8x128xf32>
    %52 = tpu.matmul %50, %51, %cst_35 {dimension_numbers = #tpu.dot_dimension_numbers<[1], [0], [0], [1], [0, 0, 1, 1], [], []>} : vector<8x32xbf16>, vector<32x128xbf16>, vector<8x128xf32> -> vector<8x128xf32>
    %53 = arith.addf %49, %52 : vector<8x128xf32>
    %c0_36 = arith.constant 0 : index
    %c0_37 = arith.constant 0 : index
    %54 = vector.load %arg9[%c0_36, %c0_37] : memref<1x128xf32, #tpu.memory_space<vmem>>, vector<1x128xf32>
    %55 = vector.broadcast %54 : vector<1x128xf32> to vector<8x128xf32>
    %56 = arith.addf %53, %55 : vector<8x128xf32>
    %57 = arith.negf %56 : vector<8x128xf32>
    %58 = math.exp %57 : vector<8x128xf32>
    %cst_38 = arith.constant 1.000000e+00 : f32
    %59 = vector.broadcast %cst_38 : f32 to vector<8x128xf32>
    %60 = arith.addf %59, %58 : vector<8x128xf32>
    %61 = arith.divf %59, %60 : vector<8x128xf32>
    %62 = vector.extract_strided_slice %61 {offsets = [0, 0], sizes = [8, 32], strides = [1, 1]} : vector<8x128xf32> to vector<8x32xf32>
    %63 = vector.extract_strided_slice %61 {offsets = [0, 32], sizes = [8, 32], strides = [1, 1]} : vector<8x128xf32> to vector<8x32xf32>
    %64 = vector.extract_strided_slice %61 {offsets = [0, 64], sizes = [8, 32], strides = [1, 1]} : vector<8x128xf32> to vector<8x32xf32>
    %cst_39 = arith.constant 2.000000e+00 : f32
    %65 = vector.broadcast %cst_39 : f32 to vector<8x32xf32>
    %66 = arith.mulf %65, %64 : vector<8x32xf32>
    %cst_40 = arith.constant 1.000000e+00 : f32
    %67 = vector.broadcast %cst_40 : f32 to vector<8x32xf32>
    %68 = arith.subf %66, %67 : vector<8x32xf32>
    %69 = vector.extract_strided_slice %61 {offsets = [0, 96], sizes = [8, 32], strides = [1, 1]} : vector<8x128xf32> to vector<8x32xf32>
    %70 = arith.mulf %63, %46 : vector<8x32xf32>
    %71 = arith.mulf %62, %68 : vector<8x32xf32>
    %72 = arith.addf %70, %71 : vector<8x32xf32>
    %73 = math.tanh %72 : vector<8x32xf32>
    %74 = arith.mulf %69, %73 : vector<8x32xf32>
    %c1_41 = arith.constant 1 : index
    %c0_42 = arith.constant 0 : index
    %c0_43 = arith.constant 0 : index
    %75 = vector.load %arg17[%c1_41, %c0_42, %c0_43] : memref<2x8x32xf32, #tpu.memory_space<vmem>>, vector<1x8x32xf32>
    %76 = vector.shape_cast %75 : vector<1x8x32xf32> to vector<8x32xf32>
    %77 = vector.shape_cast %74 : vector<8x32xf32> to vector<1x8x32xf32>
    tpu.vector_store %arg17[%c1_41, %c0_42, %c0_43], %77 {strides = array<i32>} : memref<2x8x32xf32, #tpu.memory_space<vmem>>, vector<1x8x32xf32>,
    %c1_44 = arith.constant 1 : index
    %c0_45 = arith.constant 0 : index
    %c0_46 = arith.constant 0 : index
    %78 = vector.load %arg18[%c1_44, %c0_45, %c0_46] : memref<2x8x32xf32, #tpu.memory_space<vmem>>, vector<1x8x32xf32>
    %79 = vector.shape_cast %78 : vector<1x8x32xf32> to vector<8x32xf32>
    %80 = vector.shape_cast %72 : vector<8x32xf32> to vector<1x8x32xf32>
    tpu.vector_store %arg18[%c1_44, %c0_45, %c0_46], %80 {strides = array<i32>} : memref<2x8x32xf32, #tpu.memory_space<vmem>>, vector<1x8x32xf32>,
    %81 = arith.truncf %74 : vector<8x32xf32> to vector<8x32xbf16>
    %c0_47 = arith.constant 0 : index
    %c0_48 = arith.constant 0 : index
    %82 = vector.load %arg10[%c0_47, %c0_48] : memref<32x32xbf16, #tpu.memory_space<vmem>>, vector<32x32xbf16>
    %cst_49 = arith.constant dense<0.000000e+00> : vector<8x32xf32>
    %83 = tpu.matmul %81, %82, %cst_49 {dimension_numbers = #tpu.dot_dimension_numbers<[1], [0], [0], [1], [0, 0, 1, 1], [], []>} : vector<8x32xbf16>, vector<32x32xbf16>, vector<8x32xf32> -> vector<8x32xf32>
    %84 = math.tanh %83 : vector<8x32xf32>
    %85 = arith.truncf %84 : vector<8x32xf32> to vector<8x32xbf16>
    %c0_50 = arith.constant 0 : index
    %c0_51 = arith.constant 0 : index
    %86 = vector.load %arg11[%c0_50, %c0_51] : memref<32x16xbf16, #tpu.memory_space<vmem>>, vector<32x16xbf16>
    %cst_52 = arith.constant dense<0.000000e+00> : vector<8x16xf32>
    %87 = tpu.matmul %85, %86, %cst_52 {dimension_numbers = #tpu.dot_dimension_numbers<[1], [0], [0], [1], [0, 0, 1, 1], [], []>} : vector<8x32xbf16>, vector<32x16xbf16>, vector<8x16xf32> -> vector<8x16xf32>
    %88 = math.tanh %87 : vector<8x16xf32>
    %89 = arith.truncf %88 : vector<8x16xf32> to vector<8x16xbf16>
    %c0_53 = arith.constant 0 : index
    %c0_54 = arith.constant 0 : index
    %90 = vector.load %arg12[%c0_53, %c0_54] : memref<16x8xbf16, #tpu.memory_space<vmem>>, vector<16x8xbf16>
    %cst_55 = arith.constant dense<0.000000e+00> : vector<8x8xf32>
    %91 = tpu.matmul %89, %90, %cst_55 {dimension_numbers = #tpu.dot_dimension_numbers<[1], [0], [0], [1], [0, 0, 1, 1], [], []>} : vector<8x16xbf16>, vector<16x8xbf16>, vector<8x8xf32> -> vector<8x8xf32>
    %c0_56 = arith.constant 0 : index
    %c0_57 = arith.constant 0 : index
    %92 = vector.load %arg13[%c0_56, %c0_57] : memref<1x8xf32, #tpu.memory_space<vmem>>, vector<1x8xf32>
    %93 = vector.broadcast %92 : vector<1x8xf32> to vector<8x8xf32>
    %94 = arith.addf %91, %93 : vector<8x8xf32>
    %c0_58 = arith.constant 0 : index
    %c0_59 = arith.constant 0 : index
    %c0_60 = arith.constant 0 : index
    %95 = vector.load %arg14[%c0_58, %c0_59, %c0_60] : memref<8x8x8xf32, #tpu.memory_space<vmem>>, vector<1x8x8xf32>
    %96 = vector.shape_cast %95 : vector<1x8x8xf32> to vector<8x8xf32>
    %97 = vector.shape_cast %94 : vector<8x8xf32> to vector<1x8x8xf32>
    tpu.vector_store %arg14[%c0_58, %c0_59, %c0_60], %97 {strides = array<i32>} : memref<8x8x8xf32, #tpu.memory_space<vmem>>, vector<1x8x8xf32>,
    %c1_61 = arith.constant 1 : index
    %c0_62 = arith.constant 0 : index
    %c0_63 = arith.constant 0 : index
    %98 = vector.load %arg3[%c1_61, %c0_62, %c0_63] : memref<8x8x8xf32, #tpu.memory_space<vmem>>, vector<1x8x8xf32>
    %99 = vector.shape_cast %98 : vector<1x8x8xf32> to vector<8x8xf32>
    %c0_64 = arith.constant 0 : index
    %c0_65 = arith.constant 0 : index
    %c0_66 = arith.constant 0 : index
    %100 = vector.load %arg17[%c0_64, %c0_65, %c0_66] : memref<2x8x32xf32, #tpu.memory_space<vmem>>, vector<1x8x32xf32>
    %101 = vector.shape_cast %100 : vector<1x8x32xf32> to vector<8x32xf32>
    %c0_67 = arith.constant 0 : index
    %c0_68 = arith.constant 0 : index
    %c0_69 = arith.constant 0 : index
    %102 = vector.load %arg18[%c0_67, %c0_68, %c0_69] : memref<2x8x32xf32, #tpu.memory_space<vmem>>, vector<1x8x32xf32>
    %103 = vector.shape_cast %102 : vector<1x8x32xf32> to vector<8x32xf32>
    %104 = arith.truncf %99 : vector<8x8xf32> to vector<8x8xbf16>
    %c0_70 = arith.constant 0 : index
    %c0_71 = arith.constant 0 : index
    %105 = vector.load %arg4[%c0_70, %c0_71] : memref<8x128xbf16, #tpu.memory_space<vmem>>, vector<8x128xbf16>
    %cst_72 = arith.constant dense<0.000000e+00> : vector<8x128xf32>
    %106 = tpu.matmul %104, %105, %cst_72 {dimension_numbers = #tpu.dot_dimension_numbers<[1], [0], [0], [1], [0, 0, 1, 1], [], []>} : vector<8x8xbf16>, vector<8x128xbf16>, vector<8x128xf32> -> vector<8x128xf32>
    %107 = arith.truncf %101 : vector<8x32xf32> to vector<8x32xbf16>
    %c0_73 = arith.constant 0 : index
    %c0_74 = arith.constant 0 : index
    %108 = vector.load %arg5[%c0_73, %c0_74] : memref<32x128xbf16, #tpu.memory_space<vmem>>, vector<32x128xbf16>
    %cst_75 = arith.constant dense<0.000000e+00> : vector<8x128xf32>
    %109 = tpu.matmul %107, %108, %cst_75 {dimension_numbers = #tpu.dot_dimension_numbers<[1], [0], [0], [1], [0, 0, 1, 1], [], []>} : vector<8x32xbf16>, vector<32x128xbf16>, vector<8x128xf32> -> vector<8x128xf32>
    %110 = arith.addf %106, %109 : vector<8x128xf32>
    %c0_76 = arith.constant 0 : index
    %c0_77 = arith.constant 0 : index
    %111 = vector.load %arg6[%c0_76, %c0_77] : memref<1x128xf32, #tpu.memory_space<vmem>>, vector<1x128xf32>
    %112 = vector.broadcast %111 : vector<1x128xf32> to vector<8x128xf32>
    %113 = arith.addf %110, %112 : vector<8x128xf32>
    %114 = arith.negf %113 : vector<8x128xf32>
    %115 = math.exp %114 : vector<8x128xf32>
    %cst_78 = arith.constant 1.000000e+00 : f32
    %116 = vector.broadcast %cst_78 : f32 to vector<8x128xf32>
    %117 = arith.addf %116, %115 : vector<8x128xf32>
    %118 = arith.divf %116, %117 : vector<8x128xf32>
    %119 = vector.extract_strided_slice %118 {offsets = [0, 0], sizes = [8, 32], strides = [1, 1]} : vector<8x128xf32> to vector<8x32xf32>
    %120 = vector.extract_strided_slice %118 {offsets = [0, 32], sizes = [8, 32], strides = [1, 1]} : vector<8x128xf32> to vector<8x32xf32>
    %121 = vector.extract_strided_slice %118 {offsets = [0, 64], sizes = [8, 32], strides = [1, 1]} : vector<8x128xf32> to vector<8x32xf32>
    %cst_79 = arith.constant 2.000000e+00 : f32
    %122 = vector.broadcast %cst_79 : f32 to vector<8x32xf32>
    %123 = arith.mulf %122, %121 : vector<8x32xf32>
    %cst_80 = arith.constant 1.000000e+00 : f32
    %124 = vector.broadcast %cst_80 : f32 to vector<8x32xf32>
    %125 = arith.subf %123, %124 : vector<8x32xf32>
    %126 = vector.extract_strided_slice %118 {offsets = [0, 96], sizes = [8, 32], strides = [1, 1]} : vector<8x128xf32> to vector<8x32xf32>
    %127 = arith.mulf %120, %103 : vector<8x32xf32>
    %128 = arith.mulf %119, %125 : vector<8x32xf32>
    %129 = arith.addf %127, %128 : vector<8x32xf32>
    %130 = math.tanh %129 : vector<8x32xf32>
    %131 = arith.mulf %126, %130 : vector<8x32xf32>
    %c0_81 = arith.constant 0 : index
    %c0_82 = arith.constant 0 : index
    %c0_83 = arith.constant 0 : index
    %132 = vector.load %arg17[%c0_81, %c0_82, %c0_83] : memref<2x8x32xf32, #tpu.memory_space<vmem>>, vector<1x8x32xf32>
    %133 = vector.shape_cast %132 : vector<1x8x32xf32> to vector<8x32xf32>
    %134 = vector.shape_cast %131 : vector<8x32xf32> to vector<1x8x32xf32>
    tpu.vector_store %arg17[%c0_81, %c0_82, %c0_83], %134 {strides = array<i32>} : memref<2x8x32xf32, #tpu.memory_space<vmem>>, vector<1x8x32xf32>,
    %c0_84 = arith.constant 0 : index
    %c0_85 = arith.constant 0 : index
    %c0_86 = arith.constant 0 : index
    %135 = vector.load %arg18[%c0_84, %c0_85, %c0_86] : memref<2x8x32xf32, #tpu.memory_space<vmem>>, vector<1x8x32xf32>
    %136 = vector.shape_cast %135 : vector<1x8x32xf32> to vector<8x32xf32>
    %137 = vector.shape_cast %129 : vector<8x32xf32> to vector<1x8x32xf32>
    tpu.vector_store %arg18[%c0_84, %c0_85, %c0_86], %137 {strides = array<i32>} : memref<2x8x32xf32, #tpu.memory_space<vmem>>, vector<1x8x32xf32>,
    %c1_87 = arith.constant 1 : index
    %c0_88 = arith.constant 0 : index
    %c0_89 = arith.constant 0 : index
    %138 = vector.load %arg17[%c1_87, %c0_88, %c0_89] : memref<2x8x32xf32, #tpu.memory_space<vmem>>, vector<1x8x32xf32>
    %139 = vector.shape_cast %138 : vector<1x8x32xf32> to vector<8x32xf32>
    %c1_90 = arith.constant 1 : index
    %c0_91 = arith.constant 0 : index
    %c0_92 = arith.constant 0 : index
    %140 = vector.load %arg18[%c1_90, %c0_91, %c0_92] : memref<2x8x32xf32, #tpu.memory_space<vmem>>, vector<1x8x32xf32>
    %141 = vector.shape_cast %140 : vector<1x8x32xf32> to vector<8x32xf32>
    %142 = arith.truncf %131 : vector<8x32xf32> to vector<8x32xbf16>
    %c0_93 = arith.constant 0 : index
    %c0_94 = arith.constant 0 : index
    %143 = vector.load %arg7[%c0_93, %c0_94] : memref<32x128xbf16, #tpu.memory_space<vmem>>, vector<32x128xbf16>
    %cst_95 = arith.constant dense<0.000000e+00> : vector<8x128xf32>
    %144 = tpu.matmul %142, %143, %cst_95 {dimension_numbers = #tpu.dot_dimension_numbers<[1], [0], [0], [1], [0, 0, 1, 1], [], []>} : vector<8x32xbf16>, vector<32x128xbf16>, vector<8x128xf32> -> vector<8x128xf32>
    %145 = arith.truncf %139 : vector<8x32xf32> to vector<8x32xbf16>
    %c0_96 = arith.constant 0 : index
    %c0_97 = arith.constant 0 : index
    %146 = vector.load %arg8[%c0_96, %c0_97] : memref<32x128xbf16, #tpu.memory_space<vmem>>, vector<32x128xbf16>
    %cst_98 = arith.constant dense<0.000000e+00> : vector<8x128xf32>
    %147 = tpu.matmul %145, %146, %cst_98 {dimension_numbers = #tpu.dot_dimension_numbers<[1], [0], [0], [1], [0, 0, 1, 1], [], []>} : vector<8x32xbf16>, vector<32x128xbf16>, vector<8x128xf32> -> vector<8x128xf32>
    %148 = arith.addf %144, %147 : vector<8x128xf32>
    %c0_99 = arith.constant 0 : index
    %c0_100 = arith.constant 0 : index
    %149 = vector.load %arg9[%c0_99, %c0_100] : memref<1x128xf32, #tpu.memory_space<vmem>>, vector<1x128xf32>
    %150 = vector.broadcast %149 : vector<1x128xf32> to vector<8x128xf32>
    %151 = arith.addf %148, %150 : vector<8x128xf32>
    %152 = arith.negf %151 : vector<8x128xf32>
    %153 = math.exp %152 : vector<8x128xf32>
    %cst_101 = arith.constant 1.000000e+00 : f32
    %154 = vector.broadcast %cst_101 : f32 to vector<8x128xf32>
    %155 = arith.addf %154, %153 : vector<8x128xf32>
    %156 = arith.divf %154, %155 : vector<8x128xf32>
    %157 = vector.extract_strided_slice %156 {offsets = [0, 0], sizes = [8, 32], strides = [1, 1]} : vector<8x128xf32> to vector<8x32xf32>
    %158 = vector.extract_strided_slice %156 {offsets = [0, 32], sizes = [8, 32], strides = [1, 1]} : vector<8x128xf32> to vector<8x32xf32>
    %159 = vector.extract_strided_slice %156 {offsets = [0, 64], sizes = [8, 32], strides = [1, 1]} : vector<8x128xf32> to vector<8x32xf32>
    %cst_102 = arith.constant 2.000000e+00 : f32
    %160 = vector.broadcast %cst_102 : f32 to vector<8x32xf32>
    %161 = arith.mulf %160, %159 : vector<8x32xf32>
    %cst_103 = arith.constant 1.000000e+00 : f32
    %162 = vector.broadcast %cst_103 : f32 to vector<8x32xf32>
    %163 = arith.subf %161, %162 : vector<8x32xf32>
    %164 = vector.extract_strided_slice %156 {offsets = [0, 96], sizes = [8, 32], strides = [1, 1]} : vector<8x128xf32> to vector<8x32xf32>
    %165 = arith.mulf %158, %141 : vector<8x32xf32>
    %166 = arith.mulf %157, %163 : vector<8x32xf32>
    %167 = arith.addf %165, %166 : vector<8x32xf32>
    %168 = math.tanh %167 : vector<8x32xf32>
    %169 = arith.mulf %164, %168 : vector<8x32xf32>
    %c1_104 = arith.constant 1 : index
    %c0_105 = arith.constant 0 : index
    %c0_106 = arith.constant 0 : index
    %170 = vector.load %arg17[%c1_104, %c0_105, %c0_106] : memref<2x8x32xf32, #tpu.memory_space<vmem>>, vector<1x8x32xf32>
    %171 = vector.shape_cast %170 : vector<1x8x32xf32> to vector<8x32xf32>
    %172 = vector.shape_cast %169 : vector<8x32xf32> to vector<1x8x32xf32>
    tpu.vector_store %arg17[%c1_104, %c0_105, %c0_106], %172 {strides = array<i32>} : memref<2x8x32xf32, #tpu.memory_space<vmem>>, vector<1x8x32xf32>,
    %c1_107 = arith.constant 1 : index
    %c0_108 = arith.constant 0 : index
    %c0_109 = arith.constant 0 : index
    %173 = vector.load %arg18[%c1_107, %c0_108, %c0_109] : memref<2x8x32xf32, #tpu.memory_space<vmem>>, vector<1x8x32xf32>
    %174 = vector.shape_cast %173 : vector<1x8x32xf32> to vector<8x32xf32>
    %175 = vector.shape_cast %167 : vector<8x32xf32> to vector<1x8x32xf32>
    tpu.vector_store %arg18[%c1_107, %c0_108, %c0_109], %175 {strides = array<i32>} : memref<2x8x32xf32, #tpu.memory_space<vmem>>, vector<1x8x32xf32>,
    %176 = arith.truncf %169 : vector<8x32xf32> to vector<8x32xbf16>
    %c0_110 = arith.constant 0 : index
    %c0_111 = arith.constant 0 : index
    %177 = vector.load %arg10[%c0_110, %c0_111] : memref<32x32xbf16, #tpu.memory_space<vmem>>, vector<32x32xbf16>
    %cst_112 = arith.constant dense<0.000000e+00> : vector<8x32xf32>
    %178 = tpu.matmul %176, %177, %cst_112 {dimension_numbers = #tpu.dot_dimension_numbers<[1], [0], [0], [1], [0, 0, 1, 1], [], []>} : vector<8x32xbf16>, vector<32x32xbf16>, vector<8x32xf32> -> vector<8x32xf32>
    %179 = math.tanh %178 : vector<8x32xf32>
    %180 = arith.truncf %179 : vector<8x32xf32> to vector<8x32xbf16>
    %c0_113 = arith.constant 0 : index
    %c0_114 = arith.constant 0 : index
    %181 = vector.load %arg11[%c0_113, %c0_114] : memref<32x16xbf16, #tpu.memory_space<vmem>>, vector<32x16xbf16>
    %cst_115 = arith.constant dense<0.000000e+00> : vector<8x16xf32>
    %182 = tpu.matmul %180, %181, %cst_115 {dimension_numbers = #tpu.dot_dimension_numbers<[1], [0], [0], [1], [0, 0, 1, 1], [], []>} : vector<8x32xbf16>, vector<32x16xbf16>, vector<8x16xf32> -> vector<8x16xf32>
    %183 = math.tanh %182 : vector<8x16xf32>
    %184 = arith.truncf %183 : vector<8x16xf32> to vector<8x16xbf16>
    %c0_116 = arith.constant 0 : index
    %c0_117 = arith.constant 0 : index
    %185 = vector.load %arg12[%c0_116, %c0_117] : memref<16x8xbf16, #tpu.memory_space<vmem>>, vector<16x8xbf16>
    %cst_118 = arith.constant dense<0.000000e+00> : vector<8x8xf32>
    %186 = tpu.matmul %184, %185, %cst_118 {dimension_numbers = #tpu.dot_dimension_numbers<[1], [0], [0], [1], [0, 0, 1, 1], [], []>} : vector<8x16xbf16>, vector<16x8xbf16>, vector<8x8xf32> -> vector<8x8xf32>
    %c0_119 = arith.constant 0 : index
    %c0_120 = arith.constant 0 : index
    %187 = vector.load %arg13[%c0_119, %c0_120] : memref<1x8xf32, #tpu.memory_space<vmem>>, vector<1x8xf32>
    %188 = vector.broadcast %187 : vector<1x8xf32> to vector<8x8xf32>
    %189 = arith.addf %186, %188 : vector<8x8xf32>
    %c1_121 = arith.constant 1 : index
    %c0_122 = arith.constant 0 : index
    %c0_123 = arith.constant 0 : index
    %190 = vector.load %arg14[%c1_121, %c0_122, %c0_123] : memref<8x8x8xf32, #tpu.memory_space<vmem>>, vector<1x8x8xf32>
    %191 = vector.shape_cast %190 : vector<1x8x8xf32> to vector<8x8xf32>
    %192 = vector.shape_cast %189 : vector<8x8xf32> to vector<1x8x8xf32>
    tpu.vector_store %arg14[%c1_121, %c0_122, %c0_123], %192 {strides = array<i32>} : memref<8x8x8xf32, #tpu.memory_space<vmem>>, vector<1x8x8xf32>,
    %c2 = arith.constant 2 : index
    %c0_124 = arith.constant 0 : index
    %c0_125 = arith.constant 0 : index
    %193 = vector.load %arg3[%c2, %c0_124, %c0_125] : memref<8x8x8xf32, #tpu.memory_space<vmem>>, vector<1x8x8xf32>
    %194 = vector.shape_cast %193 : vector<1x8x8xf32> to vector<8x8xf32>
    %c0_126 = arith.constant 0 : index
    %c0_127 = arith.constant 0 : index
    %c0_128 = arith.constant 0 : index
    %195 = vector.load %arg17[%c0_126, %c0_127, %c0_128] : memref<2x8x32xf32, #tpu.memory_space<vmem>>, vector<1x8x32xf32>
    %196 = vector.shape_cast %195 : vector<1x8x32xf32> to vector<8x32xf32>
    %c0_129 = arith.constant 0 : index
    %c0_130 = arith.constant 0 : index
    %c0_131 = arith.constant 0 : index
    %197 = vector.load %arg18[%c0_129, %c0_130, %c0_131] : memref<2x8x32xf32, #tpu.memory_space<vmem>>, vector<1x8x32xf32>
    %198 = vector.shape_cast %197 : vector<1x8x32xf32> to vector<8x32xf32>
    %199 = arith.truncf %194 : vector<8x8xf32> to vector<8x8xbf16>
    %c0_132 = arith.constant 0 : index
    %c0_133 = arith.constant 0 : index
    %200 = vector.load %arg4[%c0_132, %c0_133] : memref<8x128xbf16, #tpu.memory_space<vmem>>, vector<8x128xbf16>
    %cst_134 = arith.constant dense<0.000000e+00> : vector<8x128xf32>
    %201 = tpu.matmul %199, %200, %cst_134 {dimension_numbers = #tpu.dot_dimension_numbers<[1], [0], [0], [1], [0, 0, 1, 1], [], []>} : vector<8x8xbf16>, vector<8x128xbf16>, vector<8x128xf32> -> vector<8x128xf32>
    %202 = arith.truncf %196 : vector<8x32xf32> to vector<8x32xbf16>
    %c0_135 = arith.constant 0 : index
    %c0_136 = arith.constant 0 : index
    %203 = vector.load %arg5[%c0_135, %c0_136] : memref<32x128xbf16, #tpu.memory_space<vmem>>, vector<32x128xbf16>
    %cst_137 = arith.constant dense<0.000000e+00> : vector<8x128xf32>
    %204 = tpu.matmul %202, %203, %cst_137 {dimension_numbers = #tpu.dot_dimension_numbers<[1], [0], [0], [1], [0, 0, 1, 1], [], []>} : vector<8x32xbf16>, vector<32x128xbf16>, vector<8x128xf32> -> vector<8x128xf32>
    %205 = arith.addf %201, %204 : vector<8x128xf32>
    %c0_138 = arith.constant 0 : index
    %c0_139 = arith.constant 0 : index
    %206 = vector.load %arg6[%c0_138, %c0_139] : memref<1x128xf32, #tpu.memory_space<vmem>>, vector<1x128xf32>
    %207 = vector.broadcast %206 : vector<1x128xf32> to vector<8x128xf32>
    %208 = arith.addf %205, %207 : vector<8x128xf32>
    %209 = arith.negf %208 : vector<8x128xf32>
    %210 = math.exp %209 : vector<8x128xf32>
    %cst_140 = arith.constant 1.000000e+00 : f32
    %211 = vector.broadcast %cst_140 : f32 to vector<8x128xf32>
    %212 = arith.addf %211, %210 : vector<8x128xf32>
    %213 = arith.divf %211, %212 : vector<8x128xf32>
    %214 = vector.extract_strided_slice %213 {offsets = [0, 0], sizes = [8, 32], strides = [1, 1]} : vector<8x128xf32> to vector<8x32xf32>
    %215 = vector.extract_strided_slice %213 {offsets = [0, 32], sizes = [8, 32], strides = [1, 1]} : vector<8x128xf32> to vector<8x32xf32>
    %216 = vector.extract_strided_slice %213 {offsets = [0, 64], sizes = [8, 32], strides = [1, 1]} : vector<8x128xf32> to vector<8x32xf32>
    %cst_141 = arith.constant 2.000000e+00 : f32
    %217 = vector.broadcast %cst_141 : f32 to vector<8x32xf32>
    %218 = arith.mulf %217, %216 : vector<8x32xf32>
    %cst_142 = arith.constant 1.000000e+00 : f32
    %219 = vector.broadcast %cst_142 : f32 to vector<8x32xf32>
    %220 = arith.subf %218, %219 : vector<8x32xf32>
    %221 = vector.extract_strided_slice %213 {offsets = [0, 96], sizes = [8, 32], strides = [1, 1]} : vector<8x128xf32> to vector<8x32xf32>
    %222 = arith.mulf %215, %198 : vector<8x32xf32>
    %223 = arith.mulf %214, %220 : vector<8x32xf32>
    %224 = arith.addf %222, %223 : vector<8x32xf32>
    %225 = math.tanh %224 : vector<8x32xf32>
    %226 = arith.mulf %221, %225 : vector<8x32xf32>
    %c0_143 = arith.constant 0 : index
    %c0_144 = arith.constant 0 : index
    %c0_145 = arith.constant 0 : index
    %227 = vector.load %arg17[%c0_143, %c0_144, %c0_145] : memref<2x8x32xf32, #tpu.memory_space<vmem>>, vector<1x8x32xf32>
    %228 = vector.shape_cast %227 : vector<1x8x32xf32> to vector<8x32xf32>
    %229 = vector.shape_cast %226 : vector<8x32xf32> to vector<1x8x32xf32>
    tpu.vector_store %arg17[%c0_143, %c0_144, %c0_145], %229 {strides = array<i32>} : memref<2x8x32xf32, #tpu.memory_space<vmem>>, vector<1x8x32xf32>,
    %c0_146 = arith.constant 0 : index
    %c0_147 = arith.constant 0 : index
    %c0_148 = arith.constant 0 : index
    %230 = vector.load %arg18[%c0_146, %c0_147, %c0_148] : memref<2x8x32xf32, #tpu.memory_space<vmem>>, vector<1x8x32xf32>
    %231 = vector.shape_cast %230 : vector<1x8x32xf32> to vector<8x32xf32>
    %232 = vector.shape_cast %224 : vector<8x32xf32> to vector<1x8x32xf32>
    tpu.vector_store %arg18[%c0_146, %c0_147, %c0_148], %232 {strides = array<i32>} : memref<2x8x32xf32, #tpu.memory_space<vmem>>, vector<1x8x32xf32>,
    %c1_149 = arith.constant 1 : index
    %c0_150 = arith.constant 0 : index
    %c0_151 = arith.constant 0 : index
    %233 = vector.load %arg17[%c1_149, %c0_150, %c0_151] : memref<2x8x32xf32, #tpu.memory_space<vmem>>, vector<1x8x32xf32>
    %234 = vector.shape_cast %233 : vector<1x8x32xf32> to vector<8x32xf32>
    %c1_152 = arith.constant 1 : index
    %c0_153 = arith.constant 0 : index
    %c0_154 = arith.constant 0 : index
    %235 = vector.load %arg18[%c1_152, %c0_153, %c0_154] : memref<2x8x32xf32, #tpu.memory_space<vmem>>, vector<1x8x32xf32>
    %236 = vector.shape_cast %235 : vector<1x8x32xf32> to vector<8x32xf32>
    %237 = arith.truncf %226 : vector<8x32xf32> to vector<8x32xbf16>
    %c0_155 = arith.constant 0 : index
    %c0_156 = arith.constant 0 : index
    %238 = vector.load %arg7[%c0_155, %c0_156] : memref<32x128xbf16, #tpu.memory_space<vmem>>, vector<32x128xbf16>
    %cst_157 = arith.constant dense<0.000000e+00> : vector<8x128xf32>
    %239 = tpu.matmul %237, %238, %cst_157 {dimension_numbers = #tpu.dot_dimension_numbers<[1], [0], [0], [1], [0, 0, 1, 1], [], []>} : vector<8x32xbf16>, vector<32x128xbf16>, vector<8x128xf32> -> vector<8x128xf32>
    %240 = arith.truncf %234 : vector<8x32xf32> to vector<8x32xbf16>
    %c0_158 = arith.constant 0 : index
    %c0_159 = arith.constant 0 : index
    %241 = vector.load %arg8[%c0_158, %c0_159] : memref<32x128xbf16, #tpu.memory_space<vmem>>, vector<32x128xbf16>
    %cst_160 = arith.constant dense<0.000000e+00> : vector<8x128xf32>
    %242 = tpu.matmul %240, %241, %cst_160 {dimension_numbers = #tpu.dot_dimension_numbers<[1], [0], [0], [1], [0, 0, 1, 1], [], []>} : vector<8x32xbf16>, vector<32x128xbf16>, vector<8x128xf32> -> vector<8x128xf32>
    %243 = arith.addf %239, %242 : vector<8x128xf32>
    %c0_161 = arith.constant 0 : index
    %c0_162 = arith.constant 0 : index
    %244 = vector.load %arg9[%c0_161, %c0_162] : memref<1x128xf32, #tpu.memory_space<vmem>>, vector<1x128xf32>
    %245 = vector.broadcast %244 : vector<1x128xf32> to vector<8x128xf32>
    %246 = arith.addf %243, %245 : vector<8x128xf32>
    %247 = arith.negf %246 : vector<8x128xf32>
    %248 = math.exp %247 : vector<8x128xf32>
    %cst_163 = arith.constant 1.000000e+00 : f32
    %249 = vector.broadcast %cst_163 : f32 to vector<8x128xf32>
    %250 = arith.addf %249, %248 : vector<8x128xf32>
    %251 = arith.divf %249, %250 : vector<8x128xf32>
    %252 = vector.extract_strided_slice %251 {offsets = [0, 0], sizes = [8, 32], strides = [1, 1]} : vector<8x128xf32> to vector<8x32xf32>
    %253 = vector.extract_strided_slice %251 {offsets = [0, 32], sizes = [8, 32], strides = [1, 1]} : vector<8x128xf32> to vector<8x32xf32>
    %254 = vector.extract_strided_slice %251 {offsets = [0, 64], sizes = [8, 32], strides = [1, 1]} : vector<8x128xf32> to vector<8x32xf32>
    %cst_164 = arith.constant 2.000000e+00 : f32
    %255 = vector.broadcast %cst_164 : f32 to vector<8x32xf32>
    %256 = arith.mulf %255, %254 : vector<8x32xf32>
    %cst_165 = arith.constant 1.000000e+00 : f32
    %257 = vector.broadcast %cst_165 : f32 to vector<8x32xf32>
    %258 = arith.subf %256, %257 : vector<8x32xf32>
    %259 = vector.extract_strided_slice %251 {offsets = [0, 96], sizes = [8, 32], strides = [1, 1]} : vector<8x128xf32> to vector<8x32xf32>
    %260 = arith.mulf %253, %236 : vector<8x32xf32>
    %261 = arith.mulf %252, %258 : vector<8x32xf32>
    %262 = arith.addf %260, %261 : vector<8x32xf32>
    %263 = math.tanh %262 : vector<8x32xf32>
    %264 = arith.mulf %259, %263 : vector<8x32xf32>
    %c1_166 = arith.constant 1 : index
    %c0_167 = arith.constant 0 : index
    %c0_168 = arith.constant 0 : index
    %265 = vector.load %arg17[%c1_166, %c0_167, %c0_168] : memref<2x8x32xf32, #tpu.memory_space<vmem>>, vector<1x8x32xf32>
    %266 = vector.shape_cast %265 : vector<1x8x32xf32> to vector<8x32xf32>
    %267 = vector.shape_cast %264 : vector<8x32xf32> to vector<1x8x32xf32>
    tpu.vector_store %arg17[%c1_166, %c0_167, %c0_168], %267 {strides = array<i32>} : memref<2x8x32xf32, #tpu.memory_space<vmem>>, vector<1x8x32xf32>,
    %c1_169 = arith.constant 1 : index
    %c0_170 = arith.constant 0 : index
    %c0_171 = arith.constant 0 : index
    %268 = vector.load %arg18[%c1_169, %c0_170, %c0_171] : memref<2x8x32xf32, #tpu.memory_space<vmem>>, vector<1x8x32xf32>
    %269 = vector.shape_cast %268 : vector<1x8x32xf32> to vector<8x32xf32>
    %270 = vector.shape_cast %262 : vector<8x32xf32> to vector<1x8x32xf32>
    tpu.vector_store %arg18[%c1_169, %c0_170, %c0_171], %270 {strides = array<i32>} : memref<2x8x32xf32, #tpu.memory_space<vmem>>, vector<1x8x32xf32>,
    %271 = arith.truncf %264 : vector<8x32xf32> to vector<8x32xbf16>
    %c0_172 = arith.constant 0 : index
    %c0_173 = arith.constant 0 : index
    %272 = vector.load %arg10[%c0_172, %c0_173] : memref<32x32xbf16, #tpu.memory_space<vmem>>, vector<32x32xbf16>
    %cst_174 = arith.constant dense<0.000000e+00> : vector<8x32xf32>
    %273 = tpu.matmul %271, %272, %cst_174 {dimension_numbers = #tpu.dot_dimension_numbers<[1], [0], [0], [1], [0, 0, 1, 1], [], []>} : vector<8x32xbf16>, vector<32x32xbf16>, vector<8x32xf32> -> vector<8x32xf32>
    %274 = math.tanh %273 : vector<8x32xf32>
    %275 = arith.truncf %274 : vector<8x32xf32> to vector<8x32xbf16>
    %c0_175 = arith.constant 0 : index
    %c0_176 = arith.constant 0 : index
    %276 = vector.load %arg11[%c0_175, %c0_176] : memref<32x16xbf16, #tpu.memory_space<vmem>>, vector<32x16xbf16>
    %cst_177 = arith.constant dense<0.000000e+00> : vector<8x16xf32>
    %277 = tpu.matmul %275, %276, %cst_177 {dimension_numbers = #tpu.dot_dimension_numbers<[1], [0], [0], [1], [0, 0, 1, 1], [], []>} : vector<8x32xbf16>, vector<32x16xbf16>, vector<8x16xf32> -> vector<8x16xf32>
    %278 = math.tanh %277 : vector<8x16xf32>
    %279 = arith.truncf %278 : vector<8x16xf32> to vector<8x16xbf16>
    %c0_178 = arith.constant 0 : index
    %c0_179 = arith.constant 0 : index
    %280 = vector.load %arg12[%c0_178, %c0_179] : memref<16x8xbf16, #tpu.memory_space<vmem>>, vector<16x8xbf16>
    %cst_180 = arith.constant dense<0.000000e+00> : vector<8x8xf32>
    %281 = tpu.matmul %279, %280, %cst_180 {dimension_numbers = #tpu.dot_dimension_numbers<[1], [0], [0], [1], [0, 0, 1, 1], [], []>} : vector<8x16xbf16>, vector<16x8xbf16>, vector<8x8xf32> -> vector<8x8xf32>
    %c0_181 = arith.constant 0 : index
    %c0_182 = arith.constant 0 : index
    %282 = vector.load %arg13[%c0_181, %c0_182] : memref<1x8xf32, #tpu.memory_space<vmem>>, vector<1x8xf32>
    %283 = vector.broadcast %282 : vector<1x8xf32> to vector<8x8xf32>
    %284 = arith.addf %281, %283 : vector<8x8xf32>
    %c2_183 = arith.constant 2 : index
    %c0_184 = arith.constant 0 : index
    %c0_185 = arith.constant 0 : index
    %285 = vector.load %arg14[%c2_183, %c0_184, %c0_185] : memref<8x8x8xf32, #tpu.memory_space<vmem>>, vector<1x8x8xf32>
    %286 = vector.shape_cast %285 : vector<1x8x8xf32> to vector<8x8xf32>
    %287 = vector.shape_cast %284 : vector<8x8xf32> to vector<1x8x8xf32>
    tpu.vector_store %arg14[%c2_183, %c0_184, %c0_185], %287 {strides = array<i32>} : memref<8x8x8xf32, #tpu.memory_space<vmem>>, vector<1x8x8xf32>,
    %c3 = arith.constant 3 : index
    %c0_186 = arith.constant 0 : index
    %c0_187 = arith.constant 0 : index
    %288 = vector.load %arg3[%c3, %c0_186, %c0_187] : memref<8x8x8xf32, #tpu.memory_space<vmem>>, vector<1x8x8xf32>
    %289 = vector.shape_cast %288 : vector<1x8x8xf32> to vector<8x8xf32>
    %c0_188 = arith.constant 0 : index
    %c0_189 = arith.constant 0 : index
    %c0_190 = arith.constant 0 : index
    %290 = vector.load %arg17[%c0_188, %c0_189, %c0_190] : memref<2x8x32xf32, #tpu.memory_space<vmem>>, vector<1x8x32xf32>
    %291 = vector.shape_cast %290 : vector<1x8x32xf32> to vector<8x32xf32>
    %c0_191 = arith.constant 0 : index
    %c0_192 = arith.constant 0 : index
    %c0_193 = arith.constant 0 : index
    %292 = vector.load %arg18[%c0_191, %c0_192, %c0_193] : memref<2x8x32xf32, #tpu.memory_space<vmem>>, vector<1x8x32xf32>
    %293 = vector.shape_cast %292 : vector<1x8x32xf32> to vector<8x32xf32>
    %294 = arith.truncf %289 : vector<8x8xf32> to vector<8x8xbf16>
    %c0_194 = arith.constant 0 : index
    %c0_195 = arith.constant 0 : index
    %295 = vector.load %arg4[%c0_194, %c0_195] : memref<8x128xbf16, #tpu.memory_space<vmem>>, vector<8x128xbf16>
    %cst_196 = arith.constant dense<0.000000e+00> : vector<8x128xf32>
    %296 = tpu.matmul %294, %295, %cst_196 {dimension_numbers = #tpu.dot_dimension_numbers<[1], [0], [0], [1], [0, 0, 1, 1], [], []>} : vector<8x8xbf16>, vector<8x128xbf16>, vector<8x128xf32> -> vector<8x128xf32>
    %297 = arith.truncf %291 : vector<8x32xf32> to vector<8x32xbf16>
    %c0_197 = arith.constant 0 : index
    %c0_198 = arith.constant 0 : index
    %298 = vector.load %arg5[%c0_197, %c0_198] : memref<32x128xbf16, #tpu.memory_space<vmem>>, vector<32x128xbf16>
    %cst_199 = arith.constant dense<0.000000e+00> : vector<8x128xf32>
    %299 = tpu.matmul %297, %298, %cst_199 {dimension_numbers = #tpu.dot_dimension_numbers<[1], [0], [0], [1], [0, 0, 1, 1], [], []>} : vector<8x32xbf16>, vector<32x128xbf16>, vector<8x128xf32> -> vector<8x128xf32>
    %300 = arith.addf %296, %299 : vector<8x128xf32>
    %c0_200 = arith.constant 0 : index
    %c0_201 = arith.constant 0 : index
    %301 = vector.load %arg6[%c0_200, %c0_201] : memref<1x128xf32, #tpu.memory_space<vmem>>, vector<1x128xf32>
    %302 = vector.broadcast %301 : vector<1x128xf32> to vector<8x128xf32>
    %303 = arith.addf %300, %302 : vector<8x128xf32>
    %304 = arith.negf %303 : vector<8x128xf32>
    %305 = math.exp %304 : vector<8x128xf32>
    %cst_202 = arith.constant 1.000000e+00 : f32
    %306 = vector.broadcast %cst_202 : f32 to vector<8x128xf32>
    %307 = arith.addf %306, %305 : vector<8x128xf32>
    %308 = arith.divf %306, %307 : vector<8x128xf32>
    %309 = vector.extract_strided_slice %308 {offsets = [0, 0], sizes = [8, 32], strides = [1, 1]} : vector<8x128xf32> to vector<8x32xf32>
    %310 = vector.extract_strided_slice %308 {offsets = [0, 32], sizes = [8, 32], strides = [1, 1]} : vector<8x128xf32> to vector<8x32xf32>
    %311 = vector.extract_strided_slice %308 {offsets = [0, 64], sizes = [8, 32], strides = [1, 1]} : vector<8x128xf32> to vector<8x32xf32>
    %cst_203 = arith.constant 2.000000e+00 : f32
    %312 = vector.broadcast %cst_203 : f32 to vector<8x32xf32>
    %313 = arith.mulf %312, %311 : vector<8x32xf32>
    %cst_204 = arith.constant 1.000000e+00 : f32
    %314 = vector.broadcast %cst_204 : f32 to vector<8x32xf32>
    %315 = arith.subf %313, %314 : vector<8x32xf32>
    %316 = vector.extract_strided_slice %308 {offsets = [0, 96], sizes = [8, 32], strides = [1, 1]} : vector<8x128xf32> to vector<8x32xf32>
    %317 = arith.mulf %310, %293 : vector<8x32xf32>
    %318 = arith.mulf %309, %315 : vector<8x32xf32>
    %319 = arith.addf %317, %318 : vector<8x32xf32>
    %320 = math.tanh %319 : vector<8x32xf32>
    %321 = arith.mulf %316, %320 : vector<8x32xf32>
    %c0_205 = arith.constant 0 : index
    %c0_206 = arith.constant 0 : index
    %c0_207 = arith.constant 0 : index
    %322 = vector.load %arg17[%c0_205, %c0_206, %c0_207] : memref<2x8x32xf32, #tpu.memory_space<vmem>>, vector<1x8x32xf32>
    %323 = vector.shape_cast %322 : vector<1x8x32xf32> to vector<8x32xf32>
    %324 = vector.shape_cast %321 : vector<8x32xf32> to vector<1x8x32xf32>
    tpu.vector_store %arg17[%c0_205, %c0_206, %c0_207], %324 {strides = array<i32>} : memref<2x8x32xf32, #tpu.memory_space<vmem>>, vector<1x8x32xf32>,
    %c0_208 = arith.constant 0 : index
    %c0_209 = arith.constant 0 : index
    %c0_210 = arith.constant 0 : index
    %325 = vector.load %arg18[%c0_208, %c0_209, %c0_210] : memref<2x8x32xf32, #tpu.memory_space<vmem>>, vector<1x8x32xf32>
    %326 = vector.shape_cast %325 : vector<1x8x32xf32> to vector<8x32xf32>
    %327 = vector.shape_cast %319 : vector<8x32xf32> to vector<1x8x32xf32>
    tpu.vector_store %arg18[%c0_208, %c0_209, %c0_210], %327 {strides = array<i32>} : memref<2x8x32xf32, #tpu.memory_space<vmem>>, vector<1x8x32xf32>,
    %c1_211 = arith.constant 1 : index
    %c0_212 = arith.constant 0 : index
    %c0_213 = arith.constant 0 : index
    %328 = vector.load %arg17[%c1_211, %c0_212, %c0_213] : memref<2x8x32xf32, #tpu.memory_space<vmem>>, vector<1x8x32xf32>
    %329 = vector.shape_cast %328 : vector<1x8x32xf32> to vector<8x32xf32>
    %c1_214 = arith.constant 1 : index
    %c0_215 = arith.constant 0 : index
    %c0_216 = arith.constant 0 : index
    %330 = vector.load %arg18[%c1_214, %c0_215, %c0_216] : memref<2x8x32xf32, #tpu.memory_space<vmem>>, vector<1x8x32xf32>
    %331 = vector.shape_cast %330 : vector<1x8x32xf32> to vector<8x32xf32>
    %332 = arith.truncf %321 : vector<8x32xf32> to vector<8x32xbf16>
    %c0_217 = arith.constant 0 : index
    %c0_218 = arith.constant 0 : index
    %333 = vector.load %arg7[%c0_217, %c0_218] : memref<32x128xbf16, #tpu.memory_space<vmem>>, vector<32x128xbf16>
    %cst_219 = arith.constant dense<0.000000e+00> : vector<8x128xf32>
    %334 = tpu.matmul %332, %333, %cst_219 {dimension_numbers = #tpu.dot_dimension_numbers<[1], [0], [0], [1], [0, 0, 1, 1], [], []>} : vector<8x32xbf16>, vector<32x128xbf16>, vector<8x128xf32> -> vector<8x128xf32>
    %335 = arith.truncf %329 : vector<8x32xf32> to vector<8x32xbf16>
    %c0_220 = arith.constant 0 : index
    %c0_221 = arith.constant 0 : index
    %336 = vector.load %arg8[%c0_220, %c0_221] : memref<32x128xbf16, #tpu.memory_space<vmem>>, vector<32x128xbf16>
    %cst_222 = arith.constant dense<0.000000e+00> : vector<8x128xf32>
    %337 = tpu.matmul %335, %336, %cst_222 {dimension_numbers = #tpu.dot_dimension_numbers<[1], [0], [0], [1], [0, 0, 1, 1], [], []>} : vector<8x32xbf16>, vector<32x128xbf16>, vector<8x128xf32> -> vector<8x128xf32>
    %338 = arith.addf %334, %337 : vector<8x128xf32>
    %c0_223 = arith.constant 0 : index
    %c0_224 = arith.constant 0 : index
    %339 = vector.load %arg9[%c0_223, %c0_224] : memref<1x128xf32, #tpu.memory_space<vmem>>, vector<1x128xf32>
    %340 = vector.broadcast %339 : vector<1x128xf32> to vector<8x128xf32>
    %341 = arith.addf %338, %340 : vector<8x128xf32>
    %342 = arith.negf %341 : vector<8x128xf32>
    %343 = math.exp %342 : vector<8x128xf32>
    %cst_225 = arith.constant 1.000000e+00 : f32
    %344 = vector.broadcast %cst_225 : f32 to vector<8x128xf32>
    %345 = arith.addf %344, %343 : vector<8x128xf32>
    %346 = arith.divf %344, %345 : vector<8x128xf32>
    %347 = vector.extract_strided_slice %346 {offsets = [0, 0], sizes = [8, 32], strides = [1, 1]} : vector<8x128xf32> to vector<8x32xf32>
    %348 = vector.extract_strided_slice %346 {offsets = [0, 32], sizes = [8, 32], strides = [1, 1]} : vector<8x128xf32> to vector<8x32xf32>
    %349 = vector.extract_strided_slice %346 {offsets = [0, 64], sizes = [8, 32], strides = [1, 1]} : vector<8x128xf32> to vector<8x32xf32>
    %cst_226 = arith.constant 2.000000e+00 : f32
    %350 = vector.broadcast %cst_226 : f32 to vector<8x32xf32>
    %351 = arith.mulf %350, %349 : vector<8x32xf32>
    %cst_227 = arith.constant 1.000000e+00 : f32
    %352 = vector.broadcast %cst_227 : f32 to vector<8x32xf32>
    %353 = arith.subf %351, %352 : vector<8x32xf32>
    %354 = vector.extract_strided_slice %346 {offsets = [0, 96], sizes = [8, 32], strides = [1, 1]} : vector<8x128xf32> to vector<8x32xf32>
    %355 = arith.mulf %348, %331 : vector<8x32xf32>
    %356 = arith.mulf %347, %353 : vector<8x32xf32>
    %357 = arith.addf %355, %356 : vector<8x32xf32>
    %358 = math.tanh %357 : vector<8x32xf32>
    %359 = arith.mulf %354, %358 : vector<8x32xf32>
    %c1_228 = arith.constant 1 : index
    %c0_229 = arith.constant 0 : index
    %c0_230 = arith.constant 0 : index
    %360 = vector.load %arg17[%c1_228, %c0_229, %c0_230] : memref<2x8x32xf32, #tpu.memory_space<vmem>>, vector<1x8x32xf32>
    %361 = vector.shape_cast %360 : vector<1x8x32xf32> to vector<8x32xf32>
    %362 = vector.shape_cast %359 : vector<8x32xf32> to vector<1x8x32xf32>
    tpu.vector_store %arg17[%c1_228, %c0_229, %c0_230], %362 {strides = array<i32>} : memref<2x8x32xf32, #tpu.memory_space<vmem>>, vector<1x8x32xf32>,
    %c1_231 = arith.constant 1 : index
    %c0_232 = arith.constant 0 : index
    %c0_233 = arith.constant 0 : index
    %363 = vector.load %arg18[%c1_231, %c0_232, %c0_233] : memref<2x8x32xf32, #tpu.memory_space<vmem>>, vector<1x8x32xf32>
    %364 = vector.shape_cast %363 : vector<1x8x32xf32> to vector<8x32xf32>
    %365 = vector.shape_cast %357 : vector<8x32xf32> to vector<1x8x32xf32>
    tpu.vector_store %arg18[%c1_231, %c0_232, %c0_233], %365 {strides = array<i32>} : memref<2x8x32xf32, #tpu.memory_space<vmem>>, vector<1x8x32xf32>,
    %366 = arith.truncf %359 : vector<8x32xf32> to vector<8x32xbf16>
    %c0_234 = arith.constant 0 : index
    %c0_235 = arith.constant 0 : index
    %367 = vector.load %arg10[%c0_234, %c0_235] : memref<32x32xbf16, #tpu.memory_space<vmem>>, vector<32x32xbf16>
    %cst_236 = arith.constant dense<0.000000e+00> : vector<8x32xf32>
    %368 = tpu.matmul %366, %367, %cst_236 {dimension_numbers = #tpu.dot_dimension_numbers<[1], [0], [0], [1], [0, 0, 1, 1], [], []>} : vector<8x32xbf16>, vector<32x32xbf16>, vector<8x32xf32> -> vector<8x32xf32>
    %369 = math.tanh %368 : vector<8x32xf32>
    %370 = arith.truncf %369 : vector<8x32xf32> to vector<8x32xbf16>
    %c0_237 = arith.constant 0 : index
    %c0_238 = arith.constant 0 : index
    %371 = vector.load %arg11[%c0_237, %c0_238] : memref<32x16xbf16, #tpu.memory_space<vmem>>, vector<32x16xbf16>
    %cst_239 = arith.constant dense<0.000000e+00> : vector<8x16xf32>
    %372 = tpu.matmul %370, %371, %cst_239 {dimension_numbers = #tpu.dot_dimension_numbers<[1], [0], [0], [1], [0, 0, 1, 1], [], []>} : vector<8x32xbf16>, vector<32x16xbf16>, vector<8x16xf32> -> vector<8x16xf32>
    %373 = math.tanh %372 : vector<8x16xf32>
    %374 = arith.truncf %373 : vector<8x16xf32> to vector<8x16xbf16>
    %c0_240 = arith.constant 0 : index
    %c0_241 = arith.constant 0 : index
    %375 = vector.load %arg12[%c0_240, %c0_241] : memref<16x8xbf16, #tpu.memory_space<vmem>>, vector<16x8xbf16>
    %cst_242 = arith.constant dense<0.000000e+00> : vector<8x8xf32>
    %376 = tpu.matmul %374, %375, %cst_242 {dimension_numbers = #tpu.dot_dimension_numbers<[1], [0], [0], [1], [0, 0, 1, 1], [], []>} : vector<8x16xbf16>, vector<16x8xbf16>, vector<8x8xf32> -> vector<8x8xf32>
    %c0_243 = arith.constant 0 : index
    %c0_244 = arith.constant 0 : index
    %377 = vector.load %arg13[%c0_243, %c0_244] : memref<1x8xf32, #tpu.memory_space<vmem>>, vector<1x8xf32>
    %378 = vector.broadcast %377 : vector<1x8xf32> to vector<8x8xf32>
    %379 = arith.addf %376, %378 : vector<8x8xf32>
    %c3_245 = arith.constant 3 : index
    %c0_246 = arith.constant 0 : index
    %c0_247 = arith.constant 0 : index
    %380 = vector.load %arg14[%c3_245, %c0_246, %c0_247] : memref<8x8x8xf32, #tpu.memory_space<vmem>>, vector<1x8x8xf32>
    %381 = vector.shape_cast %380 : vector<1x8x8xf32> to vector<8x8xf32>
    %382 = vector.shape_cast %379 : vector<8x8xf32> to vector<1x8x8xf32>
    tpu.vector_store %arg14[%c3_245, %c0_246, %c0_247], %382 {strides = array<i32>} : memref<8x8x8xf32, #tpu.memory_space<vmem>>, vector<1x8x8xf32>,
    %c4 = arith.constant 4 : index
    %c0_248 = arith.constant 0 : index
    %c0_249 = arith.constant 0 : index
    %383 = vector.load %arg3[%c4, %c0_248, %c0_249] : memref<8x8x8xf32, #tpu.memory_space<vmem>>, vector<1x8x8xf32>
    %384 = vector.shape_cast %383 : vector<1x8x8xf32> to vector<8x8xf32>
    %c0_250 = arith.constant 0 : index
    %c0_251 = arith.constant 0 : index
    %c0_252 = arith.constant 0 : index
    %385 = vector.load %arg17[%c0_250, %c0_251, %c0_252] : memref<2x8x32xf32, #tpu.memory_space<vmem>>, vector<1x8x32xf32>
    %386 = vector.shape_cast %385 : vector<1x8x32xf32> to vector<8x32xf32>
    %c0_253 = arith.constant 0 : index
    %c0_254 = arith.constant 0 : index
    %c0_255 = arith.constant 0 : index
    %387 = vector.load %arg18[%c0_253, %c0_254, %c0_255] : memref<2x8x32xf32, #tpu.memory_space<vmem>>, vector<1x8x32xf32>
    %388 = vector.shape_cast %387 : vector<1x8x32xf32> to vector<8x32xf32>
    %389 = arith.truncf %384 : vector<8x8xf32> to vector<8x8xbf16>
    %c0_256 = arith.constant 0 : index
    %c0_257 = arith.constant 0 : index
    %390 = vector.load %arg4[%c0_256, %c0_257] : memref<8x128xbf16, #tpu.memory_space<vmem>>, vector<8x128xbf16>
    %cst_258 = arith.constant dense<0.000000e+00> : vector<8x128xf32>
    %391 = tpu.matmul %389, %390, %cst_258 {dimension_numbers = #tpu.dot_dimension_numbers<[1], [0], [0], [1], [0, 0, 1, 1], [], []>} : vector<8x8xbf16>, vector<8x128xbf16>, vector<8x128xf32> -> vector<8x128xf32>
    %392 = arith.truncf %386 : vector<8x32xf32> to vector<8x32xbf16>
    %c0_259 = arith.constant 0 : index
    %c0_260 = arith.constant 0 : index
    %393 = vector.load %arg5[%c0_259, %c0_260] : memref<32x128xbf16, #tpu.memory_space<vmem>>, vector<32x128xbf16>
    %cst_261 = arith.constant dense<0.000000e+00> : vector<8x128xf32>
    %394 = tpu.matmul %392, %393, %cst_261 {dimension_numbers = #tpu.dot_dimension_numbers<[1], [0], [0], [1], [0, 0, 1, 1], [], []>} : vector<8x32xbf16>, vector<32x128xbf16>, vector<8x128xf32> -> vector<8x128xf32>
    %395 = arith.addf %391, %394 : vector<8x128xf32>
    %c0_262 = arith.constant 0 : index
    %c0_263 = arith.constant 0 : index
    %396 = vector.load %arg6[%c0_262, %c0_263] : memref<1x128xf32, #tpu.memory_space<vmem>>, vector<1x128xf32>
    %397 = vector.broadcast %396 : vector<1x128xf32> to vector<8x128xf32>
    %398 = arith.addf %395, %397 : vector<8x128xf32>
    %399 = arith.negf %398 : vector<8x128xf32>
    %400 = math.exp %399 : vector<8x128xf32>
    %cst_264 = arith.constant 1.000000e+00 : f32
    %401 = vector.broadcast %cst_264 : f32 to vector<8x128xf32>
    %402 = arith.addf %401, %400 : vector<8x128xf32>
    %403 = arith.divf %401, %402 : vector<8x128xf32>
    %404 = vector.extract_strided_slice %403 {offsets = [0, 0], sizes = [8, 32], strides = [1, 1]} : vector<8x128xf32> to vector<8x32xf32>
    %405 = vector.extract_strided_slice %403 {offsets = [0, 32], sizes = [8, 32], strides = [1, 1]} : vector<8x128xf32> to vector<8x32xf32>
    %406 = vector.extract_strided_slice %403 {offsets = [0, 64], sizes = [8, 32], strides = [1, 1]} : vector<8x128xf32> to vector<8x32xf32>
    %cst_265 = arith.constant 2.000000e+00 : f32
    %407 = vector.broadcast %cst_265 : f32 to vector<8x32xf32>
    %408 = arith.mulf %407, %406 : vector<8x32xf32>
    %cst_266 = arith.constant 1.000000e+00 : f32
    %409 = vector.broadcast %cst_266 : f32 to vector<8x32xf32>
    %410 = arith.subf %408, %409 : vector<8x32xf32>
    %411 = vector.extract_strided_slice %403 {offsets = [0, 96], sizes = [8, 32], strides = [1, 1]} : vector<8x128xf32> to vector<8x32xf32>
    %412 = arith.mulf %405, %388 : vector<8x32xf32>
    %413 = arith.mulf %404, %410 : vector<8x32xf32>
    %414 = arith.addf %412, %413 : vector<8x32xf32>
    %415 = math.tanh %414 : vector<8x32xf32>
    %416 = arith.mulf %411, %415 : vector<8x32xf32>
    %c0_267 = arith.constant 0 : index
    %c0_268 = arith.constant 0 : index
    %c0_269 = arith.constant 0 : index
    %417 = vector.load %arg17[%c0_267, %c0_268, %c0_269] : memref<2x8x32xf32, #tpu.memory_space<vmem>>, vector<1x8x32xf32>
    %418 = vector.shape_cast %417 : vector<1x8x32xf32> to vector<8x32xf32>
    %419 = vector.shape_cast %416 : vector<8x32xf32> to vector<1x8x32xf32>
    tpu.vector_store %arg17[%c0_267, %c0_268, %c0_269], %419 {strides = array<i32>} : memref<2x8x32xf32, #tpu.memory_space<vmem>>, vector<1x8x32xf32>,
    %c0_270 = arith.constant 0 : index
    %c0_271 = arith.constant 0 : index
    %c0_272 = arith.constant 0 : index
    %420 = vector.load %arg18[%c0_270, %c0_271, %c0_272] : memref<2x8x32xf32, #tpu.memory_space<vmem>>, vector<1x8x32xf32>
    %421 = vector.shape_cast %420 : vector<1x8x32xf32> to vector<8x32xf32>
    %422 = vector.shape_cast %414 : vector<8x32xf32> to vector<1x8x32xf32>
    tpu.vector_store %arg18[%c0_270, %c0_271, %c0_272], %422 {strides = array<i32>} : memref<2x8x32xf32, #tpu.memory_space<vmem>>, vector<1x8x32xf32>,
    %c1_273 = arith.constant 1 : index
    %c0_274 = arith.constant 0 : index
    %c0_275 = arith.constant 0 : index
    %423 = vector.load %arg17[%c1_273, %c0_274, %c0_275] : memref<2x8x32xf32, #tpu.memory_space<vmem>>, vector<1x8x32xf32>
    %424 = vector.shape_cast %423 : vector<1x8x32xf32> to vector<8x32xf32>
    %c1_276 = arith.constant 1 : index
    %c0_277 = arith.constant 0 : index
    %c0_278 = arith.constant 0 : index
    %425 = vector.load %arg18[%c1_276, %c0_277, %c0_278] : memref<2x8x32xf32, #tpu.memory_space<vmem>>, vector<1x8x32xf32>
    %426 = vector.shape_cast %425 : vector<1x8x32xf32> to vector<8x32xf32>
    %427 = arith.truncf %416 : vector<8x32xf32> to vector<8x32xbf16>
    %c0_279 = arith.constant 0 : index
    %c0_280 = arith.constant 0 : index
    %428 = vector.load %arg7[%c0_279, %c0_280] : memref<32x128xbf16, #tpu.memory_space<vmem>>, vector<32x128xbf16>
    %cst_281 = arith.constant dense<0.000000e+00> : vector<8x128xf32>
    %429 = tpu.matmul %427, %428, %cst_281 {dimension_numbers = #tpu.dot_dimension_numbers<[1], [0], [0], [1], [0, 0, 1, 1], [], []>} : vector<8x32xbf16>, vector<32x128xbf16>, vector<8x128xf32> -> vector<8x128xf32>
    %430 = arith.truncf %424 : vector<8x32xf32> to vector<8x32xbf16>
    %c0_282 = arith.constant 0 : index
    %c0_283 = arith.constant 0 : index
    %431 = vector.load %arg8[%c0_282, %c0_283] : memref<32x128xbf16, #tpu.memory_space<vmem>>, vector<32x128xbf16>
    %cst_284 = arith.constant dense<0.000000e+00> : vector<8x128xf32>
    %432 = tpu.matmul %430, %431, %cst_284 {dimension_numbers = #tpu.dot_dimension_numbers<[1], [0], [0], [1], [0, 0, 1, 1], [], []>} : vector<8x32xbf16>, vector<32x128xbf16>, vector<8x128xf32> -> vector<8x128xf32>
    %433 = arith.addf %429, %432 : vector<8x128xf32>
    %c0_285 = arith.constant 0 : index
    %c0_286 = arith.constant 0 : index
    %434 = vector.load %arg9[%c0_285, %c0_286] : memref<1x128xf32, #tpu.memory_space<vmem>>, vector<1x128xf32>
    %435 = vector.broadcast %434 : vector<1x128xf32> to vector<8x128xf32>
    %436 = arith.addf %433, %435 : vector<8x128xf32>
    %437 = arith.negf %436 : vector<8x128xf32>
    %438 = math.exp %437 : vector<8x128xf32>
    %cst_287 = arith.constant 1.000000e+00 : f32
    %439 = vector.broadcast %cst_287 : f32 to vector<8x128xf32>
    %440 = arith.addf %439, %438 : vector<8x128xf32>
    %441 = arith.divf %439, %440 : vector<8x128xf32>
    %442 = vector.extract_strided_slice %441 {offsets = [0, 0], sizes = [8, 32], strides = [1, 1]} : vector<8x128xf32> to vector<8x32xf32>
    %443 = vector.extract_strided_slice %441 {offsets = [0, 32], sizes = [8, 32], strides = [1, 1]} : vector<8x128xf32> to vector<8x32xf32>
    %444 = vector.extract_strided_slice %441 {offsets = [0, 64], sizes = [8, 32], strides = [1, 1]} : vector<8x128xf32> to vector<8x32xf32>
    %cst_288 = arith.constant 2.000000e+00 : f32
    %445 = vector.broadcast %cst_288 : f32 to vector<8x32xf32>
    %446 = arith.mulf %445, %444 : vector<8x32xf32>
    %cst_289 = arith.constant 1.000000e+00 : f32
    %447 = vector.broadcast %cst_289 : f32 to vector<8x32xf32>
    %448 = arith.subf %446, %447 : vector<8x32xf32>
    %449 = vector.extract_strided_slice %441 {offsets = [0, 96], sizes = [8, 32], strides = [1, 1]} : vector<8x128xf32> to vector<8x32xf32>
    %450 = arith.mulf %443, %426 : vector<8x32xf32>
    %451 = arith.mulf %442, %448 : vector<8x32xf32>
    %452 = arith.addf %450, %451 : vector<8x32xf32>
    %453 = math.tanh %452 : vector<8x32xf32>
    %454 = arith.mulf %449, %453 : vector<8x32xf32>
    %c1_290 = arith.constant 1 : index
    %c0_291 = arith.constant 0 : index
    %c0_292 = arith.constant 0 : index
    %455 = vector.load %arg17[%c1_290, %c0_291, %c0_292] : memref<2x8x32xf32, #tpu.memory_space<vmem>>, vector<1x8x32xf32>
    %456 = vector.shape_cast %455 : vector<1x8x32xf32> to vector<8x32xf32>
    %457 = vector.shape_cast %454 : vector<8x32xf32> to vector<1x8x32xf32>
    tpu.vector_store %arg17[%c1_290, %c0_291, %c0_292], %457 {strides = array<i32>} : memref<2x8x32xf32, #tpu.memory_space<vmem>>, vector<1x8x32xf32>,
    %c1_293 = arith.constant 1 : index
    %c0_294 = arith.constant 0 : index
    %c0_295 = arith.constant 0 : index
    %458 = vector.load %arg18[%c1_293, %c0_294, %c0_295] : memref<2x8x32xf32, #tpu.memory_space<vmem>>, vector<1x8x32xf32>
    %459 = vector.shape_cast %458 : vector<1x8x32xf32> to vector<8x32xf32>
    %460 = vector.shape_cast %452 : vector<8x32xf32> to vector<1x8x32xf32>
    tpu.vector_store %arg18[%c1_293, %c0_294, %c0_295], %460 {strides = array<i32>} : memref<2x8x32xf32, #tpu.memory_space<vmem>>, vector<1x8x32xf32>,
    %461 = arith.truncf %454 : vector<8x32xf32> to vector<8x32xbf16>
    %c0_296 = arith.constant 0 : index
    %c0_297 = arith.constant 0 : index
    %462 = vector.load %arg10[%c0_296, %c0_297] : memref<32x32xbf16, #tpu.memory_space<vmem>>, vector<32x32xbf16>
    %cst_298 = arith.constant dense<0.000000e+00> : vector<8x32xf32>
    %463 = tpu.matmul %461, %462, %cst_298 {dimension_numbers = #tpu.dot_dimension_numbers<[1], [0], [0], [1], [0, 0, 1, 1], [], []>} : vector<8x32xbf16>, vector<32x32xbf16>, vector<8x32xf32> -> vector<8x32xf32>
    %464 = math.tanh %463 : vector<8x32xf32>
    %465 = arith.truncf %464 : vector<8x32xf32> to vector<8x32xbf16>
    %c0_299 = arith.constant 0 : index
    %c0_300 = arith.constant 0 : index
    %466 = vector.load %arg11[%c0_299, %c0_300] : memref<32x16xbf16, #tpu.memory_space<vmem>>, vector<32x16xbf16>
    %cst_301 = arith.constant dense<0.000000e+00> : vector<8x16xf32>
    %467 = tpu.matmul %465, %466, %cst_301 {dimension_numbers = #tpu.dot_dimension_numbers<[1], [0], [0], [1], [0, 0, 1, 1], [], []>} : vector<8x32xbf16>, vector<32x16xbf16>, vector<8x16xf32> -> vector<8x16xf32>
    %468 = math.tanh %467 : vector<8x16xf32>
    %469 = arith.truncf %468 : vector<8x16xf32> to vector<8x16xbf16>
    %c0_302 = arith.constant 0 : index
    %c0_303 = arith.constant 0 : index
    %470 = vector.load %arg12[%c0_302, %c0_303] : memref<16x8xbf16, #tpu.memory_space<vmem>>, vector<16x8xbf16>
    %cst_304 = arith.constant dense<0.000000e+00> : vector<8x8xf32>
    %471 = tpu.matmul %469, %470, %cst_304 {dimension_numbers = #tpu.dot_dimension_numbers<[1], [0], [0], [1], [0, 0, 1, 1], [], []>} : vector<8x16xbf16>, vector<16x8xbf16>, vector<8x8xf32> -> vector<8x8xf32>
    %c0_305 = arith.constant 0 : index
    %c0_306 = arith.constant 0 : index
    %472 = vector.load %arg13[%c0_305, %c0_306] : memref<1x8xf32, #tpu.memory_space<vmem>>, vector<1x8xf32>
    %473 = vector.broadcast %472 : vector<1x8xf32> to vector<8x8xf32>
    %474 = arith.addf %471, %473 : vector<8x8xf32>
    %c4_307 = arith.constant 4 : index
    %c0_308 = arith.constant 0 : index
    %c0_309 = arith.constant 0 : index
    %475 = vector.load %arg14[%c4_307, %c0_308, %c0_309] : memref<8x8x8xf32, #tpu.memory_space<vmem>>, vector<1x8x8xf32>
    %476 = vector.shape_cast %475 : vector<1x8x8xf32> to vector<8x8xf32>
    %477 = vector.shape_cast %474 : vector<8x8xf32> to vector<1x8x8xf32>
    tpu.vector_store %arg14[%c4_307, %c0_308, %c0_309], %477 {strides = array<i32>} : memref<8x8x8xf32, #tpu.memory_space<vmem>>, vector<1x8x8xf32>,
    %c5 = arith.constant 5 : index
    %c0_310 = arith.constant 0 : index
    %c0_311 = arith.constant 0 : index
    %478 = vector.load %arg3[%c5, %c0_310, %c0_311] : memref<8x8x8xf32, #tpu.memory_space<vmem>>, vector<1x8x8xf32>
    %479 = vector.shape_cast %478 : vector<1x8x8xf32> to vector<8x8xf32>
    %c0_312 = arith.constant 0 : index
    %c0_313 = arith.constant 0 : index
    %c0_314 = arith.constant 0 : index
    %480 = vector.load %arg17[%c0_312, %c0_313, %c0_314] : memref<2x8x32xf32, #tpu.memory_space<vmem>>, vector<1x8x32xf32>
    %481 = vector.shape_cast %480 : vector<1x8x32xf32> to vector<8x32xf32>
    %c0_315 = arith.constant 0 : index
    %c0_316 = arith.constant 0 : index
    %c0_317 = arith.constant 0 : index
    %482 = vector.load %arg18[%c0_315, %c0_316, %c0_317] : memref<2x8x32xf32, #tpu.memory_space<vmem>>, vector<1x8x32xf32>
    %483 = vector.shape_cast %482 : vector<1x8x32xf32> to vector<8x32xf32>
    %484 = arith.truncf %479 : vector<8x8xf32> to vector<8x8xbf16>
    %c0_318 = arith.constant 0 : index
    %c0_319 = arith.constant 0 : index
    %485 = vector.load %arg4[%c0_318, %c0_319] : memref<8x128xbf16, #tpu.memory_space<vmem>>, vector<8x128xbf16>
    %cst_320 = arith.constant dense<0.000000e+00> : vector<8x128xf32>
    %486 = tpu.matmul %484, %485, %cst_320 {dimension_numbers = #tpu.dot_dimension_numbers<[1], [0], [0], [1], [0, 0, 1, 1], [], []>} : vector<8x8xbf16>, vector<8x128xbf16>, vector<8x128xf32> -> vector<8x128xf32>
    %487 = arith.truncf %481 : vector<8x32xf32> to vector<8x32xbf16>
    %c0_321 = arith.constant 0 : index
    %c0_322 = arith.constant 0 : index
    %488 = vector.load %arg5[%c0_321, %c0_322] : memref<32x128xbf16, #tpu.memory_space<vmem>>, vector<32x128xbf16>
    %cst_323 = arith.constant dense<0.000000e+00> : vector<8x128xf32>
    %489 = tpu.matmul %487, %488, %cst_323 {dimension_numbers = #tpu.dot_dimension_numbers<[1], [0], [0], [1], [0, 0, 1, 1], [], []>} : vector<8x32xbf16>, vector<32x128xbf16>, vector<8x128xf32> -> vector<8x128xf32>
    %490 = arith.addf %486, %489 : vector<8x128xf32>
    %c0_324 = arith.constant 0 : index
    %c0_325 = arith.constant 0 : index
    %491 = vector.load %arg6[%c0_324, %c0_325] : memref<1x128xf32, #tpu.memory_space<vmem>>, vector<1x128xf32>
    %492 = vector.broadcast %491 : vector<1x128xf32> to vector<8x128xf32>
    %493 = arith.addf %490, %492 : vector<8x128xf32>
    %494 = arith.negf %493 : vector<8x128xf32>
    %495 = math.exp %494 : vector<8x128xf32>
    %cst_326 = arith.constant 1.000000e+00 : f32
    %496 = vector.broadcast %cst_326 : f32 to vector<8x128xf32>
    %497 = arith.addf %496, %495 : vector<8x128xf32>
    %498 = arith.divf %496, %497 : vector<8x128xf32>
    %499 = vector.extract_strided_slice %498 {offsets = [0, 0], sizes = [8, 32], strides = [1, 1]} : vector<8x128xf32> to vector<8x32xf32>
    %500 = vector.extract_strided_slice %498 {offsets = [0, 32], sizes = [8, 32], strides = [1, 1]} : vector<8x128xf32> to vector<8x32xf32>
    %501 = vector.extract_strided_slice %498 {offsets = [0, 64], sizes = [8, 32], strides = [1, 1]} : vector<8x128xf32> to vector<8x32xf32>
    %cst_327 = arith.constant 2.000000e+00 : f32
    %502 = vector.broadcast %cst_327 : f32 to vector<8x32xf32>
    %503 = arith.mulf %502, %501 : vector<8x32xf32>
    %cst_328 = arith.constant 1.000000e+00 : f32
    %504 = vector.broadcast %cst_328 : f32 to vector<8x32xf32>
    %505 = arith.subf %503, %504 : vector<8x32xf32>
    %506 = vector.extract_strided_slice %498 {offsets = [0, 96], sizes = [8, 32], strides = [1, 1]} : vector<8x128xf32> to vector<8x32xf32>
    %507 = arith.mulf %500, %483 : vector<8x32xf32>
    %508 = arith.mulf %499, %505 : vector<8x32xf32>
    %509 = arith.addf %507, %508 : vector<8x32xf32>
    %510 = math.tanh %509 : vector<8x32xf32>
    %511 = arith.mulf %506, %510 : vector<8x32xf32>
    %c0_329 = arith.constant 0 : index
    %c0_330 = arith.constant 0 : index
    %c0_331 = arith.constant 0 : index
    %512 = vector.load %arg17[%c0_329, %c0_330, %c0_331] : memref<2x8x32xf32, #tpu.memory_space<vmem>>, vector<1x8x32xf32>
    %513 = vector.shape_cast %512 : vector<1x8x32xf32> to vector<8x32xf32>
    %514 = vector.shape_cast %511 : vector<8x32xf32> to vector<1x8x32xf32>
    tpu.vector_store %arg17[%c0_329, %c0_330, %c0_331], %514 {strides = array<i32>} : memref<2x8x32xf32, #tpu.memory_space<vmem>>, vector<1x8x32xf32>,
    %c0_332 = arith.constant 0 : index
    %c0_333 = arith.constant 0 : index
    %c0_334 = arith.constant 0 : index
    %515 = vector.load %arg18[%c0_332, %c0_333, %c0_334] : memref<2x8x32xf32, #tpu.memory_space<vmem>>, vector<1x8x32xf32>
    %516 = vector.shape_cast %515 : vector<1x8x32xf32> to vector<8x32xf32>
    %517 = vector.shape_cast %509 : vector<8x32xf32> to vector<1x8x32xf32>
    tpu.vector_store %arg18[%c0_332, %c0_333, %c0_334], %517 {strides = array<i32>} : memref<2x8x32xf32, #tpu.memory_space<vmem>>, vector<1x8x32xf32>,
    %c1_335 = arith.constant 1 : index
    %c0_336 = arith.constant 0 : index
    %c0_337 = arith.constant 0 : index
    %518 = vector.load %arg17[%c1_335, %c0_336, %c0_337] : memref<2x8x32xf32, #tpu.memory_space<vmem>>, vector<1x8x32xf32>
    %519 = vector.shape_cast %518 : vector<1x8x32xf32> to vector<8x32xf32>
    %c1_338 = arith.constant 1 : index
    %c0_339 = arith.constant 0 : index
    %c0_340 = arith.constant 0 : index
    %520 = vector.load %arg18[%c1_338, %c0_339, %c0_340] : memref<2x8x32xf32, #tpu.memory_space<vmem>>, vector<1x8x32xf32>
    %521 = vector.shape_cast %520 : vector<1x8x32xf32> to vector<8x32xf32>
    %522 = arith.truncf %511 : vector<8x32xf32> to vector<8x32xbf16>
    %c0_341 = arith.constant 0 : index
    %c0_342 = arith.constant 0 : index
    %523 = vector.load %arg7[%c0_341, %c0_342] : memref<32x128xbf16, #tpu.memory_space<vmem>>, vector<32x128xbf16>
    %cst_343 = arith.constant dense<0.000000e+00> : vector<8x128xf32>
    %524 = tpu.matmul %522, %523, %cst_343 {dimension_numbers = #tpu.dot_dimension_numbers<[1], [0], [0], [1], [0, 0, 1, 1], [], []>} : vector<8x32xbf16>, vector<32x128xbf16>, vector<8x128xf32> -> vector<8x128xf32>
    %525 = arith.truncf %519 : vector<8x32xf32> to vector<8x32xbf16>
    %c0_344 = arith.constant 0 : index
    %c0_345 = arith.constant 0 : index
    %526 = vector.load %arg8[%c0_344, %c0_345] : memref<32x128xbf16, #tpu.memory_space<vmem>>, vector<32x128xbf16>
    %cst_346 = arith.constant dense<0.000000e+00> : vector<8x128xf32>
    %527 = tpu.matmul %525, %526, %cst_346 {dimension_numbers = #tpu.dot_dimension_numbers<[1], [0], [0], [1], [0, 0, 1, 1], [], []>} : vector<8x32xbf16>, vector<32x128xbf16>, vector<8x128xf32> -> vector<8x128xf32>
    %528 = arith.addf %524, %527 : vector<8x128xf32>
    %c0_347 = arith.constant 0 : index
    %c0_348 = arith.constant 0 : index
    %529 = vector.load %arg9[%c0_347, %c0_348] : memref<1x128xf32, #tpu.memory_space<vmem>>, vector<1x128xf32>
    %530 = vector.broadcast %529 : vector<1x128xf32> to vector<8x128xf32>
    %531 = arith.addf %528, %530 : vector<8x128xf32>
    %532 = arith.negf %531 : vector<8x128xf32>
    %533 = math.exp %532 : vector<8x128xf32>
    %cst_349 = arith.constant 1.000000e+00 : f32
    %534 = vector.broadcast %cst_349 : f32 to vector<8x128xf32>
    %535 = arith.addf %534, %533 : vector<8x128xf32>
    %536 = arith.divf %534, %535 : vector<8x128xf32>
    %537 = vector.extract_strided_slice %536 {offsets = [0, 0], sizes = [8, 32], strides = [1, 1]} : vector<8x128xf32> to vector<8x32xf32>
    %538 = vector.extract_strided_slice %536 {offsets = [0, 32], sizes = [8, 32], strides = [1, 1]} : vector<8x128xf32> to vector<8x32xf32>
    %539 = vector.extract_strided_slice %536 {offsets = [0, 64], sizes = [8, 32], strides = [1, 1]} : vector<8x128xf32> to vector<8x32xf32>
    %cst_350 = arith.constant 2.000000e+00 : f32
    %540 = vector.broadcast %cst_350 : f32 to vector<8x32xf32>
    %541 = arith.mulf %540, %539 : vector<8x32xf32>
    %cst_351 = arith.constant 1.000000e+00 : f32
    %542 = vector.broadcast %cst_351 : f32 to vector<8x32xf32>
    %543 = arith.subf %541, %542 : vector<8x32xf32>
    %544 = vector.extract_strided_slice %536 {offsets = [0, 96], sizes = [8, 32], strides = [1, 1]} : vector<8x128xf32> to vector<8x32xf32>
    %545 = arith.mulf %538, %521 : vector<8x32xf32>
    %546 = arith.mulf %537, %543 : vector<8x32xf32>
    %547 = arith.addf %545, %546 : vector<8x32xf32>
    %548 = math.tanh %547 : vector<8x32xf32>
    %549 = arith.mulf %544, %548 : vector<8x32xf32>
    %c1_352 = arith.constant 1 : index
    %c0_353 = arith.constant 0 : index
    %c0_354 = arith.constant 0 : index
    %550 = vector.load %arg17[%c1_352, %c0_353, %c0_354] : memref<2x8x32xf32, #tpu.memory_space<vmem>>, vector<1x8x32xf32>
    %551 = vector.shape_cast %550 : vector<1x8x32xf32> to vector<8x32xf32>
    %552 = vector.shape_cast %549 : vector<8x32xf32> to vector<1x8x32xf32>
    tpu.vector_store %arg17[%c1_352, %c0_353, %c0_354], %552 {strides = array<i32>} : memref<2x8x32xf32, #tpu.memory_space<vmem>>, vector<1x8x32xf32>,
    %c1_355 = arith.constant 1 : index
    %c0_356 = arith.constant 0 : index
    %c0_357 = arith.constant 0 : index
    %553 = vector.load %arg18[%c1_355, %c0_356, %c0_357] : memref<2x8x32xf32, #tpu.memory_space<vmem>>, vector<1x8x32xf32>
    %554 = vector.shape_cast %553 : vector<1x8x32xf32> to vector<8x32xf32>
    %555 = vector.shape_cast %547 : vector<8x32xf32> to vector<1x8x32xf32>
    tpu.vector_store %arg18[%c1_355, %c0_356, %c0_357], %555 {strides = array<i32>} : memref<2x8x32xf32, #tpu.memory_space<vmem>>, vector<1x8x32xf32>,
    %556 = arith.truncf %549 : vector<8x32xf32> to vector<8x32xbf16>
    %c0_358 = arith.constant 0 : index
    %c0_359 = arith.constant 0 : index
    %557 = vector.load %arg10[%c0_358, %c0_359] : memref<32x32xbf16, #tpu.memory_space<vmem>>, vector<32x32xbf16>
    %cst_360 = arith.constant dense<0.000000e+00> : vector<8x32xf32>
    %558 = tpu.matmul %556, %557, %cst_360 {dimension_numbers = #tpu.dot_dimension_numbers<[1], [0], [0], [1], [0, 0, 1, 1], [], []>} : vector<8x32xbf16>, vector<32x32xbf16>, vector<8x32xf32> -> vector<8x32xf32>
    %559 = math.tanh %558 : vector<8x32xf32>
    %560 = arith.truncf %559 : vector<8x32xf32> to vector<8x32xbf16>
    %c0_361 = arith.constant 0 : index
    %c0_362 = arith.constant 0 : index
    %561 = vector.load %arg11[%c0_361, %c0_362] : memref<32x16xbf16, #tpu.memory_space<vmem>>, vector<32x16xbf16>
    %cst_363 = arith.constant dense<0.000000e+00> : vector<8x16xf32>
    %562 = tpu.matmul %560, %561, %cst_363 {dimension_numbers = #tpu.dot_dimension_numbers<[1], [0], [0], [1], [0, 0, 1, 1], [], []>} : vector<8x32xbf16>, vector<32x16xbf16>, vector<8x16xf32> -> vector<8x16xf32>
    %563 = math.tanh %562 : vector<8x16xf32>
    %564 = arith.truncf %563 : vector<8x16xf32> to vector<8x16xbf16>
    %c0_364 = arith.constant 0 : index
    %c0_365 = arith.constant 0 : index
    %565 = vector.load %arg12[%c0_364, %c0_365] : memref<16x8xbf16, #tpu.memory_space<vmem>>, vector<16x8xbf16>
    %cst_366 = arith.constant dense<0.000000e+00> : vector<8x8xf32>
    %566 = tpu.matmul %564, %565, %cst_366 {dimension_numbers = #tpu.dot_dimension_numbers<[1], [0], [0], [1], [0, 0, 1, 1], [], []>} : vector<8x16xbf16>, vector<16x8xbf16>, vector<8x8xf32> -> vector<8x8xf32>
    %c0_367 = arith.constant 0 : index
    %c0_368 = arith.constant 0 : index
    %567 = vector.load %arg13[%c0_367, %c0_368] : memref<1x8xf32, #tpu.memory_space<vmem>>, vector<1x8xf32>
    %568 = vector.broadcast %567 : vector<1x8xf32> to vector<8x8xf32>
    %569 = arith.addf %566, %568 : vector<8x8xf32>
    %c5_369 = arith.constant 5 : index
    %c0_370 = arith.constant 0 : index
    %c0_371 = arith.constant 0 : index
    %570 = vector.load %arg14[%c5_369, %c0_370, %c0_371] : memref<8x8x8xf32, #tpu.memory_space<vmem>>, vector<1x8x8xf32>
    %571 = vector.shape_cast %570 : vector<1x8x8xf32> to vector<8x8xf32>
    %572 = vector.shape_cast %569 : vector<8x8xf32> to vector<1x8x8xf32>
    tpu.vector_store %arg14[%c5_369, %c0_370, %c0_371], %572 {strides = array<i32>} : memref<8x8x8xf32, #tpu.memory_space<vmem>>, vector<1x8x8xf32>,
    %c6 = arith.constant 6 : index
    %c0_372 = arith.constant 0 : index
    %c0_373 = arith.constant 0 : index
    %573 = vector.load %arg3[%c6, %c0_372, %c0_373] : memref<8x8x8xf32, #tpu.memory_space<vmem>>, vector<1x8x8xf32>
    %574 = vector.shape_cast %573 : vector<1x8x8xf32> to vector<8x8xf32>
    %c0_374 = arith.constant 0 : index
    %c0_375 = arith.constant 0 : index
    %c0_376 = arith.constant 0 : index
    %575 = vector.load %arg17[%c0_374, %c0_375, %c0_376] : memref<2x8x32xf32, #tpu.memory_space<vmem>>, vector<1x8x32xf32>
    %576 = vector.shape_cast %575 : vector<1x8x32xf32> to vector<8x32xf32>
    %c0_377 = arith.constant 0 : index
    %c0_378 = arith.constant 0 : index
    %c0_379 = arith.constant 0 : index
    %577 = vector.load %arg18[%c0_377, %c0_378, %c0_379] : memref<2x8x32xf32, #tpu.memory_space<vmem>>, vector<1x8x32xf32>
    %578 = vector.shape_cast %577 : vector<1x8x32xf32> to vector<8x32xf32>
    %579 = arith.truncf %574 : vector<8x8xf32> to vector<8x8xbf16>
    %c0_380 = arith.constant 0 : index
    %c0_381 = arith.constant 0 : index
    %580 = vector.load %arg4[%c0_380, %c0_381] : memref<8x128xbf16, #tpu.memory_space<vmem>>, vector<8x128xbf16>
    %cst_382 = arith.constant dense<0.000000e+00> : vector<8x128xf32>
    %581 = tpu.matmul %579, %580, %cst_382 {dimension_numbers = #tpu.dot_dimension_numbers<[1], [0], [0], [1], [0, 0, 1, 1], [], []>} : vector<8x8xbf16>, vector<8x128xbf16>, vector<8x128xf32> -> vector<8x128xf32>
    %582 = arith.truncf %576 : vector<8x32xf32> to vector<8x32xbf16>
    %c0_383 = arith.constant 0 : index
    %c0_384 = arith.constant 0 : index
    %583 = vector.load %arg5[%c0_383, %c0_384] : memref<32x128xbf16, #tpu.memory_space<vmem>>, vector<32x128xbf16>
    %cst_385 = arith.constant dense<0.000000e+00> : vector<8x128xf32>
    %584 = tpu.matmul %582, %583, %cst_385 {dimension_numbers = #tpu.dot_dimension_numbers<[1], [0], [0], [1], [0, 0, 1, 1], [], []>} : vector<8x32xbf16>, vector<32x128xbf16>, vector<8x128xf32> -> vector<8x128xf32>
    %585 = arith.addf %581, %584 : vector<8x128xf32>
    %c0_386 = arith.constant 0 : index
    %c0_387 = arith.constant 0 : index
    %586 = vector.load %arg6[%c0_386, %c0_387] : memref<1x128xf32, #tpu.memory_space<vmem>>, vector<1x128xf32>
    %587 = vector.broadcast %586 : vector<1x128xf32> to vector<8x128xf32>
    %588 = arith.addf %585, %587 : vector<8x128xf32>
    %589 = arith.negf %588 : vector<8x128xf32>
    %590 = math.exp %589 : vector<8x128xf32>
    %cst_388 = arith.constant 1.000000e+00 : f32
    %591 = vector.broadcast %cst_388 : f32 to vector<8x128xf32>
    %592 = arith.addf %591, %590 : vector<8x128xf32>
    %593 = arith.divf %591, %592 : vector<8x128xf32>
    %594 = vector.extract_strided_slice %593 {offsets = [0, 0], sizes = [8, 32], strides = [1, 1]} : vector<8x128xf32> to vector<8x32xf32>
    %595 = vector.extract_strided_slice %593 {offsets = [0, 32], sizes = [8, 32], strides = [1, 1]} : vector<8x128xf32> to vector<8x32xf32>
    %596 = vector.extract_strided_slice %593 {offsets = [0, 64], sizes = [8, 32], strides = [1, 1]} : vector<8x128xf32> to vector<8x32xf32>
    %cst_389 = arith.constant 2.000000e+00 : f32
    %597 = vector.broadcast %cst_389 : f32 to vector<8x32xf32>
    %598 = arith.mulf %597, %596 : vector<8x32xf32>
    %cst_390 = arith.constant 1.000000e+00 : f32
    %599 = vector.broadcast %cst_390 : f32 to vector<8x32xf32>
    %600 = arith.subf %598, %599 : vector<8x32xf32>
    %601 = vector.extract_strided_slice %593 {offsets = [0, 96], sizes = [8, 32], strides = [1, 1]} : vector<8x128xf32> to vector<8x32xf32>
    %602 = arith.mulf %595, %578 : vector<8x32xf32>
    %603 = arith.mulf %594, %600 : vector<8x32xf32>
    %604 = arith.addf %602, %603 : vector<8x32xf32>
    %605 = math.tanh %604 : vector<8x32xf32>
    %606 = arith.mulf %601, %605 : vector<8x32xf32>
    %c0_391 = arith.constant 0 : index
    %c0_392 = arith.constant 0 : index
    %c0_393 = arith.constant 0 : index
    %607 = vector.load %arg17[%c0_391, %c0_392, %c0_393] : memref<2x8x32xf32, #tpu.memory_space<vmem>>, vector<1x8x32xf32>
    %608 = vector.shape_cast %607 : vector<1x8x32xf32> to vector<8x32xf32>
    %609 = vector.shape_cast %606 : vector<8x32xf32> to vector<1x8x32xf32>
    tpu.vector_store %arg17[%c0_391, %c0_392, %c0_393], %609 {strides = array<i32>} : memref<2x8x32xf32, #tpu.memory_space<vmem>>, vector<1x8x32xf32>,
    %c0_394 = arith.constant 0 : index
    %c0_395 = arith.constant 0 : index
    %c0_396 = arith.constant 0 : index
    %610 = vector.load %arg18[%c0_394, %c0_395, %c0_396] : memref<2x8x32xf32, #tpu.memory_space<vmem>>, vector<1x8x32xf32>
    %611 = vector.shape_cast %610 : vector<1x8x32xf32> to vector<8x32xf32>
    %612 = vector.shape_cast %604 : vector<8x32xf32> to vector<1x8x32xf32>
    tpu.vector_store %arg18[%c0_394, %c0_395, %c0_396], %612 {strides = array<i32>} : memref<2x8x32xf32, #tpu.memory_space<vmem>>, vector<1x8x32xf32>,
    %c1_397 = arith.constant 1 : index
    %c0_398 = arith.constant 0 : index
    %c0_399 = arith.constant 0 : index
    %613 = vector.load %arg17[%c1_397, %c0_398, %c0_399] : memref<2x8x32xf32, #tpu.memory_space<vmem>>, vector<1x8x32xf32>
    %614 = vector.shape_cast %613 : vector<1x8x32xf32> to vector<8x32xf32>
    %c1_400 = arith.constant 1 : index
    %c0_401 = arith.constant 0 : index
    %c0_402 = arith.constant 0 : index
    %615 = vector.load %arg18[%c1_400, %c0_401, %c0_402] : memref<2x8x32xf32, #tpu.memory_space<vmem>>, vector<1x8x32xf32>
    %616 = vector.shape_cast %615 : vector<1x8x32xf32> to vector<8x32xf32>
    %617 = arith.truncf %606 : vector<8x32xf32> to vector<8x32xbf16>
    %c0_403 = arith.constant 0 : index
    %c0_404 = arith.constant 0 : index
    %618 = vector.load %arg7[%c0_403, %c0_404] : memref<32x128xbf16, #tpu.memory_space<vmem>>, vector<32x128xbf16>
    %cst_405 = arith.constant dense<0.000000e+00> : vector<8x128xf32>
    %619 = tpu.matmul %617, %618, %cst_405 {dimension_numbers = #tpu.dot_dimension_numbers<[1], [0], [0], [1], [0, 0, 1, 1], [], []>} : vector<8x32xbf16>, vector<32x128xbf16>, vector<8x128xf32> -> vector<8x128xf32>
    %620 = arith.truncf %614 : vector<8x32xf32> to vector<8x32xbf16>
    %c0_406 = arith.constant 0 : index
    %c0_407 = arith.constant 0 : index
    %621 = vector.load %arg8[%c0_406, %c0_407] : memref<32x128xbf16, #tpu.memory_space<vmem>>, vector<32x128xbf16>
    %cst_408 = arith.constant dense<0.000000e+00> : vector<8x128xf32>
    %622 = tpu.matmul %620, %621, %cst_408 {dimension_numbers = #tpu.dot_dimension_numbers<[1], [0], [0], [1], [0, 0, 1, 1], [], []>} : vector<8x32xbf16>, vector<32x128xbf16>, vector<8x128xf32> -> vector<8x128xf32>
    %623 = arith.addf %619, %622 : vector<8x128xf32>
    %c0_409 = arith.constant 0 : index
    %c0_410 = arith.constant 0 : index
    %624 = vector.load %arg9[%c0_409, %c0_410] : memref<1x128xf32, #tpu.memory_space<vmem>>, vector<1x128xf32>
    %625 = vector.broadcast %624 : vector<1x128xf32> to vector<8x128xf32>
    %626 = arith.addf %623, %625 : vector<8x128xf32>
    %627 = arith.negf %626 : vector<8x128xf32>
    %628 = math.exp %627 : vector<8x128xf32>
    %cst_411 = arith.constant 1.000000e+00 : f32
    %629 = vector.broadcast %cst_411 : f32 to vector<8x128xf32>
    %630 = arith.addf %629, %628 : vector<8x128xf32>
    %631 = arith.divf %629, %630 : vector<8x128xf32>
    %632 = vector.extract_strided_slice %631 {offsets = [0, 0], sizes = [8, 32], strides = [1, 1]} : vector<8x128xf32> to vector<8x32xf32>
    %633 = vector.extract_strided_slice %631 {offsets = [0, 32], sizes = [8, 32], strides = [1, 1]} : vector<8x128xf32> to vector<8x32xf32>
    %634 = vector.extract_strided_slice %631 {offsets = [0, 64], sizes = [8, 32], strides = [1, 1]} : vector<8x128xf32> to vector<8x32xf32>
    %cst_412 = arith.constant 2.000000e+00 : f32
    %635 = vector.broadcast %cst_412 : f32 to vector<8x32xf32>
    %636 = arith.mulf %635, %634 : vector<8x32xf32>
    %cst_413 = arith.constant 1.000000e+00 : f32
    %637 = vector.broadcast %cst_413 : f32 to vector<8x32xf32>
    %638 = arith.subf %636, %637 : vector<8x32xf32>
    %639 = vector.extract_strided_slice %631 {offsets = [0, 96], sizes = [8, 32], strides = [1, 1]} : vector<8x128xf32> to vector<8x32xf32>
    %640 = arith.mulf %633, %616 : vector<8x32xf32>
    %641 = arith.mulf %632, %638 : vector<8x32xf32>
    %642 = arith.addf %640, %641 : vector<8x32xf32>
    %643 = math.tanh %642 : vector<8x32xf32>
    %644 = arith.mulf %639, %643 : vector<8x32xf32>
    %c1_414 = arith.constant 1 : index
    %c0_415 = arith.constant 0 : index
    %c0_416 = arith.constant 0 : index
    %645 = vector.load %arg17[%c1_414, %c0_415, %c0_416] : memref<2x8x32xf32, #tpu.memory_space<vmem>>, vector<1x8x32xf32>
    %646 = vector.shape_cast %645 : vector<1x8x32xf32> to vector<8x32xf32>
    %647 = vector.shape_cast %644 : vector<8x32xf32> to vector<1x8x32xf32>
    tpu.vector_store %arg17[%c1_414, %c0_415, %c0_416], %647 {strides = array<i32>} : memref<2x8x32xf32, #tpu.memory_space<vmem>>, vector<1x8x32xf32>,
    %c1_417 = arith.constant 1 : index
    %c0_418 = arith.constant 0 : index
    %c0_419 = arith.constant 0 : index
    %648 = vector.load %arg18[%c1_417, %c0_418, %c0_419] : memref<2x8x32xf32, #tpu.memory_space<vmem>>, vector<1x8x32xf32>
    %649 = vector.shape_cast %648 : vector<1x8x32xf32> to vector<8x32xf32>
    %650 = vector.shape_cast %642 : vector<8x32xf32> to vector<1x8x32xf32>
    tpu.vector_store %arg18[%c1_417, %c0_418, %c0_419], %650 {strides = array<i32>} : memref<2x8x32xf32, #tpu.memory_space<vmem>>, vector<1x8x32xf32>,
    %651 = arith.truncf %644 : vector<8x32xf32> to vector<8x32xbf16>
    %c0_420 = arith.constant 0 : index
    %c0_421 = arith.constant 0 : index
    %652 = vector.load %arg10[%c0_420, %c0_421] : memref<32x32xbf16, #tpu.memory_space<vmem>>, vector<32x32xbf16>
    %cst_422 = arith.constant dense<0.000000e+00> : vector<8x32xf32>
    %653 = tpu.matmul %651, %652, %cst_422 {dimension_numbers = #tpu.dot_dimension_numbers<[1], [0], [0], [1], [0, 0, 1, 1], [], []>} : vector<8x32xbf16>, vector<32x32xbf16>, vector<8x32xf32> -> vector<8x32xf32>
    %654 = math.tanh %653 : vector<8x32xf32>
    %655 = arith.truncf %654 : vector<8x32xf32> to vector<8x32xbf16>
    %c0_423 = arith.constant 0 : index
    %c0_424 = arith.constant 0 : index
    %656 = vector.load %arg11[%c0_423, %c0_424] : memref<32x16xbf16, #tpu.memory_space<vmem>>, vector<32x16xbf16>
    %cst_425 = arith.constant dense<0.000000e+00> : vector<8x16xf32>
    %657 = tpu.matmul %655, %656, %cst_425 {dimension_numbers = #tpu.dot_dimension_numbers<[1], [0], [0], [1], [0, 0, 1, 1], [], []>} : vector<8x32xbf16>, vector<32x16xbf16>, vector<8x16xf32> -> vector<8x16xf32>
    %658 = math.tanh %657 : vector<8x16xf32>
    %659 = arith.truncf %658 : vector<8x16xf32> to vector<8x16xbf16>
    %c0_426 = arith.constant 0 : index
    %c0_427 = arith.constant 0 : index
    %660 = vector.load %arg12[%c0_426, %c0_427] : memref<16x8xbf16, #tpu.memory_space<vmem>>, vector<16x8xbf16>
    %cst_428 = arith.constant dense<0.000000e+00> : vector<8x8xf32>
    %661 = tpu.matmul %659, %660, %cst_428 {dimension_numbers = #tpu.dot_dimension_numbers<[1], [0], [0], [1], [0, 0, 1, 1], [], []>} : vector<8x16xbf16>, vector<16x8xbf16>, vector<8x8xf32> -> vector<8x8xf32>
    %c0_429 = arith.constant 0 : index
    %c0_430 = arith.constant 0 : index
    %662 = vector.load %arg13[%c0_429, %c0_430] : memref<1x8xf32, #tpu.memory_space<vmem>>, vector<1x8xf32>
    %663 = vector.broadcast %662 : vector<1x8xf32> to vector<8x8xf32>
    %664 = arith.addf %661, %663 : vector<8x8xf32>
    %c6_431 = arith.constant 6 : index
    %c0_432 = arith.constant 0 : index
    %c0_433 = arith.constant 0 : index
    %665 = vector.load %arg14[%c6_431, %c0_432, %c0_433] : memref<8x8x8xf32, #tpu.memory_space<vmem>>, vector<1x8x8xf32>
    %666 = vector.shape_cast %665 : vector<1x8x8xf32> to vector<8x8xf32>
    %667 = vector.shape_cast %664 : vector<8x8xf32> to vector<1x8x8xf32>
    tpu.vector_store %arg14[%c6_431, %c0_432, %c0_433], %667 {strides = array<i32>} : memref<8x8x8xf32, #tpu.memory_space<vmem>>, vector<1x8x8xf32>,
    %c7 = arith.constant 7 : index
    %c0_434 = arith.constant 0 : index
    %c0_435 = arith.constant 0 : index
    %668 = vector.load %arg3[%c7, %c0_434, %c0_435] : memref<8x8x8xf32, #tpu.memory_space<vmem>>, vector<1x8x8xf32>
    %669 = vector.shape_cast %668 : vector<1x8x8xf32> to vector<8x8xf32>
    %c0_436 = arith.constant 0 : index
    %c0_437 = arith.constant 0 : index
    %c0_438 = arith.constant 0 : index
    %670 = vector.load %arg17[%c0_436, %c0_437, %c0_438] : memref<2x8x32xf32, #tpu.memory_space<vmem>>, vector<1x8x32xf32>
    %671 = vector.shape_cast %670 : vector<1x8x32xf32> to vector<8x32xf32>
    %c0_439 = arith.constant 0 : index
    %c0_440 = arith.constant 0 : index
    %c0_441 = arith.constant 0 : index
    %672 = vector.load %arg18[%c0_439, %c0_440, %c0_441] : memref<2x8x32xf32, #tpu.memory_space<vmem>>, vector<1x8x32xf32>
    %673 = vector.shape_cast %672 : vector<1x8x32xf32> to vector<8x32xf32>
    %674 = arith.truncf %669 : vector<8x8xf32> to vector<8x8xbf16>
    %c0_442 = arith.constant 0 : index
    %c0_443 = arith.constant 0 : index
    %675 = vector.load %arg4[%c0_442, %c0_443] : memref<8x128xbf16, #tpu.memory_space<vmem>>, vector<8x128xbf16>
    %cst_444 = arith.constant dense<0.000000e+00> : vector<8x128xf32>
    %676 = tpu.matmul %674, %675, %cst_444 {dimension_numbers = #tpu.dot_dimension_numbers<[1], [0], [0], [1], [0, 0, 1, 1], [], []>} : vector<8x8xbf16>, vector<8x128xbf16>, vector<8x128xf32> -> vector<8x128xf32>
    %677 = arith.truncf %671 : vector<8x32xf32> to vector<8x32xbf16>
    %c0_445 = arith.constant 0 : index
    %c0_446 = arith.constant 0 : index
    %678 = vector.load %arg5[%c0_445, %c0_446] : memref<32x128xbf16, #tpu.memory_space<vmem>>, vector<32x128xbf16>
    %cst_447 = arith.constant dense<0.000000e+00> : vector<8x128xf32>
    %679 = tpu.matmul %677, %678, %cst_447 {dimension_numbers = #tpu.dot_dimension_numbers<[1], [0], [0], [1], [0, 0, 1, 1], [], []>} : vector<8x32xbf16>, vector<32x128xbf16>, vector<8x128xf32> -> vector<8x128xf32>
    %680 = arith.addf %676, %679 : vector<8x128xf32>
    %c0_448 = arith.constant 0 : index
    %c0_449 = arith.constant 0 : index
    %681 = vector.load %arg6[%c0_448, %c0_449] : memref<1x128xf32, #tpu.memory_space<vmem>>, vector<1x128xf32>
    %682 = vector.broadcast %681 : vector<1x128xf32> to vector<8x128xf32>
    %683 = arith.addf %680, %682 : vector<8x128xf32>
    %684 = arith.negf %683 : vector<8x128xf32>
    %685 = math.exp %684 : vector<8x128xf32>
    %cst_450 = arith.constant 1.000000e+00 : f32
    %686 = vector.broadcast %cst_450 : f32 to vector<8x128xf32>
    %687 = arith.addf %686, %685 : vector<8x128xf32>
    %688 = arith.divf %686, %687 : vector<8x128xf32>
    %689 = vector.extract_strided_slice %688 {offsets = [0, 0], sizes = [8, 32], strides = [1, 1]} : vector<8x128xf32> to vector<8x32xf32>
    %690 = vector.extract_strided_slice %688 {offsets = [0, 32], sizes = [8, 32], strides = [1, 1]} : vector<8x128xf32> to vector<8x32xf32>
    %691 = vector.extract_strided_slice %688 {offsets = [0, 64], sizes = [8, 32], strides = [1, 1]} : vector<8x128xf32> to vector<8x32xf32>
    %cst_451 = arith.constant 2.000000e+00 : f32
    %692 = vector.broadcast %cst_451 : f32 to vector<8x32xf32>
    %693 = arith.mulf %692, %691 : vector<8x32xf32>
    %cst_452 = arith.constant 1.000000e+00 : f32
    %694 = vector.broadcast %cst_452 : f32 to vector<8x32xf32>
    %695 = arith.subf %693, %694 : vector<8x32xf32>
    %696 = vector.extract_strided_slice %688 {offsets = [0, 96], sizes = [8, 32], strides = [1, 1]} : vector<8x128xf32> to vector<8x32xf32>
    %697 = arith.mulf %690, %673 : vector<8x32xf32>
    %698 = arith.mulf %689, %695 : vector<8x32xf32>
    %699 = arith.addf %697, %698 : vector<8x32xf32>
    %700 = math.tanh %699 : vector<8x32xf32>
    %701 = arith.mulf %696, %700 : vector<8x32xf32>
    %c0_453 = arith.constant 0 : index
    %c0_454 = arith.constant 0 : index
    %c0_455 = arith.constant 0 : index
    %702 = vector.load %arg17[%c0_453, %c0_454, %c0_455] : memref<2x8x32xf32, #tpu.memory_space<vmem>>, vector<1x8x32xf32>
    %703 = vector.shape_cast %702 : vector<1x8x32xf32> to vector<8x32xf32>
    %704 = vector.shape_cast %701 : vector<8x32xf32> to vector<1x8x32xf32>
    tpu.vector_store %arg17[%c0_453, %c0_454, %c0_455], %704 {strides = array<i32>} : memref<2x8x32xf32, #tpu.memory_space<vmem>>, vector<1x8x32xf32>,
    %c0_456 = arith.constant 0 : index
    %c0_457 = arith.constant 0 : index
    %c0_458 = arith.constant 0 : index
    %705 = vector.load %arg18[%c0_456, %c0_457, %c0_458] : memref<2x8x32xf32, #tpu.memory_space<vmem>>, vector<1x8x32xf32>
    %706 = vector.shape_cast %705 : vector<1x8x32xf32> to vector<8x32xf32>
    %707 = vector.shape_cast %699 : vector<8x32xf32> to vector<1x8x32xf32>
    tpu.vector_store %arg18[%c0_456, %c0_457, %c0_458], %707 {strides = array<i32>} : memref<2x8x32xf32, #tpu.memory_space<vmem>>, vector<1x8x32xf32>,
    %c1_459 = arith.constant 1 : index
    %c0_460 = arith.constant 0 : index
    %c0_461 = arith.constant 0 : index
    %708 = vector.load %arg17[%c1_459, %c0_460, %c0_461] : memref<2x8x32xf32, #tpu.memory_space<vmem>>, vector<1x8x32xf32>
    %709 = vector.shape_cast %708 : vector<1x8x32xf32> to vector<8x32xf32>
    %c1_462 = arith.constant 1 : index
    %c0_463 = arith.constant 0 : index
    %c0_464 = arith.constant 0 : index
    %710 = vector.load %arg18[%c1_462, %c0_463, %c0_464] : memref<2x8x32xf32, #tpu.memory_space<vmem>>, vector<1x8x32xf32>
    %711 = vector.shape_cast %710 : vector<1x8x32xf32> to vector<8x32xf32>
    %712 = arith.truncf %701 : vector<8x32xf32> to vector<8x32xbf16>
    %c0_465 = arith.constant 0 : index
    %c0_466 = arith.constant 0 : index
    %713 = vector.load %arg7[%c0_465, %c0_466] : memref<32x128xbf16, #tpu.memory_space<vmem>>, vector<32x128xbf16>
    %cst_467 = arith.constant dense<0.000000e+00> : vector<8x128xf32>
    %714 = tpu.matmul %712, %713, %cst_467 {dimension_numbers = #tpu.dot_dimension_numbers<[1], [0], [0], [1], [0, 0, 1, 1], [], []>} : vector<8x32xbf16>, vector<32x128xbf16>, vector<8x128xf32> -> vector<8x128xf32>
    %715 = arith.truncf %709 : vector<8x32xf32> to vector<8x32xbf16>
    %c0_468 = arith.constant 0 : index
    %c0_469 = arith.constant 0 : index
    %716 = vector.load %arg8[%c0_468, %c0_469] : memref<32x128xbf16, #tpu.memory_space<vmem>>, vector<32x128xbf16>
    %cst_470 = arith.constant dense<0.000000e+00> : vector<8x128xf32>
    %717 = tpu.matmul %715, %716, %cst_470 {dimension_numbers = #tpu.dot_dimension_numbers<[1], [0], [0], [1], [0, 0, 1, 1], [], []>} : vector<8x32xbf16>, vector<32x128xbf16>, vector<8x128xf32> -> vector<8x128xf32>
    %718 = arith.addf %714, %717 : vector<8x128xf32>
    %c0_471 = arith.constant 0 : index
    %c0_472 = arith.constant 0 : index
    %719 = vector.load %arg9[%c0_471, %c0_472] : memref<1x128xf32, #tpu.memory_space<vmem>>, vector<1x128xf32>
    %720 = vector.broadcast %719 : vector<1x128xf32> to vector<8x128xf32>
    %721 = arith.addf %718, %720 : vector<8x128xf32>
    %722 = arith.negf %721 : vector<8x128xf32>
    %723 = math.exp %722 : vector<8x128xf32>
    %cst_473 = arith.constant 1.000000e+00 : f32
    %724 = vector.broadcast %cst_473 : f32 to vector<8x128xf32>
    %725 = arith.addf %724, %723 : vector<8x128xf32>
    %726 = arith.divf %724, %725 : vector<8x128xf32>
    %727 = vector.extract_strided_slice %726 {offsets = [0, 0], sizes = [8, 32], strides = [1, 1]} : vector<8x128xf32> to vector<8x32xf32>
    %728 = vector.extract_strided_slice %726 {offsets = [0, 32], sizes = [8, 32], strides = [1, 1]} : vector<8x128xf32> to vector<8x32xf32>
    %729 = vector.extract_strided_slice %726 {offsets = [0, 64], sizes = [8, 32], strides = [1, 1]} : vector<8x128xf32> to vector<8x32xf32>
    %cst_474 = arith.constant 2.000000e+00 : f32
    %730 = vector.broadcast %cst_474 : f32 to vector<8x32xf32>
    %731 = arith.mulf %730, %729 : vector<8x32xf32>
    %cst_475 = arith.constant 1.000000e+00 : f32
    %732 = vector.broadcast %cst_475 : f32 to vector<8x32xf32>
    %733 = arith.subf %731, %732 : vector<8x32xf32>
    %734 = vector.extract_strided_slice %726 {offsets = [0, 96], sizes = [8, 32], strides = [1, 1]} : vector<8x128xf32> to vector<8x32xf32>
    %735 = arith.mulf %728, %711 : vector<8x32xf32>
    %736 = arith.mulf %727, %733 : vector<8x32xf32>
    %737 = arith.addf %735, %736 : vector<8x32xf32>
    %738 = math.tanh %737 : vector<8x32xf32>
    %739 = arith.mulf %734, %738 : vector<8x32xf32>
    %c1_476 = arith.constant 1 : index
    %c0_477 = arith.constant 0 : index
    %c0_478 = arith.constant 0 : index
    %740 = vector.load %arg17[%c1_476, %c0_477, %c0_478] : memref<2x8x32xf32, #tpu.memory_space<vmem>>, vector<1x8x32xf32>
    %741 = vector.shape_cast %740 : vector<1x8x32xf32> to vector<8x32xf32>
    %742 = vector.shape_cast %739 : vector<8x32xf32> to vector<1x8x32xf32>
    tpu.vector_store %arg17[%c1_476, %c0_477, %c0_478], %742 {strides = array<i32>} : memref<2x8x32xf32, #tpu.memory_space<vmem>>, vector<1x8x32xf32>,
    %c1_479 = arith.constant 1 : index
    %c0_480 = arith.constant 0 : index
    %c0_481 = arith.constant 0 : index
    %743 = vector.load %arg18[%c1_479, %c0_480, %c0_481] : memref<2x8x32xf32, #tpu.memory_space<vmem>>, vector<1x8x32xf32>
    %744 = vector.shape_cast %743 : vector<1x8x32xf32> to vector<8x32xf32>
    %745 = vector.shape_cast %737 : vector<8x32xf32> to vector<1x8x32xf32>
    tpu.vector_store %arg18[%c1_479, %c0_480, %c0_481], %745 {strides = array<i32>} : memref<2x8x32xf32, #tpu.memory_space<vmem>>, vector<1x8x32xf32>,
    %746 = arith.truncf %739 : vector<8x32xf32> to vector<8x32xbf16>
    %c0_482 = arith.constant 0 : index
    %c0_483 = arith.constant 0 : index
    %747 = vector.load %arg10[%c0_482, %c0_483] : memref<32x32xbf16, #tpu.memory_space<vmem>>, vector<32x32xbf16>
    %cst_484 = arith.constant dense<0.000000e+00> : vector<8x32xf32>
    %748 = tpu.matmul %746, %747, %cst_484 {dimension_numbers = #tpu.dot_dimension_numbers<[1], [0], [0], [1], [0, 0, 1, 1], [], []>} : vector<8x32xbf16>, vector<32x32xbf16>, vector<8x32xf32> -> vector<8x32xf32>
    %749 = math.tanh %748 : vector<8x32xf32>
    %750 = arith.truncf %749 : vector<8x32xf32> to vector<8x32xbf16>
    %c0_485 = arith.constant 0 : index
    %c0_486 = arith.constant 0 : index
    %751 = vector.load %arg11[%c0_485, %c0_486] : memref<32x16xbf16, #tpu.memory_space<vmem>>, vector<32x16xbf16>
    %cst_487 = arith.constant dense<0.000000e+00> : vector<8x16xf32>
    %752 = tpu.matmul %750, %751, %cst_487 {dimension_numbers = #tpu.dot_dimension_numbers<[1], [0], [0], [1], [0, 0, 1, 1], [], []>} : vector<8x32xbf16>, vector<32x16xbf16>, vector<8x16xf32> -> vector<8x16xf32>
    %753 = math.tanh %752 : vector<8x16xf32>
    %754 = arith.truncf %753 : vector<8x16xf32> to vector<8x16xbf16>
    %c0_488 = arith.constant 0 : index
    %c0_489 = arith.constant 0 : index
    %755 = vector.load %arg12[%c0_488, %c0_489] : memref<16x8xbf16, #tpu.memory_space<vmem>>, vector<16x8xbf16>
    %cst_490 = arith.constant dense<0.000000e+00> : vector<8x8xf32>
    %756 = tpu.matmul %754, %755, %cst_490 {dimension_numbers = #tpu.dot_dimension_numbers<[1], [0], [0], [1], [0, 0, 1, 1], [], []>} : vector<8x16xbf16>, vector<16x8xbf16>, vector<8x8xf32> -> vector<8x8xf32>
    %c0_491 = arith.constant 0 : index
    %c0_492 = arith.constant 0 : index
    %757 = vector.load %arg13[%c0_491, %c0_492] : memref<1x8xf32, #tpu.memory_space<vmem>>, vector<1x8xf32>
    %758 = vector.broadcast %757 : vector<1x8xf32> to vector<8x8xf32>
    %759 = arith.addf %756, %758 : vector<8x8xf32>
    %c7_493 = arith.constant 7 : index
    %c0_494 = arith.constant 0 : index
    %c0_495 = arith.constant 0 : index
    %760 = vector.load %arg14[%c7_493, %c0_494, %c0_495] : memref<8x8x8xf32, #tpu.memory_space<vmem>>, vector<1x8x8xf32>
    %761 = vector.shape_cast %760 : vector<1x8x8xf32> to vector<8x8xf32>
    %762 = vector.shape_cast %759 : vector<8x8xf32> to vector<1x8x8xf32>
    tpu.vector_store %arg14[%c7_493, %c0_494, %c0_495], %762 {strides = array<i32>} : memref<8x8x8xf32, #tpu.memory_space<vmem>>, vector<1x8x8xf32>,
    %c0_i32_496 = arith.constant 0 : i32
    %763 = arith.cmpi eq, %arg0, %c0_i32_496 : i32
    %764 = arith.extui %763 : i1 to i32
    %c0_i32_497 = arith.constant 0 : i32
    %765 = arith.cmpi ne, %764, %c0_i32_497 : i32
    scf.if %765 {
      %c0_498 = arith.constant 0 : index
      %c0_499 = arith.constant 0 : index
      %c0_500 = arith.constant 0 : index
      %766 = vector.load %arg17[%c0_498, %c0_499, %c0_500] : memref<2x8x32xf32, #tpu.memory_space<vmem>>, vector<2x8x32xf32>
      %c0_501 = arith.constant 0 : index
      %c0_502 = arith.constant 0 : index
      %c0_503 = arith.constant 0 : index
      %767 = vector.load %arg15[%c0_501, %c0_502, %c0_503] : memref<2x8x32xf32, #tpu.memory_space<vmem>>, vector<2x8x32xf32>
      tpu.vector_store %arg15[%c0_501, %c0_502, %c0_503], %766 {strides = array<i32>} : memref<2x8x32xf32, #tpu.memory_space<vmem>>, vector<2x8x32xf32>,
      %c0_504 = arith.constant 0 : index
      %c0_505 = arith.constant 0 : index
      %c0_506 = arith.constant 0 : index
      %768 = vector.load %arg18[%c0_504, %c0_505, %c0_506] : memref<2x8x32xf32, #tpu.memory_space<vmem>>, vector<2x8x32xf32>
      %c0_507 = arith.constant 0 : index
      %c0_508 = arith.constant 0 : index
      %c0_509 = arith.constant 0 : index
      %769 = vector.load %arg16[%c0_507, %c0_508, %c0_509] : memref<2x8x32xf32, #tpu.memory_space<vmem>>, vector<2x8x32xf32>
      tpu.vector_store %arg16[%c0_507, %c0_508, %c0_509], %768 {strides = array<i32>} : memref<2x8x32xf32, #tpu.memory_space<vmem>>, vector<2x8x32xf32>,
    } else {
    }
    return
  }
  func.func @transform_0(%arg0: i32) -> (i32, i32, i32) {
    %c0_i32 = arith.constant 0 : i32
    %c0_i32_0 = arith.constant 0 : i32
    %c0_i32_1 = arith.constant 0 : i32
    %c0_i32_2 = arith.constant 0 : i32
    return %c0_i32, %c0_i32_0, %c0_i32_1 : i32, i32, i32
  }
  func.func @transform_1(%arg0: i32) -> (i32, i32, i32) {
    %c0_i32 = arith.constant 0 : i32
    %c0_i32_0 = arith.constant 0 : i32
    %c0_i32_1 = arith.constant 0 : i32
    %c0_i32_2 = arith.constant 0 : i32
    return %c0_i32, %c0_i32_0, %c0_i32_1 : i32, i32, i32
  }
  func.func @transform_2(%arg0: i32) -> (i32, i32, i32) {
    %c0_i32 = arith.constant 0 : i32
    %c0_i32_0 = arith.constant 0 : i32
    %c0_i32_1 = arith.constant 0 : i32
    return %arg0, %c0_i32, %c0_i32_0 : i32, i32, i32
  }
  func.func @transform_3(%arg0: i32) -> (i32, i32) {
    %c0_i32 = arith.constant 0 : i32
    %c0_i32_0 = arith.constant 0 : i32
    %c0_i32_1 = arith.constant 0 : i32
    return %c0_i32, %c0_i32_0 : i32, i32
  }
  func.func @transform_4(%arg0: i32) -> (i32, i32) {
    %c0_i32 = arith.constant 0 : i32
    %c0_i32_0 = arith.constant 0 : i32
    %c0_i32_1 = arith.constant 0 : i32
    return %c0_i32, %c0_i32_0 : i32, i32
  }
  func.func @transform_5(%arg0: i32) -> (i32, i32) {
    %c0_i32 = arith.constant 0 : i32
    %c0_i32_0 = arith.constant 0 : i32
    %c0_i32_1 = arith.constant 0 : i32
    return %c0_i32, %c0_i32_0 : i32, i32
  }
  func.func @transform_6(%arg0: i32) -> (i32, i32) {
    %c0_i32 = arith.constant 0 : i32
    %c0_i32_0 = arith.constant 0 : i32
    %c0_i32_1 = arith.constant 0 : i32
    return %c0_i32, %c0_i32_0 : i32, i32
  }
  func.func @transform_7(%arg0: i32) -> (i32, i32) {
    %c0_i32 = arith.constant 0 : i32
    %c0_i32_0 = arith.constant 0 : i32
    %c0_i32_1 = arith.constant 0 : i32
    return %c0_i32, %c0_i32_0 : i32, i32
  }
  func.func @transform_8(%arg0: i32) -> (i32, i32) {
    %c0_i32 = arith.constant 0 : i32
    %c0_i32_0 = arith.constant 0 : i32
    %c0_i32_1 = arith.constant 0 : i32
    return %c0_i32, %c0_i32_0 : i32, i32
  }
  func.func @transform_9(%arg0: i32) -> (i32, i32) {
    %c0_i32 = arith.constant 0 : i32
    %c0_i32_0 = arith.constant 0 : i32
    %c0_i32_1 = arith.constant 0 : i32
    return %c0_i32, %c0_i32_0 : i32, i32
  }
  func.func @transform_10(%arg0: i32) -> (i32, i32) {
    %c0_i32 = arith.constant 0 : i32
    %c0_i32_0 = arith.constant 0 : i32
    %c0_i32_1 = arith.constant 0 : i32
    return %c0_i32, %c0_i32_0 : i32, i32
  }
  func.func @transform_11(%arg0: i32) -> (i32, i32) {
    %c0_i32 = arith.constant 0 : i32
    %c0_i32_0 = arith.constant 0 : i32
    %c0_i32_1 = arith.constant 0 : i32
    return %c0_i32, %c0_i32_0 : i32, i32
  }
  func.func @transform_12(%arg0: i32) -> (i32, i32) {
    %c0_i32 = arith.constant 0 : i32
    %c0_i32_0 = arith.constant 0 : i32
    %c0_i32_1 = arith.constant 0 : i32
    return %c0_i32, %c0_i32_0 : i32, i32
  }
  func.func @transform_13(%arg0: i32) -> (i32, i32, i32) {
    %c0_i32 = arith.constant 0 : i32
    %c0_i32_0 = arith.constant 0 : i32
    %c0_i32_1 = arith.constant 0 : i32
    return %arg0, %c0_i32, %c0_i32_0 : i32, i32, i32
  }
  func.func @transform_14(%arg0: i32) -> (i32, i32, i32) {
    %c0_i32 = arith.constant 0 : i32
    %c0_i32_0 = arith.constant 0 : i32
    %c0_i32_1 = arith.constant 0 : i32
    %c0_i32_2 = arith.constant 0 : i32
    return %c0_i32, %c0_i32_0, %c0_i32_1 : i32, i32, i32
  }
  func.func @transform_15(%arg0: i32) -> (i32, i32, i32) {
    %c0_i32 = arith.constant 0 : i32
    %c0_i32_0 = arith.constant 0 : i32
    %c0_i32_1 = arith.constant 0 : i32
    %c0_i32_2 = arith.constant 0 : i32
    return %c0_i32, %c0_i32_0, %c0_i32_1 : i32, i32, i32
  }
}

</mosaic_0001>

<llo_original>
// kernel: fclstm_forward_seq.1
$region0: #{fclstm_forward_seq.1}
  #allocation0 [shape = 'u32[]', space=smem, size = 0x4, offset = 0x4, fixed_abs, tag = 'smem constant byte address 0x4 - core index']
  #allocation1 [shape = 'u32[144,128]{1,0:T(1,128)}', space=vmem, size = 0x12000, scoped, tag = 'internal scratch']
  #allocation2 [shape = 'f32[2,8,32]{2,1,0:T(8,128)}', space=vmem, size = 0x2000, scoped, tag = 'scratch operand']
  #allocation3 [shape = 'f32[2,8,32]{2,1,0:T(8,128)}', space=vmem, size = 0x2000, scoped, tag = 'scratch operand']
  %s0 = inlined_call_operand.vmem [shape: f32[2,8,32], index: 0, kind: input, shape index: {}]
  %s1 = inlined_call_operand.vmem [shape: f32[2,8,32], index: 1, kind: input, shape index: {}]
  %s2 = inlined_call_operand.vmem [shape: f32[8,8,8], index: 2, kind: input, shape index: {}]
  %s3 = inlined_call_operand.vmem [shape: bf16[8,128], index: 3, kind: input, shape index: {}]
  %s4 = inlined_call_operand.vmem [shape: bf16[32,128], index: 4, kind: input, shape index: {}]
  %s5 = inlined_call_operand.vmem [shape: f32[1,128], index: 5, kind: input, shape index: {}]
  %s6 = inlined_call_operand.vmem [shape: bf16[32,128], index: 6, kind: input, shape index: {}]
  %s7 = inlined_call_operand.vmem [shape: bf16[32,128], index: 7, kind: input, shape index: {}]
  %s8 = inlined_call_operand.vmem [shape: f32[1,128], index: 8, kind: input, shape index: {}]
  %s9 = inlined_call_operand.vmem [shape: bf16[32,32], index: 9, kind: input, shape index: {}]
  %s10 = inlined_call_operand.vmem [shape: bf16[32,16], index: 10, kind: input, shape index: {}]
  %s11 = inlined_call_operand.vmem [shape: bf16[16,8], index: 11, kind: input, shape index: {}]
  %s12 = inlined_call_operand.vmem [shape: f32[1,8], index: 12, kind: input, shape index: {}]
  %s13 = inlined_call_operand.hbm [shape: f32[8,8,8], index: 13, kind: output, shape index: {0}]
  %s14 = inlined_call_operand.hbm [shape: f32[2,8,32], index: 14, kind: output, shape index: {1}]
  %s15 = inlined_call_operand.hbm [shape: f32[2,8,32], index: 15, kind: output, shape index: {2}]
  %16 = xla_tuple %s13, %s14, %s15
  %s17 = sld [smem:[#allocation0]]
  $region86: #{fclstm_forward_seq.1} parent=0
    _
  %s19 = ssub.s32 1, %s17
  %s20 = scalar_select 0, %s19, %s17
  $region1: #{fclstm_forward_seq.1} parent=0
    #allocation4 [shape = 'u8[32768]{0}', space=vmem, size = 0x8000, scoped, tag = 'output window, operand 0, single buffered']
    #allocation5 [shape = 's32[1]{0}', space=sflag, size = 0x4, scoped, tag = 'scoped memory for fclstm_forward_seq.1']
    #allocation6 [shape = 'u8[8192]{0}', space=vmem, size = 0x2000, scoped, tag = 'output window, operand 1, single buffered']
    #allocation7 [shape = 's32[1]{0}', space=sflag, size = 0x4, scoped, tag = 'scoped memory for fclstm_forward_seq.1']
    #allocation8 [shape = 'u8[8192]{0}', space=vmem, size = 0x2000, scoped, tag = 'output window, operand 2, single buffered']
    %21 = vsyncpa [#allocation5], 0
    %22 = vsyncpa [#allocation7], 0
    // Predicated region
    $region2: #{fclstm_forward_seq.1} parent=1 // pred_check
      _
    $region3: #{fclstm_forward_seq.1} parent=1 // pred_check_branch
      %24 = sbr.rel (0) target = $region5
    $region4: #{fclstm_forward_seq.1} parent=1 // pred_region
      _
    $region5: #{fclstm_forward_seq.1} parent=1 // pred_fallthru
      _
    // Predicated region
    $region6: #{fclstm_forward_seq.1} parent=1 // pred_check
      _
    $region7: #{fclstm_forward_seq.1} parent=1 // pred_check_branch
      %26 = sbr.rel (0) target = $region9
    $region8: #{fclstm_forward_seq.1} parent=1 // pred_region
      _
    $region9: #{fclstm_forward_seq.1} parent=1 // pred_fallthru
      _
    // Predicated region
    $region10: #{fclstm_forward_seq.1} parent=1 // pred_check
      _
    $region11: #{fclstm_forward_seq.1} parent=1 // pred_check_branch
      %28 = sbr.rel (0) target = $region13
    $region12: #{fclstm_forward_seq.1} parent=1 // pred_region
      _
    $region13: #{fclstm_forward_seq.1} parent=1 // pred_fallthru
      _
    // Predicated region
    $region14: #{fclstm_forward_seq.1} parent=1 // pred_check
      _
    $region15: #{fclstm_forward_seq.1} parent=1 // pred_check_branch
      %30 = sbr.rel (0) target = $region17
    $region16: #{fclstm_forward_seq.1} parent=1 // pred_region
      _
    $region17: #{fclstm_forward_seq.1} parent=1 // pred_fallthru
      _
    // Predicated region
    $region18: #{fclstm_forward_seq.1} parent=1 // pred_check
      _
    $region19: #{fclstm_forward_seq.1} parent=1 // pred_check_branch
      %32 = sbr.rel (0) target = $region21
    $region20: #{fclstm_forward_seq.1} parent=1 // pred_region
      _
    $region21: #{fclstm_forward_seq.1} parent=1 // pred_fallthru
      _
    // Predicated region
    $region22: #{fclstm_forward_seq.1} parent=1 // pred_check
      _
    $region23: #{fclstm_forward_seq.1} parent=1 // pred_check_branch
      %34 = sbr.rel (0) target = $region25
    $region24: #{fclstm_forward_seq.1} parent=1 // pred_region
      _
    $region25: #{fclstm_forward_seq.1} parent=1 // pred_fallthru
      _
    // Predicated region
    $region26: #{fclstm_forward_seq.1} parent=1 // pred_check
      _
    $region27: #{fclstm_forward_seq.1} parent=1 // pred_check_branch
      %36 = sbr.rel (0) target = $region29
    $region28: #{fclstm_forward_seq.1} parent=1 // pred_region
      _
    $region29: #{fclstm_forward_seq.1} parent=1 // pred_fallthru
      _
    // Predicated region
    $region30: #{fclstm_forward_seq.1} parent=1 // pred_check
      _
    $region31: #{fclstm_forward_seq.1} parent=1 // pred_check_branch
      %38 = sbr.rel (0) target = $region33
    $region32: #{fclstm_forward_seq.1} parent=1 // pred_region
      _
    $region33: #{fclstm_forward_seq.1} parent=1 // pred_fallthru
      _
    // Predicated region
    $region34: #{fclstm_forward_seq.1} parent=1 // pred_check
      _
    $region35: #{fclstm_forward_seq.1} parent=1 // pred_check_branch
      %40 = sbr.rel (0) target = $region37
    $region36: #{fclstm_forward_seq.1} parent=1 // pred_region
      _
    $region37: #{fclstm_forward_seq.1} parent=1 // pred_fallthru
      _
    // Predicated region
    $region38: #{fclstm_forward_seq.1} parent=1 // pred_check
      _
    $region39: #{fclstm_forward_seq.1} parent=1 // pred_check_branch
      %42 = sbr.rel (0) target = $region41
    $region40: #{fclstm_forward_seq.1} parent=1 // pred_region
      _
    $region41: #{fclstm_forward_seq.1} parent=1 // pred_fallthru
      _
    // Predicated region
    $region42: #{fclstm_forward_seq.1} parent=1 // pred_check
      _
    $region43: #{fclstm_forward_seq.1} parent=1 // pred_check_branch
      %44 = sbr.rel (0) target = $region45
    $region44: #{fclstm_forward_seq.1} parent=1 // pred_region
      _
    $region45: #{fclstm_forward_seq.1} parent=1 // pred_fallthru
      _
    // Predicated region
    $region46: #{fclstm_forward_seq.1} parent=1 // pred_check
      _
    $region47: #{fclstm_forward_seq.1} parent=1 // pred_check_branch
      %46 = sbr.rel (0) target = $region49
    $region48: #{fclstm_forward_seq.1} parent=1 // pred_region
      _
    $region49: #{fclstm_forward_seq.1} parent=1 // pred_fallthru
      _
    // Predicated region
    $region50: #{fclstm_forward_seq.1} parent=1 // pred_check
      _
    $region51: #{fclstm_forward_seq.1} parent=1 // pred_check_branch
      %48 = sbr.rel (0) target = $region53
    $region52: #{fclstm_forward_seq.1} parent=1 // pred_region
      _
    $region53: #{fclstm_forward_seq.1} parent=1 // pred_fallthru
      _
    %p50 = scmp.eq.s32.totalorder 0, 0
    // Predicated region
    $region54: #{fclstm_forward_seq.1} parent=1 // pred_check
      %p51 = pneg %p50
    $region55: #{fclstm_forward_seq.1} parent=1 // pred_check_branch
      %53 = sbr.rel (%p51) target = $region57
    $region56: #{fclstm_forward_seq.1} parent=1 // pred_region
      %v54 = vld [vmem:[%s0] sm:$0xff]
      %v55 = vld [vmem:[%s0 + $0x8] sm:$0xff]
      %vm56 = vcmask 261120
      %57 = vst.msk [vmem:[#allocation2] sm:$0xff] %vm56, %v54
      %58 = vst.msk [vmem:[#allocation2 + $0x8] sm:$0xff] %vm56, %v55
      %v59 = vld [vmem:[%s1] sm:$0xff]
      %v60 = vld [vmem:[%s1 + $0x8] sm:$0xff]
      %61 = vst.msk [vmem:[#allocation3] sm:$0xff] %vm56, %v59
      %62 = vst.msk [vmem:[#allocation3 + $0x8] sm:$0xff] %vm56, %v60
    $region57: #{fclstm_forward_seq.1} parent=1 // pred_fallthru
      _
    %v63 = vld [vmem:[%s2] sm:$0xff]
    %v64 = vld [vmem:[#allocation2] sm:$0xff]
    %v65 = vld [vmem:[#allocation3] sm:$0xff]
    %v66 = vpack.c.bf16 %v63, %v63
    %v67 = vld [vmem:[%s3] sm:$0xf]
    %v68 = vpack.c.bf16 %v64, %v64
    %v69 = vld [vmem:[%s4] sm:$0xf]
    %v70 = vld [vmem:[%s4 + $0x4] sm:$0xf]
    %v71 = vld [vmem:[%s4 + $0x8] sm:$0xf]
    %v72 = vld [vmem:[%s4 + $0xc] sm:$0xf]
    %v77 = vunpack.c.l.b16 %v69
    %v78 = vunpack.c.l.b16 %v70
    %v79 = vunpack.c.l.b16 %v71
    %v80 = vunpack.c.l.b16 %v72
    %v81 = vpack.c.b16 %v78, %v77
    %v82 = vpack.c.b16 %v80, %v79
    %vm85 = vcmask 261120
    %v87 = vsel %vm85, %v68, 0
    %89 = vmatprep.subr.bf16.mxu0 0
    %90 = vmatpush1.bf16.msra.mxu0 %v81
    %91 = vmatprep.subr.bf16.mxu0 0
    %92 = vmatpush1.bf16.msra.mxu0 %v82
    %93 = vmatprep.subr.bf16.mxu0 0
    %94 = vmatpush1.bf16.msra.mxu0 0
    %95 = vmatprep.subr.bf16.mxu0 0
    %96 = vmatpush1.bf16.msra.mxu0 0
    %97 = vmatprep.subr.bf16.mxu0 0
    %98 = vmatpush1.bf16.msra.mxu0 0
    %99 = vmatprep.subr.bf16.mxu0 0
    %100 = vmatpush1.bf16.msra.mxu0 0
    %101 = vmatprep.subr.bf16.mxu0 0
    %102 = vmatpush1.bf16.msra.mxu0 0
    %103 = vmatprep.subr.bf16.mxu0 0
    %104 = vmatpush1.bf16.msra.mxu0 0
    %105 = vmatprep.subr.bf16.mxu0 0
    %106 = vmatpush1.bf16.msra.mxu0 0
    %107 = vmatprep.subr.bf16.mxu0 0
    %108 = vmatpush1.bf16.msra.mxu0 0
    %109 = vmatprep.subr.bf16.mxu0 0
    %110 = vmatpush1.bf16.msra.mxu0 0
    %111 = vmatprep.subr.bf16.mxu0 0
    %112 = vmatpush1.bf16.msra.mxu0 0
    %113 = vmatprep.subr.bf16.mxu0 0
    %114 = vmatpush1.bf16.msra.mxu0 0
    %115 = vmatprep.subr.bf16.mxu0 0
    %116 = vmatpush1.bf16.msra.mxu0 0
    %117 = vmatprep.subr.bf16.mxu0 0
    %118 = vmatpush1.bf16.msra.mxu0 0
    %119 = vmatprep.subr.bf16.mxu0 0
    %120 = vmatpush1.bf16.msra.mxu0 0
    %121 = vmatprep.mubr.bf16.mxu0 0
    %122 = vmatmul.mubr.bf16.gmra.mrb[0].mxu0 %v87
    %v123 = vpop.f32.mrb[0].mxu0
    %v124 = vadd.f32 0.0, %v123
    %v125 = vpop.f32.mrb[0].mxu0
    %v126 = vpop.f32.mrb[0].mxu0
    %v127 = vpop.f32.mrb[0].mxu0
    %128 = vdwg.mxu0
    %vm129 = vcmask 64512
    %v131 = vsel %vm129, %v66, 0
    %vm133 = vcmask 1043456
    %v135 = vsel %vm133, %v67, 0
    %137 = vmatprep.subr.bf16.mxu0 0
    %138 = vmatpush1.bf16.msra.mxu0 %v135
    %139 = vmatprep.subr.bf16.mxu0 0
    %140 = vmatpush1.bf16.msra.mxu0 0
    %141 = vmatprep.subr.bf16.mxu0 0
    %142 = vmatpush1.bf16.msra.mxu0 0
    %143 = vmatprep.subr.bf16.mxu0 0
    %144 = vmatpush1.bf16.msra.mxu0 0
    %145 = vmatprep.subr.bf16.mxu0 0
    %146 = vmatpush1.bf16.msra.mxu0 0
    %147 = vmatprep.subr.bf16.mxu0 0
    %148 = vmatpush1.bf16.msra.mxu0 0
    %149 = vmatprep.subr.bf16.mxu0 0
    %150 = vmatpush1.bf16.msra.mxu0 0
    %151 = vmatprep.subr.bf16.mxu0 0
    %152 = vmatpush1.bf16.msra.mxu0 0
    %153 = vmatprep.subr.bf16.mxu0 0
    %154 = vmatpush1.bf16.msra.mxu0 0
    %155 = vmatprep.subr.bf16.mxu0 0
    %156 = vmatpush1.bf16.msra.mxu0 0
    %157 = vmatprep.subr.bf16.mxu0 0
    %158 = vmatpush1.bf16.msra.mxu0 0
    %159 = vmatprep.subr.bf16.mxu0 0
    %160 = vmatpush1.bf16.msra.mxu0 0
    %161 = vmatprep.subr.bf16.mxu0 0
    %162 = vmatpush1.bf16.msra.mxu0 0
    %163 = vmatprep.subr.bf16.mxu0 0
    %164 = vmatpush1.bf16.msra.mxu0 0
    %165 = vmatprep.subr.bf16.mxu0 0
    %166 = vmatpush1.bf16.msra.mxu0 0
    %167 = vmatprep.subr.bf16.mxu0 0
    %168 = vmatpush1.bf16.msra.mxu0 0
    %169 = vmatprep.mubr.bf16.mxu0 0
    %170 = vmatmul.mubr.bf16.gmra.mrb[0].mxu0 %v131
    %v171 = vpop.f32.mrb[0].mxu0
    %v172 = vadd.f32 %v124, %v171
    %v173 = vpop.f32.mrb[0].mxu0
    %v174 = vpop.f32.mrb[0].mxu0
    %v175 = vpop.f32.mrb[0].mxu0
    %176 = vdwg.mxu0
    %v177 = vld [vmem:[%s5] sm:$0x1]
    %v179 = vlaneseq
    %v180 = vshrl.u32 %v179, 7
    %v181 = vsub.s32 0, %v180
    %v182 = vrot.slane %v177, %v181
    %v184 = vadd.f32 %v172, %v182
    %v185 = vxor.u32 %v184, 2147483648
    %v186 = vmul.f32 %v185, 1.442695
    %v187 = vpow.pop %v186
    %v188 = vadd.f32 %v187, 1.0
    %v189 = vrcp.pop %v188
    %v190 = vmul.f32 1.0, %v189
    %v191 = vmul.f32 %v190, 2.0
    %v192 = vsub.f32 %v191, 1.0
    %194 = vrot.lane.b32.xlu0 %v65, 32
    %v195 = vpop.permute.xlu0 %194
    %v197 = vmul.f32 %v190, %v195
    %199 = vrot.lane.b32.xlu0 %v192, 64
    %v200 = vpop.permute.xlu0 %199
    %v202 = vmul.f32 %v190, %v200
    %204 = vrot.lane.b32.xlu0 %v202, 32
    %v205 = vpop.permute.xlu0 %204
    %v207 = vadd.f32 %v197, %v205
    %v208 = vtanh.pop %v207
    %210 = vrot.lane.b32.xlu0 %v208, 64
    %v211 = vpop.permute.xlu0 %210
    %v213 = vmul.f32 %v190, %v211
    %215 = vrot.lane.b32.xlu0 %v213, 32
    %v216 = vpop.permute.xlu0 %215
    %218 = vst.msk [vmem:[#allocation2] sm:$0xff] %vm85, %v216
    %220 = vrot.lane.b32.xlu0 %v207, 96
    %v221 = vpop.permute.xlu0 %220
    %223 = vst.msk [vmem:[#allocation3] sm:$0xff] %vm85, %v221
    %s224 = scalar_lea.vmem [#allocation2], 8
    %v225 = vld [vmem:[%s224] sm:$0xff]
    %s226 = scalar_lea.vmem [#allocation3], 8
    %v227 = vld [vmem:[%s226] sm:$0xff]
    %v228 = vpack.c.bf16 %v213, %v213
    %v229 = vld [vmem:[%s6] sm:$0xf]
    %v230 = vld [vmem:[%s6 + $0x4] sm:$0xf]
    %v231 = vld [vmem:[%s6 + $0x8] sm:$0xf]
    %v232 = vld [vmem:[%s6 + $0xc] sm:$0xf]
    %v233 = vpack.c.bf16 %v225, %v225
    %v234 = vld [vmem:[%s7] sm:$0xf]
    %v235 = vld [vmem:[%s7 + $0x4] sm:$0xf]
    %v236 = vld [vmem:[%s7 + $0x8] sm:$0xf]
    %v237 = vld [vmem:[%s7 + $0xc] sm:$0xf]
    %v242 = vunpack.c.l.b16 %v234
    %v243 = vunpack.c.l.b16 %v235
    %v244 = vunpack.c.l.b16 %v236
    %v245 = vunpack.c.l.b16 %v237
    %v246 = vpack.c.b16 %v243, %v242
    %v247 = vpack.c.b16 %v245, %v244
    %v251 = vsel %vm85, %v233, 0
    %253 = vmatprep.subr.bf16.mxu0 0
    %254 = vmatpush1.bf16.msra.mxu0 %v246
    %255 = vmatprep.subr.bf16.mxu0 0
    %256 = vmatpush1.bf16.msra.mxu0 %v247
    %257 = vmatprep.subr.bf16.mxu0 0
    %258 = vmatpush1.bf16.msra.mxu0 0
    %259 = vmatprep.subr.bf16.mxu0 0
    %260 = vmatpush1.bf16.msra.mxu0 0
    %261 = vmatprep.subr.bf16.mxu0 0
    %262 = vmatpush1.bf16.msra.mxu0 0
    %263 = vmatprep.subr.bf16.mxu0 0
    %264 = vmatpush1.bf16.msra.mxu0 0
    %265 = vmatprep.subr.bf16.mxu0 0
    %266 = vmatpush1.bf16.msra.mxu0 0
    %267 = vmatprep.subr.bf16.mxu0 0
    %268 = vmatpush1.bf16.msra.mxu0 0
    %269 = vmatprep.subr.bf16.mxu0 0
    %270 = vmatpush1.bf16.msra.mxu0 0
    %271 = vmatprep.subr.bf16.mxu0 0
    %272 = vmatpush1.bf16.msra.mxu0 0
    %273 = vmatprep.subr.bf16.mxu0 0
    %274 = vmatpush1.bf16.msra.mxu0 0
    %275 = vmatprep.subr.bf16.mxu0 0
    %276 = vmatpush1.bf16.msra.mxu0 0
    %277 = vmatprep.subr.bf16.mxu0 0
    %278 = vmatpush1.bf16.msra.mxu0 0
    %279 = vmatprep.subr.bf16.mxu0 0
    %280 = vmatpush1.bf16.msra.mxu0 0
    %281 = vmatprep.subr.bf16.mxu0 0
    %282 = vmatpush1.bf16.msra.mxu0 0
    %283 = vmatprep.subr.bf16.mxu0 0
    %284 = vmatpush1.bf16.msra.mxu0 0
    %285 = vmatprep.mubr.bf16.mxu0 0
    %286 = vmatmul.mubr.bf16.gmra.mrb[0].mxu0 %v251
    %v287 = vpop.f32.mrb[0].mxu0
    %v288 = vadd.f32 0.0, %v287
    %v289 = vpop.f32.mrb[0].mxu0
    %v290 = vpop.f32.mrb[0].mxu0
    %v291 = vpop.f32.mrb[0].mxu0
    %292 = vdwg.mxu0
    %294 = vrot.lane.b32.xlu0 %v228, 32
    %v295 = vpop.permute.xlu0 %294
    %v300 = vunpack.c.l.b16 %v229
    %v301 = vunpack.c.l.b16 %v230
    %v302 = vunpack.c.l.b16 %v231
    %v303 = vunpack.c.l.b16 %v232
    %v304 = vpack.c.b16 %v301, %v300
    %v305 = vpack.c.b16 %v303, %v302
    %v309 = vsel %vm85, %v295, 0
    %311 = vmatprep.subr.bf16.mxu0 0
    %312 = vmatpush1.bf16.msra.mxu0 %v304
    %313 = vmatprep.subr.bf16.mxu0 0
    %314 = vmatpush1.bf16.msra.mxu0 %v305
    %315 = vmatprep.subr.bf16.mxu0 0
    %316 = vmatpush1.bf16.msra.mxu0 0
    %317 = vmatprep.subr.bf16.mxu0 0
    %318 = vmatpush1.bf16.msra.mxu0 0
    %319 = vmatprep.subr.bf16.mxu0 0
    %320 = vmatpush1.bf16.msra.mxu0 0
    %321 = vmatprep.subr.bf16.mxu0 0
    %322 = vmatpush1.bf16.msra.mxu0 0
    %323 = vmatprep.subr.bf16.mxu0 0
    %324 = vmatpush1.bf16.msra.mxu0 0
    %325 = vmatprep.subr.bf16.mxu0 0
    %326 = vmatpush1.bf16.msra.mxu0 0
    %327 = vmatprep.subr.bf16.mxu0 0
    %328 = vmatpush1.bf16.msra.mxu0 0
    %329 = vmatprep.subr.bf16.mxu0 0
    %330 = vmatpush1.bf16.msra.mxu0 0
    %331 = vmatprep.subr.bf16.mxu0 0
    %332 = vmatpush1.bf16.msra.mxu0 0
    %333 = vmatprep.subr.bf16.mxu0 0
    %334 = vmatpush1.bf16.msra.mxu0 0
    %335 = vmatprep.subr.bf16.mxu0 0
    %336 = vmatpush1.bf16.msra.mxu0 0
    %337 = vmatprep.subr.bf16.mxu0 0
    %338 = vmatpush1.bf16.msra.mxu0 0
    %339 = vmatprep.subr.bf16.mxu0 0
    %340 = vmatpush1.bf16.msra.mxu0 0
    %341 = vmatprep.subr.bf16.mxu0 0
    %342 = vmatpush1.bf16.msra.mxu0 0
    %343 = vmatprep.mubr.bf16.mxu0 0
    %344 = vmatmul.mubr.bf16.gmra.mrb[0].mxu0 %v309
    %v345 = vpop.f32.mrb[0].mxu0
    %v346 = vadd.f32 %v288, %v345
    %v347 = vpop.f32.mrb[0].mxu0
    %v348 = vpop.f32.mrb[0].mxu0
    %v349 = vpop.f32.mrb[0].mxu0
    %350 = vdwg.mxu0
    %v351 = vld [vmem:[%s8] sm:$0x1]
    %v353 = vlaneseq
    %v354 = vshrl.u32 %v353, 7
    %v355 = vsub.s32 0, %v354
    %v356 = vrot.slane %v351, %v355
    %v358 = vadd.f32 %v346, %v356
    %v359 = vxor.u32 %v358, 2147483648
    %v360 = vmul.f32 %v359, 1.442695
    %v361 = vpow.pop %v360
    %v362 = vadd.f32 %v361, 1.0
    %v363 = vrcp.pop %v362
    %v364 = vmul.f32 1.0, %v363
    %v365 = vmul.f32 %v364, 2.0
    %v366 = vsub.f32 %v365, 1.0
    %368 = vrot.lane.b32.xlu0 %v227, 32
    %v369 = vpop.permute.xlu0 %368
    %v371 = vmul.f32 %v364, %v369
    %373 = vrot.lane.b32.xlu0 %v366, 64
    %v374 = vpop.permute.xlu0 %373
    %v376 = vmul.f32 %v364, %v374
    %378 = vrot.lane.b32.xlu0 %v376, 32
    %v379 = vpop.permute.xlu0 %378
    %v381 = vadd.f32 %v371, %v379
    %v382 = vtanh.pop %v381
    %384 = vrot.lane.b32.xlu0 %v382, 64
    %v385 = vpop.permute.xlu0 %384
    %v387 = vmul.f32 %v364, %v385
    %389 = vrot.lane.b32.xlu0 %v387, 32
    %v390 = vpop.permute.xlu0 %389
    %392 = vst.msk [vmem:[%s224] sm:$0xff] %vm85, %v390
    %394 = vrot.lane.b32.xlu0 %v381, 96
    %v395 = vpop.permute.xlu0 %394
    %397 = vst.msk [vmem:[%s226] sm:$0xff] %vm85, %v395
    %v398 = vpack.c.bf16 %v387, %v387
    %v399 = vld [vmem:[%s9] sm:$0xf]
    %v400 = vld [vmem:[%s9 + $0x4] sm:$0xf]
    %v401 = vld [vmem:[%s9 + $0x8] sm:$0xf]
    %v402 = vld [vmem:[%s9 + $0xc] sm:$0xf]
    %404 = vrot.lane.b32.xlu0 %v398, 32
    %v405 = vpop.permute.xlu0 %404
    %v410 = vunpack.c.l.b16 %v399
    %v411 = vunpack.c.l.b16 %v400
    %v412 = vunpack.c.l.b16 %v401
    %v413 = vunpack.c.l.b16 %v402
    %v414 = vpack.c.b16 %v411, %v410
    %v415 = vpack.c.b16 %v413, %v412
    %v419 = vsel %vm85, %v405, 0
    %421 = vmatprep.subr.bf16.mxu0 0
    %422 = vmatpush1.bf16.msra.mxu0 %v414
    %423 = vmatprep.subr.bf16.mxu0 0
    %424 = vmatpush1.bf16.msra.mxu0 %v415
    %425 = vmatprep.subr.bf16.mxu0 0
    %426 = vmatpush1.bf16.msra.mxu0 0
    %427 = vmatprep.subr.bf16.mxu0 0
    %428 = vmatpush1.bf16.msra.mxu0 0
    %429 = vmatprep.subr.bf16.mxu0 0
    %430 = vmatpush1.bf16.msra.mxu0 0
    %431 = vmatprep.subr.bf16.mxu0 0
    %432 = vmatpush1.bf16.msra.mxu0 0
    %433 = vmatprep.subr.bf16.mxu0 0
    %434 = vmatpush1.bf16.msra.mxu0 0
    %435 = vmatprep.subr.bf16.mxu0 0
    %436 = vmatpush1.bf16.msra.mxu0 0
    %437 = vmatprep.subr.bf16.mxu0 0
    %438 = vmatpush1.bf16.msra.mxu0 0
    %439 = vmatprep.subr.bf16.mxu0 0
    %440 = vmatpush1.bf16.msra.mxu0 0
    %441 = vmatprep.subr.bf16.mxu0 0
    %442 = vmatpush1.bf16.msra.mxu0 0
    %443 = vmatprep.subr.bf16.mxu0 0
    %444 = vmatpush1.bf16.msra.mxu0 0
    %445 = vmatprep.subr.bf16.mxu0 0
    %446 = vmatpush1.bf16.msra.mxu0 0
    %447 = vmatprep.subr.bf16.mxu0 0
    %448 = vmatpush1.bf16.msra.mxu0 0
    %449 = vmatprep.subr.bf16.mxu0 0
    %450 = vmatpush1.bf16.msra.mxu0 0
    %451 = vmatprep.subr.bf16.mxu0 0
    %452 = vmatpush1.bf16.msra.mxu0 0
    %453 = vmatprep.mubr.bf16.mxu0 0
    %454 = vmatmul.mubr.bf16.gmra.mrb[0].mxu0 %v419
    %v455 = vpop.f32.mrb[0].mxu0
    %v456 = vadd.f32 0.0, %v455
    %v457 = vpop.f32.mrb[0].mxu0
    %v458 = vpop.f32.mrb[0].mxu0
    %v459 = vpop.f32.mrb[0].mxu0
    %460 = vdwg.mxu0
    %v461 = vtanh.pop %v456
    %v462 = vpack.c.bf16 %v461, %v461
    %v463 = vld [vmem:[%s10] sm:$0xf]
    %v464 = vld [vmem:[%s10 + $0x4] sm:$0xf]
    %v465 = vld [vmem:[%s10 + $0x8] sm:$0xf]
    %v466 = vld [vmem:[%s10 + $0xc] sm:$0xf]
    %v471 = vunpack.c.l.b16 %v463
    %v472 = vunpack.c.l.b16 %v464
    %v473 = vunpack.c.l.b16 %v465
    %v474 = vunpack.c.l.b16 %v466
    %v475 = vpack.c.b16 %v472, %v471
    %v476 = vpack.c.b16 %v474, %v473
    %v480 = vsel %vm85, %v462, 0
    %482 = vmatprep.subr.bf16.mxu0 0
    %483 = vmatpush1.bf16.msra.mxu0 %v475
    %484 = vmatprep.subr.bf16.mxu0 0
    %485 = vmatpush1.bf16.msra.mxu0 %v476
    %486 = vmatprep.subr.bf16.mxu0 0
    %487 = vmatpush1.bf16.msra.mxu0 0
    %488 = vmatprep.subr.bf16.mxu0 0
    %489 = vmatpush1.bf16.msra.mxu0 0
    %490 = vmatprep.subr.bf16.mxu0 0
    %491 = vmatpush1.bf16.msra.mxu0 0
    %492 = vmatprep.subr.bf16.mxu0 0
    %493 = vmatpush1.bf16.msra.mxu0 0
    %494 = vmatprep.subr.bf16.mxu0 0
    %495 = vmatpush1.bf16.msra.mxu0 0
    %496 = vmatprep.subr.bf16.mxu0 0
    %497 = vmatpush1.bf16.msra.mxu0 0
    %498 = vmatprep.subr.bf16.mxu0 0
    %499 = vmatpush1.bf16.msra.mxu0 0
    %500 = vmatprep.subr.bf16.mxu0 0
    %501 = vmatpush1.bf16.msra.mxu0 0
    %502 = vmatprep.subr.bf16.mxu0 0
    %503 = vmatpush1.bf16.msra.mxu0 0
    %504 = vmatprep.subr.bf16.mxu0 0
    %505 = vmatpush1.bf16.msra.mxu0 0
    %506 = vmatprep.subr.bf16.mxu0 0
    %507 = vmatpush1.bf16.msra.mxu0 0
    %508 = vmatprep.subr.bf16.mxu0 0
    %509 = vmatpush1.bf16.msra.mxu0 0
    %510 = vmatprep.subr.bf16.mxu0 0
    %511 = vmatpush1.bf16.msra.mxu0 0
    %512 = vmatprep.subr.bf16.mxu0 0
    %513 = vmatpush1.bf16.msra.mxu0 0
    %514 = vmatprep.mubr.bf16.mxu0 0
    %515 = vmatmul.mubr.bf16.gmra.mrb[0].mxu0 %v480
    %v516 = vpop.f32.mrb[0].mxu0
    %v517 = vadd.f32 0.0, %v516
    %v518 = vpop.f32.mrb[0].mxu0
    %v519 = vpop.f32.mrb[0].mxu0
    %v520 = vpop.f32.mrb[0].mxu0
    %521 = vdwg.mxu0
    %v522 = vtanh.pop %v517
    %v523 = vpack.c.bf16 %v522, %v522
    %v524 = vld [vmem:[%s11] sm:$0xf]
    %v525 = vld [vmem:[%s11 + $0x4] sm:$0xf]
    %v526 = vld [vmem:[%s12] sm:$0x1]
    %v528 = vlaneseq
    %v529 = vshrl.u32 %v528, 7
    %v530 = vsub.s32 0, %v529
    %v531 = vrot.slane %v526, %v530
    %v535 = vunpack.c.l.b16 %v524
    %v536 = vunpack.c.l.b16 %v525
    %v537 = vpack.c.b16 %v536, %v535
    %vm539 = vcmask 130048
    %v541 = vsel %vm539, %v523, 0
    %543 = vmatprep.subr.bf16.mxu0 0
    %544 = vmatpush1.bf16.msra.mxu0 %v537
    %545 = vmatprep.subr.bf16.mxu0 0
    %546 = vmatpush1.bf16.msra.mxu0 0
    %547 = vmatprep.subr.bf16.mxu0 0
    %548 = vmatpush1.bf16.msra.mxu0 0
    %549 = vmatprep.subr.bf16.mxu0 0
    %550 = vmatpush1.bf16.msra.mxu0 0
    %551 = vmatprep.subr.bf16.mxu0 0
    %552 = vmatpush1.bf16.msra.mxu0 0
    %553 = vmatprep.subr.bf16.mxu0 0
    %554 = vmatpush1.bf16.msra.mxu0 0
    %555 = vmatprep.subr.bf16.mxu0 0
    %556 = vmatpush1.bf16.msra.mxu0 0
    %557 = vmatprep.subr.bf16.mxu0 0
    %558 = vmatpush1.bf16.msra.mxu0 0
    %559 = vmatprep.subr.bf16.mxu0 0
    %560 = vmatpush1.bf16.msra.mxu0 0
    %561 = vmatprep.subr.bf16.mxu0 0
    %562 = vmatpush1.bf16.msra.mxu0 0
    %563 = vmatprep.subr.bf16.mxu0 0
    %564 = vmatpush1.bf16.msra.mxu0 0
    %565 = vmatprep.subr.bf16.mxu0 0
    %566 = vmatpush1.bf16.msra.mxu0 0
    %567 = vmatprep.subr.bf16.mxu0 0
    %568 = vmatpush1.bf16.msra.mxu0 0
    %569 = vmatprep.subr.bf16.mxu0 0
    %570 = vmatpush1.bf16.msra.mxu0 0
    %571 = vmatprep.subr.bf16.mxu0 0
    %572 = vmatpush1.bf16.msra.mxu0 0
    %573 = vmatprep.subr.bf16.mxu0 0
    %574 = vmatpush1.bf16.msra.mxu0 0
    %575 = vmatprep.mubr.bf16.mxu0 0
    %576 = vmatmul.mubr.bf16.gmra.mrb[0].mxu0 %v541
    %v577 = vpop.f32.mrb[0].mxu0
    %v578 = vadd.f32 %v531, %v577
    %v579 = vpop.f32.mrb[0].mxu0
    %v580 = vpop.f32.mrb[0].mxu0
    %v581 = vpop.f32.mrb[0].mxu0
    %582 = vdwg.mxu0
    %583 = vst.msk [vmem:[#allocation4] sm:$0xff] %vm129, %v578
    %s584 = scalar_lea.vmem %s2, 8
    %v585 = vld [vmem:[%s584] sm:$0xff]
    %v586 = vld [vmem:[#allocation2] sm:$0xff]
    %v587 = vld [vmem:[#allocation3] sm:$0xff]
    %v588 = vpack.c.bf16 %v585, %v585
    %v589 = vld [vmem:[%s3] sm:$0xf]
    %v590 = vpack.c.bf16 %v586, %v586
    %v591 = vld [vmem:[%s4] sm:$0xf]
    %v592 = vld [vmem:[%s4 + $0x4] sm:$0xf]
    %v593 = vld [vmem:[%s4 + $0x8] sm:$0xf]
    %v594 = vld [vmem:[%s4 + $0xc] sm:$0xf]
    %v599 = vunpack.c.l.b16 %v591
    %v600 = vunpack.c.l.b16 %v592
    %v601 = vunpack.c.l.b16 %v593
    %v602 = vunpack.c.l.b16 %v594
    %v603 = vpack.c.b16 %v600, %v599
    %v604 = vpack.c.b16 %v602, %v601
    %v608 = vsel %vm85, %v590, 0
    %610 = vmatprep.subr.bf16.mxu0 0
    %611 = vmatpush1.bf16.msra.mxu0 %v603
    %612 = vmatprep.subr.bf16.mxu0 0
    %613 = vmatpush1.bf16.msra.mxu0 %v604
    %614 = vmatprep.subr.bf16.mxu0 0
    %615 = vmatpush1.bf16.msra.mxu0 0
    %616 = vmatprep.subr.bf16.mxu0 0
    %617 = vmatpush1.bf16.msra.mxu0 0
    %618 = vmatprep.subr.bf16.mxu0 0
    %619 = vmatpush1.bf16.msra.mxu0 0
    %620 = vmatprep.subr.bf16.mxu0 0
    %621 = vmatpush1.bf16.msra.mxu0 0
    %622 = vmatprep.subr.bf16.mxu0 0
    %623 = vmatpush1.bf16.msra.mxu0 0
    %624 = vmatprep.subr.bf16.mxu0 0
    %625 = vmatpush1.bf16.msra.mxu0 0
    %626 = vmatprep.subr.bf16.mxu0 0
    %627 = vmatpush1.bf16.msra.mxu0 0
    %628 = vmatprep.subr.bf16.mxu0 0
    %629 = vmatpush1.bf16.msra.mxu0 0
    %630 = vmatprep.subr.bf16.mxu0 0
    %631 = vmatpush1.bf16.msra.mxu0 0
    %632 = vmatprep.subr.bf16.mxu0 0
    %633 = vmatpush1.bf16.msra.mxu0 0
    %634 = vmatprep.subr.bf16.mxu0 0
    %635 = vmatpush1.bf16.msra.mxu0 0
    %636 = vmatprep.subr.bf16.mxu0 0
    %637 = vmatpush1.bf16.msra.mxu0 0
    %638 = vmatprep.subr.bf16.mxu0 0
    %639 = vmatpush1.bf16.msra.mxu0 0
    %640 = vmatprep.subr.bf16.mxu0 0
    %641 = vmatpush1.bf16.msra.mxu0 0
    %642 = vmatprep.mubr.bf16.mxu0 0
    %643 = vmatmul.mubr.bf16.gmra.mrb[0].mxu0 %v608
    %v644 = vpop.f32.mrb[0].mxu0
    %v645 = vadd.f32 0.0, %v644
    %v646 = vpop.f32.mrb[0].mxu0
    %v647 = vpop.f32.mrb[0].mxu0
    %v648 = vpop.f32.mrb[0].mxu0
    %649 = vdwg.mxu0
    %v651 = vsel %vm129, %v588, 0
    %v654 = vsel %vm133, %v589, 0
    %656 = vmatprep.subr.bf16.mxu0 0
    %657 = vmatpush1.bf16.msra.mxu0 %v654
    %658 = vmatprep.subr.bf16.mxu0 0
    %659 = vmatpush1.bf16.msra.mxu0 0
    %660 = vmatprep.subr.bf16.mxu0 0
    %661 = vmatpush1.bf16.msra.mxu0 0
    %662 = vmatprep.subr.bf16.mxu0 0
    %663 = vmatpush1.bf16.msra.mxu0 0
    %664 = vmatprep.subr.bf16.mxu0 0
    %665 = vmatpush1.bf16.msra.mxu0 0
    %666 = vmatprep.subr.bf16.mxu0 0
    %667 = vmatpush1.bf16.msra.mxu0 0
    %668 = vmatprep.subr.bf16.mxu0 0
    %669 = vmatpush1.bf16.msra.mxu0 0
    %670 = vmatprep.subr.bf16.mxu0 0
    %671 = vmatpush1.bf16.msra.mxu0 0
    %672 = vmatprep.subr.bf16.mxu0 0
    %673 = vmatpush1.bf16.msra.mxu0 0
    %674 = vmatprep.subr.bf16.mxu0 0
    %675 = vmatpush1.bf16.msra.mxu0 0
    %676 = vmatprep.subr.bf16.mxu0 0
    %677 = vmatpush1.bf16.msra.mxu0 0
    %678 = vmatprep.subr.bf16.mxu0 0
    %679 = vmatpush1.bf16.msra.mxu0 0
    %680 = vmatprep.subr.bf16.mxu0 0
    %681 = vmatpush1.bf16.msra.mxu0 0
    %682 = vmatprep.subr.bf16.mxu0 0
    %683 = vmatpush1.bf16.msra.mxu0 0
    %684 = vmatprep.subr.bf16.mxu0 0
    %685 = vmatpush1.bf16.msra.mxu0 0
    %686 = vmatprep.subr.bf16.mxu0 0
    %687 = vmatpush1.bf16.msra.mxu0 0
    %688 = vmatprep.mubr.bf16.mxu0 0
    %689 = vmatmul.mubr.bf16.gmra.mrb[0].mxu0 %v651
    %v690 = vpop.f32.mrb[0].mxu0
    %v691 = vadd.f32 %v645, %v690
    %v692 = vpop.f32.mrb[0].mxu0
    %v693 = vpop.f32.mrb[0].mxu0
    %v694 = vpop.f32.mrb[0].mxu0
    %695 = vdwg.mxu0
    %v696 = vld [vmem:[%s5] sm:$0x1]
    %v698 = vlaneseq
    %v699 = vshrl.u32 %v698, 7
    %v700 = vsub.s32 0, %v699
    %v701 = vrot.slane %v696, %v700
    %v703 = vadd.f32 %v691, %v701
    %v704 = vxor.u32 %v703, 2147483648
    %v705 = vmul.f32 %v704, 1.442695
    %v706 = vpow.pop %v705
    %v707 = vadd.f32 %v706, 1.0
    %v708 = vrcp.pop %v707
    %v709 = vmul.f32 1.0, %v708
    %v710 = vmul.f32 %v709, 2.0
    %v711 = vsub.f32 %v710, 1.0
    %713 = vrot.lane.b32.xlu0 %v587, 32
    %v714 = vpop.permute.xlu0 %713
    %v716 = vmul.f32 %v709, %v714
    %718 = vrot.lane.b32.xlu0 %v711, 64
    %v719 = vpop.permute.xlu0 %718
    %v721 = vmul.f32 %v709, %v719
    %723 = vrot.lane.b32.xlu0 %v721, 32
    %v724 = vpop.permute.xlu0 %723
    %v726 = vadd.f32 %v716, %v724
    %v727 = vtanh.pop %v726
    %729 = vrot.lane.b32.xlu0 %v727, 64
    %v730 = vpop.permute.xlu0 %729
    %v732 = vmul.f32 %v709, %v730
    %734 = vrot.lane.b32.xlu0 %v732, 32
    %v735 = vpop.permute.xlu0 %734
    %737 = vst.msk [vmem:[#allocation2] sm:$0xff] %vm85, %v735
    %739 = vrot.lane.b32.xlu0 %v726, 96
    %v740 = vpop.permute.xlu0 %739
    %742 = vst.msk [vmem:[#allocation3] sm:$0xff] %vm85, %v740
    %v743 = vld [vmem:[%s224] sm:$0xff]
    %v744 = vld [vmem:[%s226] sm:$0xff]
    %v745 = vpack.c.bf16 %v732, %v732
    %v746 = vld [vmem:[%s6] sm:$0xf]
    %v747 = vld [vmem:[%s6 + $0x4] sm:$0xf]
    %v748 = vld [vmem:[%s6 + $0x8] sm:$0xf]
    %v749 = vld [vmem:[%s6 + $0xc] sm:$0xf]
    %v750 = vpack.c.bf16 %v743, %v743
    %v751 = vld [vmem:[%s7] sm:$0xf]
    %v752 = vld [vmem:[%s7 + $0x4] sm:$0xf]
    %v753 = vld [vmem:[%s7 + $0x8] sm:$0xf]
    %v754 = vld [vmem:[%s7 + $0xc] sm:$0xf]
    %v759 = vunpack.c.l.b16 %v751
    %v760 = vunpack.c.l.b16 %v752
    %v761 = vunpack.c.l.b16 %v753
    %v762 = vunpack.c.l.b16 %v754
    %v763 = vpack.c.b16 %v760, %v759
    %v764 = vpack.c.b16 %v762, %v761
    %v768 = vsel %vm85, %v750, 0
    %770 = vmatprep.subr.bf16.mxu0 0
    %771 = vmatpush1.bf16.msra.mxu0 %v763
    %772 = vmatprep.subr.bf16.mxu0 0
    %773 = vmatpush1.bf16.msra.mxu0 %v764
    %774 = vmatprep.subr.bf16.mxu0 0
    %775 = vmatpush1.bf16.msra.mxu0 0
    %776 = vmatprep.subr.bf16.mxu0 0
    %777 = vmatpush1.bf16.msra.mxu0 0
    %778 = vmatprep.subr.bf16.mxu0 0
    %779 = vmatpush1.bf16.msra.mxu0 0
    %780 = vmatprep.subr.bf16.mxu0 0
    %781 = vmatpush1.bf16.msra.mxu0 0
    %782 = vmatprep.subr.bf16.mxu0 0
    %783 = vmatpush1.bf16.msra.mxu0 0
    %784 = vmatprep.subr.bf16.mxu0 0
    %785 = vmatpush1.bf16.msra.mxu0 0
    %786 = vmatprep.subr.bf16.mxu0 0
    %787 = vmatpush1.bf16.msra.mxu0 0
    %788 = vmatprep.subr.bf16.mxu0 0
    %789 = vmatpush1.bf16.msra.mxu0 0
    %790 = vmatprep.subr.bf16.mxu0 0
    %791 = vmatpush1.bf16.msra.mxu0 0
    %792 = vmatprep.subr.bf16.mxu0 0
    %793 = vmatpush1.bf16.msra.mxu0 0
    %794 = vmatprep.subr.bf16.mxu0 0
    %795 = vmatpush1.bf16.msra.mxu0 0
    %796 = vmatprep.subr.bf16.mxu0 0
    %797 = vmatpush1.bf16.msra.mxu0 0
    %798 = vmatprep.subr.bf16.mxu0 0
    %799 = vmatpush1.bf16.msra.mxu0 0
    %800 = vmatprep.subr.bf16.mxu0 0
    %801 = vmatpush1.bf16.msra.mxu0 0
    %802 = vmatprep.mubr.bf16.mxu0 0
    %803 = vmatmul.mubr.bf16.gmra.mrb[0].mxu0 %v768
    %v804 = vpop.f32.mrb[0].mxu0
    %v805 = vadd.f32 0.0, %v804
    %v806 = vpop.f32.mrb[0].mxu0
    %v807 = vpop.f32.mrb[0].mxu0
    %v808 = vpop.f32.mrb[0].mxu0
    %809 = vdwg.mxu0
    %811 = vrot.lane.b32.xlu0 %v745, 32
    %v812 = vpop.permute.xlu0 %811
    %v817 = vunpack.c.l.b16 %v746
    %v818 = vunpack.c.l.b16 %v747
    %v819 = vunpack.c.l.b16 %v748
    %v820 = vunpack.c.l.b16 %v749
    %v821 = vpack.c.b16 %v818, %v817
    %v822 = vpack.c.b16 %v820, %v819
    %v826 = vsel %vm85, %v812, 0
    %828 = vmatprep.subr.bf16.mxu0 0
    %829 = vmatpush1.bf16.msra.mxu0 %v821
    %830 = vmatprep.subr.bf16.mxu0 0
    %831 = vmatpush1.bf16.msra.mxu0 %v822
    %832 = vmatprep.subr.bf16.mxu0 0
    %833 = vmatpush1.bf16.msra.mxu0 0
    %834 = vmatprep.subr.bf16.mxu0 0
    %835 = vmatpush1.bf16.msra.mxu0 0
    %836 = vmatprep.subr.bf16.mxu0 0
    %837 = vmatpush1.bf16.msra.mxu0 0
    %838 = vmatprep.subr.bf16.mxu0 0
    %839 = vmatpush1.bf16.msra.mxu0 0
    %840 = vmatprep.subr.bf16.mxu0 0
    %841 = vmatpush1.bf16.msra.mxu0 0
    %842 = vmatprep.subr.bf16.mxu0 0
    %843 = vmatpush1.bf16.msra.mxu0 0
    %844 = vmatprep.subr.bf16.mxu0 0
    %845 = vmatpush1.bf16.msra.mxu0 0
    %846 = vmatprep.subr.bf16.mxu0 0
    %847 = vmatpush1.bf16.msra.mxu0 0
    %848 = vmatprep.subr.bf16.mxu0 0
    %849 = vmatpush1.bf16.msra.mxu0 0
    %850 = vmatprep.subr.bf16.mxu0 0
    %851 = vmatpush1.bf16.msra.mxu0 0
    %852 = vmatprep.subr.bf16.mxu0 0
    %853 = vmatpush1.bf16.msra.mxu0 0
    %854 = vmatprep.subr.bf16.mxu0 0
    %855 = vmatpush1.bf16.msra.mxu0 0
    %856 = vmatprep.subr.bf16.mxu0 0
    %857 = vmatpush1.bf16.msra.mxu0 0
    %858 = vmatprep.subr.bf16.mxu0 0
    %859 = vmatpush1.bf16.msra.mxu0 0
    %860 = vmatprep.mubr.bf16.mxu0 0
    %861 = vmatmul.mubr.bf16.gmra.mrb[0].mxu0 %v826
    %v862 = vpop.f32.mrb[0].mxu0
    %v863 = vadd.f32 %v805, %v862
    %v864 = vpop.f32.mrb[0].mxu0
    %v865 = vpop.f32.mrb[0].mxu0
    %v866 = vpop.f32.mrb[0].mxu0
    %867 = vdwg.mxu0
    %v868 = vld [vmem:[%s8] sm:$0x1]
    %v870 = vlaneseq
    %v871 = vshrl.u32 %v870, 7
    %v872 = vsub.s32 0, %v871
    %v873 = vrot.slane %v868, %v872
    %v875 = vadd.f32 %v863, %v873
    %v876 = vxor.u32 %v875, 2147483648
    %v877 = vmul.f32 %v876, 1.442695
    %v878 = vpow.pop %v877
    %v879 = vadd.f32 %v878, 1.0
    %v880 = vrcp.pop %v879
    %v881 = vmul.f32 1.0, %v880
    %v882 = vmul.f32 %v881, 2.0
    %v883 = vsub.f32 %v882, 1.0
    %885 = vrot.lane.b32.xlu0 %v744, 32
    %v886 = vpop.permute.xlu0 %885
    %v888 = vmul.f32 %v881, %v886
    %890 = vrot.lane.b32.xlu0 %v883, 64
    %v891 = vpop.permute.xlu0 %890
    %v893 = vmul.f32 %v881, %v891
    %895 = vrot.lane.b32.xlu0 %v893, 32
    %v896 = vpop.permute.xlu0 %895
    %v898 = vadd.f32 %v888, %v896
    %v899 = vtanh.pop %v898
    %901 = vrot.lane.b32.xlu0 %v899, 64
    %v902 = vpop.permute.xlu0 %901
    %v904 = vmul.f32 %v881, %v902
    %906 = vrot.lane.b32.xlu0 %v904, 32
    %v907 = vpop.permute.xlu0 %906
    %909 = vst.msk [vmem:[%s224] sm:$0xff] %vm85, %v907
    %911 = vrot.lane.b32.xlu0 %v898, 96
    %v912 = vpop.permute.xlu0 %911
    %914 = vst.msk [vmem:[%s226] sm:$0xff] %vm85, %v912
    %v915 = vpack.c.bf16 %v904, %v904
    %v916 = vld [vmem:[%s9] sm:$0xf]
    %v917 = vld [vmem:[%s9 + $0x4] sm:$0xf]
    %v918 = vld [vmem:[%s9 + $0x8] sm:$0xf]
    %v919 = vld [vmem:[%s9 + $0xc] sm:$0xf]
    %921 = vrot.lane.b32.xlu0 %v915, 32
    %v922 = vpop.permute.xlu0 %921
    %v927 = vunpack.c.l.b16 %v916
    %v928 = vunpack.c.l.b16 %v917
    %v929 = vunpack.c.l.b16 %v918
    %v930 = vunpack.c.l.b16 %v919
    %v931 = vpack.c.b16 %v928, %v927
    %v932 = vpack.c.b16 %v930, %v929
    %v936 = vsel %vm85, %v922, 0
    %938 = vmatprep.subr.bf16.mxu0 0
    %939 = vmatpush1.bf16.msra.mxu0 %v931
    %940 = vmatprep.subr.bf16.mxu0 0
    %941 = vmatpush1.bf16.msra.mxu0 %v932
    %942 = vmatprep.subr.bf16.mxu0 0
    %943 = vmatpush1.bf16.msra.mxu0 0
    %944 = vmatprep.subr.bf16.mxu0 0
    %945 = vmatpush1.bf16.msra.mxu0 0
    %946 = vmatprep.subr.bf16.mxu0 0
    %947 = vmatpush1.bf16.msra.mxu0 0
    %948 = vmatprep.subr.bf16.mxu0 0
    %949 = vmatpush1.bf16.msra.mxu0 0
    %950 = vmatprep.subr.bf16.mxu0 0
    %951 = vmatpush1.bf16.msra.mxu0 0
    %952 = vmatprep.subr.bf16.mxu0 0
    %953 = vmatpush1.bf16.msra.mxu0 0
    %954 = vmatprep.subr.bf16.mxu0 0
    %955 = vmatpush1.bf16.msra.mxu0 0
    %956 = vmatprep.subr.bf16.mxu0 0
    %957 = vmatpush1.bf16.msra.mxu0 0
    %958 = vmatprep.subr.bf16.mxu0 0
    %959 = vmatpush1.bf16.msra.mxu0 0
    %960 = vmatprep.subr.bf16.mxu0 0
    %961 = vmatpush1.bf16.msra.mxu0 0
    %962 = vmatprep.subr.bf16.mxu0 0
    %963 = vmatpush1.bf16.msra.mxu0 0
    %964 = vmatprep.subr.bf16.mxu0 0
    %965 = vmatpush1.bf16.msra.mxu0 0
    %966 = vmatprep.subr.bf16.mxu0 0
    %967 = vmatpush1.bf16.msra.mxu0 0
    %968 = vmatprep.subr.bf16.mxu0 0
    %969 = vmatpush1.bf16.msra.mxu0 0
    %970 = vmatprep.mubr.bf16.mxu0 0
    %971 = vmatmul.mubr.bf16.gmra.mrb[0].mxu0 %v936
    %v972 = vpop.f32.mrb[0].mxu0
    %v973 = vadd.f32 0.0, %v972
    %v974 = vpop.f32.mrb[0].mxu0
    %v975 = vpop.f32.mrb[0].mxu0
    %v976 = vpop.f32.mrb[0].mxu0
    %977 = vdwg.mxu0
    %v978 = vtanh.pop %v973
    %v979 = vpack.c.bf16 %v978, %v978
    %v980 = vld [vmem:[%s10] sm:$0xf]
    %v981 = vld [vmem:[%s10 + $0x4] sm:$0xf]
    %v982 = vld [vmem:[%s10 + $0x8] sm:$0xf]
    %v983 = vld [vmem:[%s10 + $0xc] sm:$0xf]
    %v988 = vunpack.c.l.b16 %v980
    %v989 = vunpack.c.l.b16 %v981
    %v990 = vunpack.c.l.b16 %v982
    %v991 = vunpack.c.l.b16 %v983
    %v992 = vpack.c.b16 %v989, %v988
    %v993 = vpack.c.b16 %v991, %v990
    %v997 = vsel %vm85, %v979, 0
    %999 = vmatprep.subr.bf16.mxu0 0
    %1000 = vmatpush1.bf16.msra.mxu0 %v992
    %1001 = vmatprep.subr.bf16.mxu0 0
    %1002 = vmatpush1.bf16.msra.mxu0 %v993
    %1003 = vmatprep.subr.bf16.mxu0 0
    %1004 = vmatpush1.bf16.msra.mxu0 0
    %1005 = vmatprep.subr.bf16.mxu0 0
    %1006 = vmatpush1.bf16.msra.mxu0 0
    %1007 = vmatprep.subr.bf16.mxu0 0
    %1008 = vmatpush1.bf16.msra.mxu0 0
    %1009 = vmatprep.subr.bf16.mxu0 0
    %1010 = vmatpush1.bf16.msra.mxu0 0
    %1011 = vmatprep.subr.bf16.mxu0 0
    %1012 = vmatpush1.bf16.msra.mxu0 0
    %1013 = vmatprep.subr.bf16.mxu0 0
    %1014 = vmatpush1.bf16.msra.mxu0 0
    %1015 = vmatprep.subr.bf16.mxu0 0
    %1016 = vmatpush1.bf16.msra.mxu0 0
    %1017 = vmatprep.subr.bf16.mxu0 0
    %1018 = vmatpush1.bf16.msra.mxu0 0
    %1019 = vmatprep.subr.bf16.mxu0 0
    %1020 = vmatpush1.bf16.msra.mxu0 0
    %1021 = vmatprep.subr.bf16.mxu0 0
    %1022 = vmatpush1.bf16.msra.mxu0 0
    %1023 = vmatprep.subr.bf16.mxu0 0
    %1024 = vmatpush1.bf16.msra.mxu0 0
    %1025 = vmatprep.subr.bf16.mxu0 0
    %1026 = vmatpush1.bf16.msra.mxu0 0
    %1027 = vmatprep.subr.bf16.mxu0 0
    %1028 = vmatpush1.bf16.msra.mxu0 0
    %1029 = vmatprep.subr.bf16.mxu0 0
    %1030 = vmatpush1.bf16.msra.mxu0 0
    %1031 = vmatprep.mubr.bf16.mxu0 0
    %1032 = vmatmul.mubr.bf16.gmra.mrb[0].mxu0 %v997
    %v1033 = vpop.f32.mrb[0].mxu0
    %v1034 = vadd.f32 0.0, %v1033
    %v1035 = vpop.f32.mrb[0].mxu0
    %v1036 = vpop.f32.mrb[0].mxu0
    %v1037 = vpop.f32.mrb[0].mxu0
    %1038 = vdwg.mxu0
    %v1039 = vtanh.pop %v1034
    %v1040 = vpack.c.bf16 %v1039, %v1039
    %v1041 = vld [vmem:[%s11] sm:$0xf]
    %v1042 = vld [vmem:[%s11 + $0x4] sm:$0xf]
    %v1043 = vld [vmem:[%s12] sm:$0x1]
    %v1045 = vlaneseq
    %v1046 = vshrl.u32 %v1045, 7
    %v1047 = vsub.s32 0, %v1046
    %v1048 = vrot.slane %v1043, %v1047
    %v1052 = vunpack.c.l.b16 %v1041
    %v1053 = vunpack.c.l.b16 %v1042
    %v1054 = vpack.c.b16 %v1053, %v1052
    %v1057 = vsel %vm539, %v1040, 0
    %1059 = vmatprep.subr.bf16.mxu0 0
    %1060 = vmatpush1.bf16.msra.mxu0 %v1054
    %1061 = vmatprep.subr.bf16.mxu0 0
    %1062 = vmatpush1.bf16.msra.mxu0 0
    %1063 = vmatprep.subr.bf16.mxu0 0
    %1064 = vmatpush1.bf16.msra.mxu0 0
    %1065 = vmatprep.subr.bf16.mxu0 0
    %1066 = vmatpush1.bf16.msra.mxu0 0
    %1067 = vmatprep.subr.bf16.mxu0 0
    %1068 = vmatpush1.bf16.msra.mxu0 0
    %1069 = vmatprep.subr.bf16.mxu0 0
    %1070 = vmatpush1.bf16.msra.mxu0 0
    %1071 = vmatprep.subr.bf16.mxu0 0
    %1072 = vmatpush1.bf16.msra.mxu0 0
    %1073 = vmatprep.subr.bf16.mxu0 0
    %1074 = vmatpush1.bf16.msra.mxu0 0
    %1075 = vmatprep.subr.bf16.mxu0 0
    %1076 = vmatpush1.bf16.msra.mxu0 0
    %1077 = vmatprep.subr.bf16.mxu0 0
    %1078 = vmatpush1.bf16.msra.mxu0 0
    %1079 = vmatprep.subr.bf16.mxu0 0
    %1080 = vmatpush1.bf16.msra.mxu0 0
    %1081 = vmatprep.subr.bf16.mxu0 0
    %1082 = vmatpush1.bf16.msra.mxu0 0
    %1083 = vmatprep.subr.bf16.mxu0 0
    %1084 = vmatpush1.bf16.msra.mxu0 0
    %1085 = vmatprep.subr.bf16.mxu0 0
    %1086 = vmatpush1.bf16.msra.mxu0 0
    %1087 = vmatprep.subr.bf16.mxu0 0
    %1088 = vmatpush1.bf16.msra.mxu0 0
    %1089 = vmatprep.subr.bf16.mxu0 0
    %1090 = vmatpush1.bf16.msra.mxu0 0
    %1091 = vmatprep.mubr.bf16.mxu0 0
    %1092 = vmatmul.mubr.bf16.gmra.mrb[0].mxu0 %v1057
    %v1093 = vpop.f32.mrb[0].mxu0
    %v1094 = vadd.f32 %v1048, %v1093
    %v1095 = vpop.f32.mrb[0].mxu0
    %v1096 = vpop.f32.mrb[0].mxu0
    %v1097 = vpop.f32.mrb[0].mxu0
    %1098 = vdwg.mxu0
    %s1099 = scalar_lea.vmem [#allocation4], 8
    %1100 = vst.msk [vmem:[%s1099] sm:$0xff] %vm129, %v1094
    %s1101 = scalar_lea.vmem %s2, 16
    %v1102 = vld [vmem:[%s1101] sm:$0xff]
    %v1103 = vld [vmem:[#allocation2] sm:$0xff]
    %v1104 = vld [vmem:[#allocation3] sm:$0xff]
    %v1105 = vpack.c.bf16 %v1102, %v1102
    %v1106 = vld [vmem:[%s3] sm:$0xf]
    %v1107 = vpack.c.bf16 %v1103, %v1103
    %v1108 = vld [vmem:[%s4] sm:$0xf]
    %v1109 = vld [vmem:[%s4 + $0x4] sm:$0xf]
    %v1110 = vld [vmem:[%s4 + $0x8] sm:$0xf]
    %v1111 = vld [vmem:[%s4 + $0xc] sm:$0xf]
    %v1116 = vunpack.c.l.b16 %v1108
    %v1117 = vunpack.c.l.b16 %v1109
    %v1118 = vunpack.c.l.b16 %v1110
    %v1119 = vunpack.c.l.b16 %v1111
    %v1120 = vpack.c.b16 %v1117, %v1116
    %v1121 = vpack.c.b16 %v1119, %v1118
    %v1125 = vsel %vm85, %v1107, 0
    %1127 = vmatprep.subr.bf16.mxu0 0
    %1128 = vmatpush1.bf16.msra.mxu0 %v1120
    %1129 = vmatprep.subr.bf16.mxu0 0
    %1130 = vmatpush1.bf16.msra.mxu0 %v1121
    %1131 = vmatprep.subr.bf16.mxu0 0
    %1132 = vmatpush1.bf16.msra.mxu0 0
    %1133 = vmatprep.subr.bf16.mxu0 0
    %1134 = vmatpush1.bf16.msra.mxu0 0
    %1135 = vmatprep.subr.bf16.mxu0 0
    %1136 = vmatpush1.bf16.msra.mxu0 0
    %1137 = vmatprep.subr.bf16.mxu0 0
    %1138 = vmatpush1.bf16.msra.mxu0 0
    %1139 = vmatprep.subr.bf16.mxu0 0
    %1140 = vmatpush1.bf16.msra.mxu0 0
    %1141 = vmatprep.subr.bf16.mxu0 0
    %1142 = vmatpush1.bf16.msra.mxu0 0
    %1143 = vmatprep.subr.bf16.mxu0 0
    %1144 = vmatpush1.bf16.msra.mxu0 0
    %1145 = vmatprep.subr.bf16.mxu0 0
    %1146 = vmatpush1.bf16.msra.mxu0 0
    %1147 = vmatprep.subr.bf16.mxu0 0
    %1148 = vmatpush1.bf16.msra.mxu0 0
    %1149 = vmatprep.subr.bf16.mxu0 0
    %1150 = vmatpush1.bf16.msra.mxu0 0
    %1151 = vmatprep.subr.bf16.mxu0 0
    %1152 = vmatpush1.bf16.msra.mxu0 0
    %1153 = vmatprep.subr.bf16.mxu0 0
    %1154 = vmatpush1.bf16.msra.mxu0 0
    %1155 = vmatprep.subr.bf16.mxu0 0
    %1156 = vmatpush1.bf16.msra.mxu0 0
    %1157 = vmatprep.subr.bf16.mxu0 0
    %1158 = vmatpush1.bf16.msra.mxu0 0
    %1159 = vmatprep.mubr.bf16.mxu0 0
    %1160 = vmatmul.mubr.bf16.gmra.mrb[0].mxu0 %v1125
    %v1161 = vpop.f32.mrb[0].mxu0
    %v1162 = vadd.f32 0.0, %v1161
    %v1163 = vpop.f32.mrb[0].mxu0
    %v1164 = vpop.f32.mrb[0].mxu0
    %v1165 = vpop.f32.mrb[0].mxu0
    %1166 = vdwg.mxu0
    %v1168 = vsel %vm129, %v1105, 0
    %v1171 = vsel %vm133, %v1106, 0
    %1173 = vmatprep.subr.bf16.mxu0 0
    %1174 = vmatpush1.bf16.msra.mxu0 %v1171
    %1175 = vmatprep.subr.bf16.mxu0 0
    %1176 = vmatpush1.bf16.msra.mxu0 0
    %1177 = vmatprep.subr.bf16.mxu0 0
    %1178 = vmatpush1.bf16.msra.mxu0 0
    %1179 = vmatprep.subr.bf16.mxu0 0
    %1180 = vmatpush1.bf16.msra.mxu0 0
    %1181 = vmatprep.subr.bf16.mxu0 0
    %1182 = vmatpush1.bf16.msra.mxu0 0
    %1183 = vmatprep.subr.bf16.mxu0 0
    %1184 = vmatpush1.bf16.msra.mxu0 0
    %1185 = vmatprep.subr.bf16.mxu0 0
    %1186 = vmatpush1.bf16.msra.mxu0 0
    %1187 = vmatprep.subr.bf16.mxu0 0
    %1188 = vmatpush1.bf16.msra.mxu0 0
    %1189 = vmatprep.subr.bf16.mxu0 0
    %1190 = vmatpush1.bf16.msra.mxu0 0
    %1191 = vmatprep.subr.bf16.mxu0 0
    %1192 = vmatpush1.bf16.msra.mxu0 0
    %1193 = vmatprep.subr.bf16.mxu0 0
    %1194 = vmatpush1.bf16.msra.mxu0 0
    %1195 = vmatprep.subr.bf16.mxu0 0
    %1196 = vmatpush1.bf16.msra.mxu0 0
    %1197 = vmatprep.subr.bf16.mxu0 0
    %1198 = vmatpush1.bf16.msra.mxu0 0
    %1199 = vmatprep.subr.bf16.mxu0 0
    %1200 = vmatpush1.bf16.msra.mxu0 0
    %1201 = vmatprep.subr.bf16.mxu0 0
    %1202 = vmatpush1.bf16.msra.mxu0 0
    %1203 = vmatprep.subr.bf16.mxu0 0
    %1204 = vmatpush1.bf16.msra.mxu0 0
    %1205 = vmatprep.mubr.bf16.mxu0 0
    %1206 = vmatmul.mubr.bf16.gmra.mrb[0].mxu0 %v1168
    %v1207 = vpop.f32.mrb[0].mxu0
    %v1208 = vadd.f32 %v1162, %v1207
    %v1209 = vpop.f32.mrb[0].mxu0
    %v1210 = vpop.f32.mrb[0].mxu0
    %v1211 = vpop.f32.mrb[0].mxu0
    %1212 = vdwg.mxu0
    %v1213 = vld [vmem:[%s5] sm:$0x1]
    %v1215 = vlaneseq
    %v1216 = vshrl.u32 %v1215, 7
    %v1217 = vsub.s32 0, %v1216
    %v1218 = vrot.slane %v1213, %v1217
    %v1220 = vadd.f32 %v1208, %v1218
    %v1221 = vxor.u32 %v1220, 2147483648
    %v1222 = vmul.f32 %v1221, 1.442695
    %v1223 = vpow.pop %v1222
    %v1224 = vadd.f32 %v1223, 1.0
    %v1225 = vrcp.pop %v1224
    %v1226 = vmul.f32 1.0, %v1225
    %v1227 = vmul.f32 %v1226, 2.0
    %v1228 = vsub.f32 %v1227, 1.0
    %1230 = vrot.lane.b32.xlu0 %v1104, 32
    %v1231 = vpop.permute.xlu0 %1230
    %v1233 = vmul.f32 %v1226, %v1231
    %1235 = vrot.lane.b32.xlu0 %v1228, 64
    %v1236 = vpop.permute.xlu0 %1235
    %v1238 = vmul.f32 %v1226, %v1236
    %1240 = vrot.lane.b32.xlu0 %v1238, 32
    %v1241 = vpop.permute.xlu0 %1240
    %v1243 = vadd.f32 %v1233, %v1241
    %v1244 = vtanh.pop %v1243
    %1246 = vrot.lane.b32.xlu0 %v1244, 64
    %v1247 = vpop.permute.xlu0 %1246
    %v1249 = vmul.f32 %v1226, %v1247
    %1251 = vrot.lane.b32.xlu0 %v1249, 32
    %v1252 = vpop.permute.xlu0 %1251
    %1254 = vst.msk [vmem:[#allocation2] sm:$0xff] %vm85, %v1252
    %1256 = vrot.lane.b32.xlu0 %v1243, 96
    %v1257 = vpop.permute.xlu0 %1256
    %1259 = vst.msk [vmem:[#allocation3] sm:$0xff] %vm85, %v1257
    %v1260 = vld [vmem:[%s224] sm:$0xff]
    %v1261 = vld [vmem:[%s226] sm:$0xff]
    %v1262 = vpack.c.bf16 %v1249, %v1249
    %v1263 = vld [vmem:[%s6] sm:$0xf]
    %v1264 = vld [vmem:[%s6 + $0x4] sm:$0xf]
    %v1265 = vld [vmem:[%s6 + $0x8] sm:$0xf]
    %v1266 = vld [vmem:[%s6 + $0xc] sm:$0xf]
    %v1267 = vpack.c.bf16 %v1260, %v1260
    %v1268 = vld [vmem:[%s7] sm:$0xf]
    %v1269 = vld [vmem:[%s7 + $0x4] sm:$0xf]
    %v1270 = vld [vmem:[%s7 + $0x8] sm:$0xf]
    %v1271 = vld [vmem:[%s7 + $0xc] sm:$0xf]
    %v1276 = vunpack.c.l.b16 %v1268
    %v1277 = vunpack.c.l.b16 %v1269
    %v1278 = vunpack.c.l.b16 %v1270
    %v1279 = vunpack.c.l.b16 %v1271
    %v1280 = vpack.c.b16 %v1277, %v1276
    %v1281 = vpack.c.b16 %v1279, %v1278
    %v1285 = vsel %vm85, %v1267, 0
    %1287 = vmatprep.subr.bf16.mxu0 0
    %1288 = vmatpush1.bf16.msra.mxu0 %v1280
    %1289 = vmatprep.subr.bf16.mxu0 0
    %1290 = vmatpush1.bf16.msra.mxu0 %v1281
    %1291 = vmatprep.subr.bf16.mxu0 0
    %1292 = vmatpush1.bf16.msra.mxu0 0
    %1293 = vmatprep.subr.bf16.mxu0 0
    %1294 = vmatpush1.bf16.msra.mxu0 0
    %1295 = vmatprep.subr.bf16.mxu0 0
    %1296 = vmatpush1.bf16.msra.mxu0 0
    %1297 = vmatprep.subr.bf16.mxu0 0
    %1298 = vmatpush1.bf16.msra.mxu0 0
    %1299 = vmatprep.subr.bf16.mxu0 0
    %1300 = vmatpush1.bf16.msra.mxu0 0
    %1301 = vmatprep.subr.bf16.mxu0 0
    %1302 = vmatpush1.bf16.msra.mxu0 0
    %1303 = vmatprep.subr.bf16.mxu0 0
    %1304 = vmatpush1.bf16.msra.mxu0 0
    %1305 = vmatprep.subr.bf16.mxu0 0
    %1306 = vmatpush1.bf16.msra.mxu0 0
    %1307 = vmatprep.subr.bf16.mxu0 0
    %1308 = vmatpush1.bf16.msra.mxu0 0
    %1309 = vmatprep.subr.bf16.mxu0 0
    %1310 = vmatpush1.bf16.msra.mxu0 0
    %1311 = vmatprep.subr.bf16.mxu0 0
    %1312 = vmatpush1.bf16.msra.mxu0 0
    %1313 = vmatprep.subr.bf16.mxu0 0
    %1314 = vmatpush1.bf16.msra.mxu0 0
    %1315 = vmatprep.subr.bf16.mxu0 0
    %1316 = vmatpush1.bf16.msra.mxu0 0
    %1317 = vmatprep.subr.bf16.mxu0 0
    %1318 = vmatpush1.bf16.msra.mxu0 0
    %1319 = vmatprep.mubr.bf16.mxu0 0
    %1320 = vmatmul.mubr.bf16.gmra.mrb[0].mxu0 %v1285
    %v1321 = vpop.f32.mrb[0].mxu0
    %v1322 = vadd.f32 0.0, %v1321
    %v1323 = vpop.f32.mrb[0].mxu0
    %v1324 = vpop.f32.mrb[0].mxu0
    %v1325 = vpop.f32.mrb[0].mxu0
    %1326 = vdwg.mxu0
    %1328 = vrot.lane.b32.xlu0 %v1262, 32
    %v1329 = vpop.permute.xlu0 %1328
    %v1334 = vunpack.c.l.b16 %v1263
    %v1335 = vunpack.c.l.b16 %v1264
    %v1336 = vunpack.c.l.b16 %v1265
    %v1337 = vunpack.c.l.b16 %v1266
    %v1338 = vpack.c.b16 %v1335, %v1334
    %v1339 = vpack.c.b16 %v1337, %v1336
    %v1343 = vsel %vm85, %v1329, 0
    %1345 = vmatprep.subr.bf16.mxu0 0
    %1346 = vmatpush1.bf16.msra.mxu0 %v1338
    %1347 = vmatprep.subr.bf16.mxu0 0
    %1348 = vmatpush1.bf16.msra.mxu0 %v1339
    %1349 = vmatprep.subr.bf16.mxu0 0
    %1350 = vmatpush1.bf16.msra.mxu0 0
    %1351 = vmatprep.subr.bf16.mxu0 0
    %1352 = vmatpush1.bf16.msra.mxu0 0
    %1353 = vmatprep.subr.bf16.mxu0 0
    %1354 = vmatpush1.bf16.msra.mxu0 0
    %1355 = vmatprep.subr.bf16.mxu0 0
    %1356 = vmatpush1.bf16.msra.mxu0 0
    %1357 = vmatprep.subr.bf16.mxu0 0
    %1358 = vmatpush1.bf16.msra.mxu0 0
    %1359 = vmatprep.subr.bf16.mxu0 0
    %1360 = vmatpush1.bf16.msra.mxu0 0
    %1361 = vmatprep.subr.bf16.mxu0 0
    %1362 = vmatpush1.bf16.msra.mxu0 0
    %1363 = vmatprep.subr.bf16.mxu0 0
    %1364 = vmatpush1.bf16.msra.mxu0 0
    %1365 = vmatprep.subr.bf16.mxu0 0
    %1366 = vmatpush1.bf16.msra.mxu0 0
    %1367 = vmatprep.subr.bf16.mxu0 0
    %1368 = vmatpush1.bf16.msra.mxu0 0
    %1369 = vmatprep.subr.bf16.mxu0 0
    %1370 = vmatpush1.bf16.msra.mxu0 0
    %1371 = vmatprep.subr.bf16.mxu0 0
    %1372 = vmatpush1.bf16.msra.mxu0 0
    %1373 = vmatprep.subr.bf16.mxu0 0
    %1374 = vmatpush1.bf16.msra.mxu0 0
    %1375 = vmatprep.subr.bf16.mxu0 0
    %1376 = vmatpush1.bf16.msra.mxu0 0
    %1377 = vmatprep.mubr.bf16.mxu0 0
    %1378 = vmatmul.mubr.bf16.gmra.mrb[0].mxu0 %v1343
    %v1379 = vpop.f32.mrb[0].mxu0
    %v1380 = vadd.f32 %v1322, %v1379
    %v1381 = vpop.f32.mrb[0].mxu0
    %v1382 = vpop.f32.mrb[0].mxu0
    %v1383 = vpop.f32.mrb[0].mxu0
    %1384 = vdwg.mxu0
    %v1385 = vld [vmem:[%s8] sm:$0x1]
    %v1387 = vlaneseq
    %v1388 = vshrl.u32 %v1387, 7
    %v1389 = vsub.s32 0, %v1388
    %v1390 = vrot.slane %v1385, %v1389
    %v1392 = vadd.f32 %v1380, %v1390
    %v1393 = vxor.u32 %v1392, 2147483648
    %v1394 = vmul.f32 %v1393, 1.442695
    %v1395 = vpow.pop %v1394
    %v1396 = vadd.f32 %v1395, 1.0
    %v1397 = vrcp.pop %v1396
    %v1398 = vmul.f32 1.0, %v1397
    %v1399 = vmul.f32 %v1398, 2.0
    %v1400 = vsub.f32 %v1399, 1.0
    %1402 = vrot.lane.b32.xlu0 %v1261, 32
    %v1403 = vpop.permute.xlu0 %1402
    %v1405 = vmul.f32 %v1398, %v1403
    %1407 = vrot.lane.b32.xlu0 %v1400, 64
    %v1408 = vpop.permute.xlu0 %1407
    %v1410 = vmul.f32 %v1398, %v1408
    %1412 = vrot.lane.b32.xlu0 %v1410, 32
    %v1413 = vpop.permute.xlu0 %1412
    %v1415 = vadd.f32 %v1405, %v1413
    %v1416 = vtanh.pop %v1415
    %1418 = vrot.lane.b32.xlu0 %v1416, 64
    %v1419 = vpop.permute.xlu0 %1418
    %v1421 = vmul.f32 %v1398, %v1419
    %1423 = vrot.lane.b32.xlu0 %v1421, 32
    %v1424 = vpop.permute.xlu0 %1423
    %1426 = vst.msk [vmem:[%s224] sm:$0xff] %vm85, %v1424
    %1428 = vrot.lane.b32.xlu0 %v1415, 96
    %v1429 = vpop.permute.xlu0 %1428
    %1431 = vst.msk [vmem:[%s226] sm:$0xff] %vm85, %v1429
    %v1432 = vpack.c.bf16 %v1421, %v1421
    %v1433 = vld [vmem:[%s9] sm:$0xf]
    %v1434 = vld [vmem:[%s9 + $0x4] sm:$0xf]
    %v1435 = vld [vmem:[%s9 + $0x8] sm:$0xf]
    %v1436 = vld [vmem:[%s9 + $0xc] sm:$0xf]
    %1438 = vrot.lane.b32.xlu0 %v1432, 32
    %v1439 = vpop.permute.xlu0 %1438
    %v1444 = vunpack.c.l.b16 %v1433
    %v1445 = vunpack.c.l.b16 %v1434
    %v1446 = vunpack.c.l.b16 %v1435
    %v1447 = vunpack.c.l.b16 %v1436
    %v1448 = vpack.c.b16 %v1445, %v1444
    %v1449 = vpack.c.b16 %v1447, %v1446
    %v1453 = vsel %vm85, %v1439, 0
    %1455 = vmatprep.subr.bf16.mxu0 0
    %1456 = vmatpush1.bf16.msra.mxu0 %v1448
    %1457 = vmatprep.subr.bf16.mxu0 0
    %1458 = vmatpush1.bf16.msra.mxu0 %v1449
    %1459 = vmatprep.subr.bf16.mxu0 0
    %1460 = vmatpush1.bf16.msra.mxu0 0
    %1461 = vmatprep.subr.bf16.mxu0 0
    %1462 = vmatpush1.bf16.msra.mxu0 0
    %1463 = vmatprep.subr.bf16.mxu0 0
    %1464 = vmatpush1.bf16.msra.mxu0 0
    %1465 = vmatprep.subr.bf16.mxu0 0
    %1466 = vmatpush1.bf16.msra.mxu0 0
    %1467 = vmatprep.subr.bf16.mxu0 0
    %1468 = vmatpush1.bf16.msra.mxu0 0
    %1469 = vmatprep.subr.bf16.mxu0 0
    %1470 = vmatpush1.bf16.msra.mxu0 0
    %1471 = vmatprep.subr.bf16.mxu0 0
    %1472 = vmatpush1.bf16.msra.mxu0 0
    %1473 = vmatprep.subr.bf16.mxu0 0
    %1474 = vmatpush1.bf16.msra.mxu0 0
    %1475 = vmatprep.subr.bf16.mxu0 0
    %1476 = vmatpush1.bf16.msra.mxu0 0
    %1477 = vmatprep.subr.bf16.mxu0 0
    %1478 = vmatpush1.bf16.msra.mxu0 0
    %1479 = vmatprep.subr.bf16.mxu0 0
    %1480 = vmatpush1.bf16.msra.mxu0 0
    %1481 = vmatprep.subr.bf16.mxu0 0
    %1482 = vmatpush1.bf16.msra.mxu0 0
    %1483 = vmatprep.subr.bf16.mxu0 0
    %1484 = vmatpush1.bf16.msra.mxu0 0
    %1485 = vmatprep.subr.bf16.mxu0 0
    %1486 = vmatpush1.bf16.msra.mxu0 0
    %1487 = vmatprep.mubr.bf16.mxu0 0
    %1488 = vmatmul.mubr.bf16.gmra.mrb[0].mxu0 %v1453
    %v1489 = vpop.f32.mrb[0].mxu0
    %v1490 = vadd.f32 0.0, %v1489
    %v1491 = vpop.f32.mrb[0].mxu0
    %v1492 = vpop.f32.mrb[0].mxu0
    %v1493 = vpop.f32.mrb[0].mxu0
    %1494 = vdwg.mxu0
    %v1495 = vtanh.pop %v1490
    %v1496 = vpack.c.bf16 %v1495, %v1495
    %v1497 = vld [vmem:[%s10] sm:$0xf]
    %v1498 = vld [vmem:[%s10 + $0x4] sm:$0xf]
    %v1499 = vld [vmem:[%s10 + $0x8] sm:$0xf]
    %v1500 = vld [vmem:[%s10 + $0xc] sm:$0xf]
    %v1505 = vunpack.c.l.b16 %v1497
    %v1506 = vunpack.c.l.b16 %v1498
    %v1507 = vunpack.c.l.b16 %v1499
    %v1508 = vunpack.c.l.b16 %v1500
    %v1509 = vpack.c.b16 %v1506, %v1505
    %v1510 = vpack.c.b16 %v1508, %v1507
    %v1514 = vsel %vm85, %v1496, 0
    %1516 = vmatprep.subr.bf16.mxu0 0
    %1517 = vmatpush1.bf16.msra.mxu0 %v1509
    %1518 = vmatprep.subr.bf16.mxu0 0
    %1519 = vmatpush1.bf16.msra.mxu0 %v1510
    %1520 = vmatprep.subr.bf16.mxu0 0
    %1521 = vmatpush1.bf16.msra.mxu0 0
    %1522 = vmatprep.subr.bf16.mxu0 0
    %1523 = vmatpush1.bf16.msra.mxu0 0
    %1524 = vmatprep.subr.bf16.mxu0 0
    %1525 = vmatpush1.bf16.msra.mxu0 0
    %1526 = vmatprep.subr.bf16.mxu0 0
    %1527 = vmatpush1.bf16.msra.mxu0 0
    %1528 = vmatprep.subr.bf16.mxu0 0
    %1529 = vmatpush1.bf16.msra.mxu0 0
    %1530 = vmatprep.subr.bf16.mxu0 0
    %1531 = vmatpush1.bf16.msra.mxu0 0
    %1532 = vmatprep.subr.bf16.mxu0 0
    %1533 = vmatpush1.bf16.msra.mxu0 0
    %1534 = vmatprep.subr.bf16.mxu0 0
    %1535 = vmatpush1.bf16.msra.mxu0 0
    %1536 = vmatprep.subr.bf16.mxu0 0
    %1537 = vmatpush1.bf16.msra.mxu0 0
    %1538 = vmatprep.subr.bf16.mxu0 0
    %1539 = vmatpush1.bf16.msra.mxu0 0
    %1540 = vmatprep.subr.bf16.mxu0 0
    %1541 = vmatpush1.bf16.msra.mxu0 0
    %1542 = vmatprep.subr.bf16.mxu0 0
    %1543 = vmatpush1.bf16.msra.mxu0 0
    %1544 = vmatprep.subr.bf16.mxu0 0
    %1545 = vmatpush1.bf16.msra.mxu0 0
    %1546 = vmatprep.subr.bf16.mxu0 0
    %1547 = vmatpush1.bf16.msra.mxu0 0
    %1548 = vmatprep.mubr.bf16.mxu0 0
    %1549 = vmatmul.mubr.bf16.gmra.mrb[0].mxu0 %v1514
    %v1550 = vpop.f32.mrb[0].mxu0
    %v1551 = vadd.f32 0.0, %v1550
    %v1552 = vpop.f32.mrb[0].mxu0
    %v1553 = vpop.f32.mrb[0].mxu0
    %v1554 = vpop.f32.mrb[0].mxu0
    %1555 = vdwg.mxu0
    %v1556 = vtanh.pop %v1551
    %v1557 = vpack.c.bf16 %v1556, %v1556
    %v1558 = vld [vmem:[%s11] sm:$0xf]
    %v1559 = vld [vmem:[%s11 + $0x4] sm:$0xf]
    %v1560 = vld [vmem:[%s12] sm:$0x1]
    %v1562 = vlaneseq
    %v1563 = vshrl.u32 %v1562, 7
    %v1564 = vsub.s32 0, %v1563
    %v1565 = vrot.slane %v1560, %v1564
    %v1569 = vunpack.c.l.b16 %v1558
    %v1570 = vunpack.c.l.b16 %v1559
    %v1571 = vpack.c.b16 %v1570, %v1569
    %v1574 = vsel %vm539, %v1557, 0
    %1576 = vmatprep.subr.bf16.mxu0 0
    %1577 = vmatpush1.bf16.msra.mxu0 %v1571
    %1578 = vmatprep.subr.bf16.mxu0 0
    %1579 = vmatpush1.bf16.msra.mxu0 0
    %1580 = vmatprep.subr.bf16.mxu0 0
    %1581 = vmatpush1.bf16.msra.mxu0 0
    %1582 = vmatprep.subr.bf16.mxu0 0
    %1583 = vmatpush1.bf16.msra.mxu0 0
    %1584 = vmatprep.subr.bf16.mxu0 0
    %1585 = vmatpush1.bf16.msra.mxu0 0
    %1586 = vmatprep.subr.bf16.mxu0 0
    %1587 = vmatpush1.bf16.msra.mxu0 0
    %1588 = vmatprep.subr.bf16.mxu0 0
    %1589 = vmatpush1.bf16.msra.mxu0 0
    %1590 = vmatprep.subr.bf16.mxu0 0
    %1591 = vmatpush1.bf16.msra.mxu0 0
    %1592 = vmatprep.subr.bf16.mxu0 0
    %1593 = vmatpush1.bf16.msra.mxu0 0
    %1594 = vmatprep.subr.bf16.mxu0 0
    %1595 = vmatpush1.bf16.msra.mxu0 0
    %1596 = vmatprep.subr.bf16.mxu0 0
    %1597 = vmatpush1.bf16.msra.mxu0 0
    %1598 = vmatprep.subr.bf16.mxu0 0
    %1599 = vmatpush1.bf16.msra.mxu0 0
    %1600 = vmatprep.subr.bf16.mxu0 0
    %1601 = vmatpush1.bf16.msra.mxu0 0
    %1602 = vmatprep.subr.bf16.mxu0 0
    %1603 = vmatpush1.bf16.msra.mxu0 0
    %1604 = vmatprep.subr.bf16.mxu0 0
    %1605 = vmatpush1.bf16.msra.mxu0 0
    %1606 = vmatprep.subr.bf16.mxu0 0
    %1607 = vmatpush1.bf16.msra.mxu0 0
    %1608 = vmatprep.mubr.bf16.mxu0 0
    %1609 = vmatmul.mubr.bf16.gmra.mrb[0].mxu0 %v1574
    %v1610 = vpop.f32.mrb[0].mxu0
    %v1611 = vadd.f32 %v1565, %v1610
    %v1612 = vpop.f32.mrb[0].mxu0
    %v1613 = vpop.f32.mrb[0].mxu0
    %v1614 = vpop.f32.mrb[0].mxu0
    %1615 = vdwg.mxu0
    %s1616 = scalar_lea.vmem [#allocation4], 16
    %1617 = vst.msk [vmem:[%s1616] sm:$0xff] %vm129, %v1611
    %s1618 = scalar_lea.vmem %s2, 24
    %v1619 = vld [vmem:[%s1618] sm:$0xff]
    %v1620 = vld [vmem:[#allocation2] sm:$0xff]
    %v1621 = vld [vmem:[#allocation3] sm:$0xff]
    %v1622 = vpack.c.bf16 %v1619, %v1619
    %v1623 = vld [vmem:[%s3] sm:$0xf]
    %v1624 = vpack.c.bf16 %v1620, %v1620
    %v1625 = vld [vmem:[%s4] sm:$0xf]
    %v1626 = vld [vmem:[%s4 + $0x4] sm:$0xf]
    %v1627 = vld [vmem:[%s4 + $0x8] sm:$0xf]
    %v1628 = vld [vmem:[%s4 + $0xc] sm:$0xf]
    %v1633 = vunpack.c.l.b16 %v1625
    %v1634 = vunpack.c.l.b16 %v1626
    %v1635 = vunpack.c.l.b16 %v1627
    %v1636 = vunpack.c.l.b16 %v1628
    %v1637 = vpack.c.b16 %v1634, %v1633
    %v1638 = vpack.c.b16 %v1636, %v1635
    %v1642 = vsel %vm85, %v1624, 0
    %1644 = vmatprep.subr.bf16.mxu0 0
    %1645 = vmatpush1.bf16.msra.mxu0 %v1637
    %1646 = vmatprep.subr.bf16.mxu0 0
    %1647 = vmatpush1.bf16.msra.mxu0 %v1638
    %1648 = vmatprep.subr.bf16.mxu0 0
    %1649 = vmatpush1.bf16.msra.mxu0 0
    %1650 = vmatprep.subr.bf16.mxu0 0
    %1651 = vmatpush1.bf16.msra.mxu0 0
    %1652 = vmatprep.subr.bf16.mxu0 0
    %1653 = vmatpush1.bf16.msra.mxu0 0
    %1654 = vmatprep.subr.bf16.mxu0 0
    %1655 = vmatpush1.bf16.msra.mxu0 0
    %1656 = vmatprep.subr.bf16.mxu0 0
    %1657 = vmatpush1.bf16.msra.mxu0 0
    %1658 = vmatprep.subr.bf16.mxu0 0
    %1659 = vmatpush1.bf16.msra.mxu0 0
    %1660 = vmatprep.subr.bf16.mxu0 0
    %1661 = vmatpush1.bf16.msra.mxu0 0
    %1662 = vmatprep.subr.bf16.mxu0 0
    %1663 = vmatpush1.bf16.msra.mxu0 0
    %1664 = vmatprep.subr.bf16.mxu0 0
    %1665 = vmatpush1.bf16.msra.mxu0 0
    %1666 = vmatprep.subr.bf16.mxu0 0
    %1667 = vmatpush1.bf16.msra.mxu0 0
    %1668 = vmatprep.subr.bf16.mxu0 0
    %1669 = vmatpush1.bf16.msra.mxu0 0
    %1670 = vmatprep.subr.bf16.mxu0 0
    %1671 = vmatpush1.bf16.msra.mxu0 0
    %1672 = vmatprep.subr.bf16.mxu0 0
    %1673 = vmatpush1.bf16.msra.mxu0 0
    %1674 = vmatprep.subr.bf16.mxu0 0
    %1675 = vmatpush1.bf16.msra.mxu0 0
    %1676 = vmatprep.mubr.bf16.mxu0 0
    %1677 = vmatmul.mubr.bf16.gmra.mrb[0].mxu0 %v1642
    %v1678 = vpop.f32.mrb[0].mxu0
    %v1679 = vadd.f32 0.0, %v1678
    %v1680 = vpop.f32.mrb[0].mxu0
    %v1681 = vpop.f32.mrb[0].mxu0
    %v1682 = vpop.f32.mrb[0].mxu0
    %1683 = vdwg.mxu0
    %v1685 = vsel %vm129, %v1622, 0
    %v1688 = vsel %vm133, %v1623, 0
    %1690 = vmatprep.subr.bf16.mxu0 0
    %1691 = vmatpush1.bf16.msra.mxu0 %v1688
    %1692 = vmatprep.subr.bf16.mxu0 0
    %1693 = vmatpush1.bf16.msra.mxu0 0
    %1694 = vmatprep.subr.bf16.mxu0 0
    %1695 = vmatpush1.bf16.msra.mxu0 0
    %1696 = vmatprep.subr.bf16.mxu0 0
    %1697 = vmatpush1.bf16.msra.mxu0 0
    %1698 = vmatprep.subr.bf16.mxu0 0
    %1699 = vmatpush1.bf16.msra.mxu0 0
    %1700 = vmatprep.subr.bf16.mxu0 0
    %1701 = vmatpush1.bf16.msra.mxu0 0
    %1702 = vmatprep.subr.bf16.mxu0 0
    %1703 = vmatpush1.bf16.msra.mxu0 0
    %1704 = vmatprep.subr.bf16.mxu0 0
    %1705 = vmatpush1.bf16.msra.mxu0 0
    %1706 = vmatprep.subr.bf16.mxu0 0
    %1707 = vmatpush1.bf16.msra.mxu0 0
    %1708 = vmatprep.subr.bf16.mxu0 0
    %1709 = vmatpush1.bf16.msra.mxu0 0
    %1710 = vmatprep.subr.bf16.mxu0 0
    %1711 = vmatpush1.bf16.msra.mxu0 0
    %1712 = vmatprep.subr.bf16.mxu0 0
    %1713 = vmatpush1.bf16.msra.mxu0 0
    %1714 = vmatprep.subr.bf16.mxu0 0
    %1715 = vmatpush1.bf16.msra.mxu0 0
    %1716 = vmatprep.subr.bf16.mxu0 0
    %1717 = vmatpush1.bf16.msra.mxu0 0
    %1718 = vmatprep.subr.bf16.mxu0 0
    %1719 = vmatpush1.bf16.msra.mxu0 0
    %1720 = vmatprep.subr.bf16.mxu0 0
    %1721 = vmatpush1.bf16.msra.mxu0 0
    %1722 = vmatprep.mubr.bf16.mxu0 0
    %1723 = vmatmul.mubr.bf16.gmra.mrb[0].mxu0 %v1685
    %v1724 = vpop.f32.mrb[0].mxu0
    %v1725 = vadd.f32 %v1679, %v1724
    %v1726 = vpop.f32.mrb[0].mxu0
    %v1727 = vpop.f32.mrb[0].mxu0
    %v1728 = vpop.f32.mrb[0].mxu0
    %1729 = vdwg.mxu0
    %v1730 = vld [vmem:[%s5] sm:$0x1]
    %v1732 = vlaneseq
    %v1733 = vshrl.u32 %v1732, 7
    %v1734 = vsub.s32 0, %v1733
    %v1735 = vrot.slane %v1730, %v1734
    %v1737 = vadd.f32 %v1725, %v1735
    %v1738 = vxor.u32 %v1737, 2147483648
    %v1739 = vmul.f32 %v1738, 1.442695
    %v1740 = vpow.pop %v1739
    %v1741 = vadd.f32 %v1740, 1.0
    %v1742 = vrcp.pop %v1741
    %v1743 = vmul.f32 1.0, %v1742
    %v1744 = vmul.f32 %v1743, 2.0
    %v1745 = vsub.f32 %v1744, 1.0
    %1747 = vrot.lane.b32.xlu0 %v1621, 32
    %v1748 = vpop.permute.xlu0 %1747
    %v1750 = vmul.f32 %v1743, %v1748
    %1752 = vrot.lane.b32.xlu0 %v1745, 64
    %v1753 = vpop.permute.xlu0 %1752
    %v1755 = vmul.f32 %v1743, %v1753
    %1757 = vrot.lane.b32.xlu0 %v1755, 32
    %v1758 = vpop.permute.xlu0 %1757
    %v1760 = vadd.f32 %v1750, %v1758
    %v1761 = vtanh.pop %v1760
    %1763 = vrot.lane.b32.xlu0 %v1761, 64
    %v1764 = vpop.permute.xlu0 %1763
    %v1766 = vmul.f32 %v1743, %v1764
    %1768 = vrot.lane.b32.xlu0 %v1766, 32
    %v1769 = vpop.permute.xlu0 %1768
    %1771 = vst.msk [vmem:[#allocation2] sm:$0xff] %vm85, %v1769
    %1773 = vrot.lane.b32.xlu0 %v1760, 96
    %v1774 = vpop.permute.xlu0 %1773
    %1776 = vst.msk [vmem:[#allocation3] sm:$0xff] %vm85, %v1774
    %v1777 = vld [vmem:[%s224] sm:$0xff]
    %v1778 = vld [vmem:[%s226] sm:$0xff]
    %v1779 = vpack.c.bf16 %v1766, %v1766
    %v1780 = vld [vmem:[%s6] sm:$0xf]
    %v1781 = vld [vmem:[%s6 + $0x4] sm:$0xf]
    %v1782 = vld [vmem:[%s6 + $0x8] sm:$0xf]
    %v1783 = vld [vmem:[%s6 + $0xc] sm:$0xf]
    %v1784 = vpack.c.bf16 %v1777, %v1777
    %v1785 = vld [vmem:[%s7] sm:$0xf]
    %v1786 = vld [vmem:[%s7 + $0x4] sm:$0xf]
    %v1787 = vld [vmem:[%s7 + $0x8] sm:$0xf]
    %v1788 = vld [vmem:[%s7 + $0xc] sm:$0xf]
    %v1793 = vunpack.c.l.b16 %v1785
    %v1794 = vunpack.c.l.b16 %v1786
    %v1795 = vunpack.c.l.b16 %v1787
    %v1796 = vunpack.c.l.b16 %v1788
    %v1797 = vpack.c.b16 %v1794, %v1793
    %v1798 = vpack.c.b16 %v1796, %v1795
    %v1802 = vsel %vm85, %v1784, 0
    %1804 = vmatprep.subr.bf16.mxu0 0
    %1805 = vmatpush1.bf16.msra.mxu0 %v1797
    %1806 = vmatprep.subr.bf16.mxu0 0
    %1807 = vmatpush1.bf16.msra.mxu0 %v1798
    %1808 = vmatprep.subr.bf16.mxu0 0
    %1809 = vmatpush1.bf16.msra.mxu0 0
    %1810 = vmatprep.subr.bf16.mxu0 0
    %1811 = vmatpush1.bf16.msra.mxu0 0
    %1812 = vmatprep.subr.bf16.mxu0 0
    %1813 = vmatpush1.bf16.msra.mxu0 0
    %1814 = vmatprep.subr.bf16.mxu0 0
    %1815 = vmatpush1.bf16.msra.mxu0 0
    %1816 = vmatprep.subr.bf16.mxu0 0
    %1817 = vmatpush1.bf16.msra.mxu0 0
    %1818 = vmatprep.subr.bf16.mxu0 0
    %1819 = vmatpush1.bf16.msra.mxu0 0
    %1820 = vmatprep.subr.bf16.mxu0 0
    %1821 = vmatpush1.bf16.msra.mxu0 0
    %1822 = vmatprep.subr.bf16.mxu0 0
    %1823 = vmatpush1.bf16.msra.mxu0 0
    %1824 = vmatprep.subr.bf16.mxu0 0
    %1825 = vmatpush1.bf16.msra.mxu0 0
    %1826 = vmatprep.subr.bf16.mxu0 0
    %1827 = vmatpush1.bf16.msra.mxu0 0
    %1828 = vmatprep.subr.bf16.mxu0 0
    %1829 = vmatpush1.bf16.msra.mxu0 0
    %1830 = vmatprep.subr.bf16.mxu0 0
    %1831 = vmatpush1.bf16.msra.mxu0 0
    %1832 = vmatprep.subr.bf16.mxu0 0
    %1833 = vmatpush1.bf16.msra.mxu0 0
    %1834 = vmatprep.subr.bf16.mxu0 0
    %1835 = vmatpush1.bf16.msra.mxu0 0
    %1836 = vmatprep.mubr.bf16.mxu0 0
    %1837 = vmatmul.mubr.bf16.gmra.mrb[0].mxu0 %v1802
    %v1838 = vpop.f32.mrb[0].mxu0
    %v1839 = vadd.f32 0.0, %v1838
    %v1840 = vpop.f32.mrb[0].mxu0
    %v1841 = vpop.f32.mrb[0].mxu0
    %v1842 = vpop.f32.mrb[0].mxu0
    %1843 = vdwg.mxu0
    %1845 = vrot.lane.b32.xlu0 %v1779, 32
    %v1846 = vpop.permute.xlu0 %1845
    %v1851 = vunpack.c.l.b16 %v1780
    %v1852 = vunpack.c.l.b16 %v1781
    %v1853 = vunpack.c.l.b16 %v1782
    %v1854 = vunpack.c.l.b16 %v1783
    %v1855 = vpack.c.b16 %v1852, %v1851
    %v1856 = vpack.c.b16 %v1854, %v1853
    %v1860 = vsel %vm85, %v1846, 0
    %1862 = vmatprep.subr.bf16.mxu0 0
    %1863 = vmatpush1.bf16.msra.mxu0 %v1855
    %1864 = vmatprep.subr.bf16.mxu0 0
    %1865 = vmatpush1.bf16.msra.mxu0 %v1856
    %1866 = vmatprep.subr.bf16.mxu0 0
    %1867 = vmatpush1.bf16.msra.mxu0 0
    %1868 = vmatprep.subr.bf16.mxu0 0
    %1869 = vmatpush1.bf16.msra.mxu0 0
    %1870 = vmatprep.subr.bf16.mxu0 0
    %1871 = vmatpush1.bf16.msra.mxu0 0
    %1872 = vmatprep.subr.bf16.mxu0 0
    %1873 = vmatpush1.bf16.msra.mxu0 0
    %1874 = vmatprep.subr.bf16.mxu0 0
    %1875 = vmatpush1.bf16.msra.mxu0 0
    %1876 = vmatprep.subr.bf16.mxu0 0
    %1877 = vmatpush1.bf16.msra.mxu0 0
    %1878 = vmatprep.subr.bf16.mxu0 0
    %1879 = vmatpush1.bf16.msra.mxu0 0
    %1880 = vmatprep.subr.bf16.mxu0 0
    %1881 = vmatpush1.bf16.msra.mxu0 0
    %1882 = vmatprep.subr.bf16.mxu0 0
    %1883 = vmatpush1.bf16.msra.mxu0 0
    %1884 = vmatprep.subr.bf16.mxu0 0
    %1885 = vmatpush1.bf16.msra.mxu0 0
    %1886 = vmatprep.subr.bf16.mxu0 0
    %1887 = vmatpush1.bf16.msra.mxu0 0
    %1888 = vmatprep.subr.bf16.mxu0 0
    %1889 = vmatpush1.bf16.msra.mxu0 0
    %1890 = vmatprep.subr.bf16.mxu0 0
    %1891 = vmatpush1.bf16.msra.mxu0 0
    %1892 = vmatprep.subr.bf16.mxu0 0
    %1893 = vmatpush1.bf16.msra.mxu0 0
    %1894 = vmatprep.mubr.bf16.mxu0 0
    %1895 = vmatmul.mubr.bf16.gmra.mrb[0].mxu0 %v1860
    %v1896 = vpop.f32.mrb[0].mxu0
    %v1897 = vadd.f32 %v1839, %v1896
    %v1898 = vpop.f32.mrb[0].mxu0
    %v1899 = vpop.f32.mrb[0].mxu0
    %v1900 = vpop.f32.mrb[0].mxu0
    %1901 = vdwg.mxu0
    %v1902 = vld [vmem:[%s8] sm:$0x1]
    %v1904 = vlaneseq
    %v1905 = vshrl.u32 %v1904, 7
    %v1906 = vsub.s32 0, %v1905
    %v1907 = vrot.slane %v1902, %v1906
    %v1909 = vadd.f32 %v1897, %v1907
    %v1910 = vxor.u32 %v1909, 2147483648
    %v1911 = vmul.f32 %v1910, 1.442695
    %v1912 = vpow.pop %v1911
    %v1913 = vadd.f32 %v1912, 1.0
    %v1914 = vrcp.pop %v1913
    %v1915 = vmul.f32 1.0, %v1914
    %v1916 = vmul.f32 %v1915, 2.0
    %v1917 = vsub.f32 %v1916, 1.0
    %1919 = vrot.lane.b32.xlu0 %v1778, 32
    %v1920 = vpop.permute.xlu0 %1919
    %v1922 = vmul.f32 %v1915, %v1920
    %1924 = vrot.lane.b32.xlu0 %v1917, 64
    %v1925 = vpop.permute.xlu0 %1924
    %v1927 = vmul.f32 %v1915, %v1925
    %1929 = vrot.lane.b32.xlu0 %v1927, 32
    %v1930 = vpop.permute.xlu0 %1929
    %v1932 = vadd.f32 %v1922, %v1930
    %v1933 = vtanh.pop %v1932
    %1935 = vrot.lane.b32.xlu0 %v1933, 64
    %v1936 = vpop.permute.xlu0 %1935
    %v1938 = vmul.f32 %v1915, %v1936
    %1940 = vrot.lane.b32.xlu0 %v1938, 32
    %v1941 = vpop.permute.xlu0 %1940
    %1943 = vst.msk [vmem:[%s224] sm:$0xff] %vm85, %v1941
    %1945 = vrot.lane.b32.xlu0 %v1932, 96
    %v1946 = vpop.permute.xlu0 %1945
    %1948 = vst.msk [vmem:[%s226] sm:$0xff] %vm85, %v1946
    %v1949 = vpack.c.bf16 %v1938, %v1938
    %v1950 = vld [vmem:[%s9] sm:$0xf]
    %v1951 = vld [vmem:[%s9 + $0x4] sm:$0xf]
    %v1952 = vld [vmem:[%s9 + $0x8] sm:$0xf]
    %v1953 = vld [vmem:[%s9 + $0xc] sm:$0xf]
    %1955 = vrot.lane.b32.xlu0 %v1949, 32
    %v1956 = vpop.permute.xlu0 %1955
    %v1961 = vunpack.c.l.b16 %v1950
    %v1962 = vunpack.c.l.b16 %v1951
    %v1963 = vunpack.c.l.b16 %v1952
    %v1964 = vunpack.c.l.b16 %v1953
    %v1965 = vpack.c.b16 %v1962, %v1961
    %v1966 = vpack.c.b16 %v1964, %v1963
    %v1970 = vsel %vm85, %v1956, 0
    %1972 = vmatprep.subr.bf16.mxu0 0
    %1973 = vmatpush1.bf16.msra.mxu0 %v1965
    %1974 = vmatprep.subr.bf16.mxu0 0
    %1975 = vmatpush1.bf16.msra.mxu0 %v1966
    %1976 = vmatprep.subr.bf16.mxu0 0
    %1977 = vmatpush1.bf16.msra.mxu0 0
    %1978 = vmatprep.subr.bf16.mxu0 0
    %1979 = vmatpush1.bf16.msra.mxu0 0
    %1980 = vmatprep.subr.bf16.mxu0 0
    %1981 = vmatpush1.bf16.msra.mxu0 0
    %1982 = vmatprep.subr.bf16.mxu0 0
    %1983 = vmatpush1.bf16.msra.mxu0 0
    %1984 = vmatprep.subr.bf16.mxu0 0
    %1985 = vmatpush1.bf16.msra.mxu0 0
    %1986 = vmatprep.subr.bf16.mxu0 0
    %1987 = vmatpush1.bf16.msra.mxu0 0
    %1988 = vmatprep.subr.bf16.mxu0 0
    %1989 = vmatpush1.bf16.msra.mxu0 0
    %1990 = vmatprep.subr.bf16.mxu0 0
    %1991 = vmatpush1.bf16.msra.mxu0 0
    %1992 = vmatprep.subr.bf16.mxu0 0
    %1993 = vmatpush1.bf16.msra.mxu0 0
    %1994 = vmatprep.subr.bf16.mxu0 0
    %1995 = vmatpush1.bf16.msra.mxu0 0
    %1996 = vmatprep.subr.bf16.mxu0 0
    %1997 = vmatpush1.bf16.msra.mxu0 0
    %1998 = vmatprep.subr.bf16.mxu0 0
    %1999 = vmatpush1.bf16.msra.mxu0 0
    %2000 = vmatprep.subr.bf16.mxu0 0
    %2001 = vmatpush1.bf16.msra.mxu0 0
    %2002 = vmatprep.subr.bf16.mxu0 0
    %2003 = vmatpush1.bf16.msra.mxu0 0
    %2004 = vmatprep.mubr.bf16.mxu0 0
    %2005 = vmatmul.mubr.bf16.gmra.mrb[0].mxu0 %v1970
    %v2006 = vpop.f32.mrb[0].mxu0
    %v2007 = vadd.f32 0.0, %v2006
    %v2008 = vpop.f32.mrb[0].mxu0
    %v2009 = vpop.f32.mrb[0].mxu0
    %v2010 = vpop.f32.mrb[0].mxu0
    %2011 = vdwg.mxu0
    %v2012 = vtanh.pop %v2007
    %v2013 = vpack.c.bf16 %v2012, %v2012
    %v2014 = vld [vmem:[%s10] sm:$0xf]
    %v2015 = vld [vmem:[%s10 + $0x4] sm:$0xf]
    %v2016 = vld [vmem:[%s10 + $0x8] sm:$0xf]
    %v2017 = vld [vmem:[%s10 + $0xc] sm:$0xf]
    %v2022 = vunpack.c.l.b16 %v2014
    %v2023 = vunpack.c.l.b16 %v2015
    %v2024 = vunpack.c.l.b16 %v2016
    %v2025 = vunpack.c.l.b16 %v2017
    %v2026 = vpack.c.b16 %v2023, %v2022
    %v2027 = vpack.c.b16 %v2025, %v2024
    %v2031 = vsel %vm85, %v2013, 0
    %2033 = vmatprep.subr.bf16.mxu0 0
    %2034 = vmatpush1.bf16.msra.mxu0 %v2026
    %2035 = vmatprep.subr.bf16.mxu0 0
    %2036 = vmatpush1.bf16.msra.mxu0 %v2027
    %2037 = vmatprep.subr.bf16.mxu0 0
    %2038 = vmatpush1.bf16.msra.mxu0 0
    %2039 = vmatprep.subr.bf16.mxu0 0
    %2040 = vmatpush1.bf16.msra.mxu0 0
    %2041 = vmatprep.subr.bf16.mxu0 0
    %2042 = vmatpush1.bf16.msra.mxu0 0
    %2043 = vmatprep.subr.bf16.mxu0 0
    %2044 = vmatpush1.bf16.msra.mxu0 0
    %2045 = vmatprep.subr.bf16.mxu0 0
    %2046 = vmatpush1.bf16.msra.mxu0 0
    %2047 = vmatprep.subr.bf16.mxu0 0
    %2048 = vmatpush1.bf16.msra.mxu0 0
    %2049 = vmatprep.subr.bf16.mxu0 0
    %2050 = vmatpush1.bf16.msra.mxu0 0
    %2051 = vmatprep.subr.bf16.mxu0 0
    %2052 = vmatpush1.bf16.msra.mxu0 0
    %2053 = vmatprep.subr.bf16.mxu0 0
    %2054 = vmatpush1.bf16.msra.mxu0 0
    %2055 = vmatprep.subr.bf16.mxu0 0
    %2056 = vmatpush1.bf16.msra.mxu0 0
    %2057 = vmatprep.subr.bf16.mxu0 0
    %2058 = vmatpush1.bf16.msra.mxu0 0
    %2059 = vmatprep.subr.bf16.mxu0 0
    %2060 = vmatpush1.bf16.msra.mxu0 0
    %2061 = vmatprep.subr.bf16.mxu0 0
    %2062 = vmatpush1.bf16.msra.mxu0 0
    %2063 = vmatprep.subr.bf16.mxu0 0
    %2064 = vmatpush1.bf16.msra.mxu0 0
    %2065 = vmatprep.mubr.bf16.mxu0 0
    %2066 = vmatmul.mubr.bf16.gmra.mrb[0].mxu0 %v2031
    %v2067 = vpop.f32.mrb[0].mxu0
    %v2068 = vadd.f32 0.0, %v2067
    %v2069 = vpop.f32.mrb[0].mxu0
    %v2070 = vpop.f32.mrb[0].mxu0
    %v2071 = vpop.f32.mrb[0].mxu0
    %2072 = vdwg.mxu0
    %v2073 = vtanh.pop %v2068
    %v2074 = vpack.c.bf16 %v2073, %v2073
    %v2075 = vld [vmem:[%s11] sm:$0xf]
    %v2076 = vld [vmem:[%s11 + $0x4] sm:$0xf]
    %v2077 = vld [vmem:[%s12] sm:$0x1]
    %v2079 = vlaneseq
    %v2080 = vshrl.u32 %v2079, 7
    %v2081 = vsub.s32 0, %v2080
    %v2082 = vrot.slane %v2077, %v2081
    %v2086 = vunpack.c.l.b16 %v2075
    %v2087 = vunpack.c.l.b16 %v2076
    %v2088 = vpack.c.b16 %v2087, %v2086
    %v2091 = vsel %vm539, %v2074, 0
    %2093 = vmatprep.subr.bf16.mxu0 0
    %2094 = vmatpush1.bf16.msra.mxu0 %v2088
    %2095 = vmatprep.subr.bf16.mxu0 0
    %2096 = vmatpush1.bf16.msra.mxu0 0
    %2097 = vmatprep.subr.bf16.mxu0 0
    %2098 = vmatpush1.bf16.msra.mxu0 0
    %2099 = vmatprep.subr.bf16.mxu0 0
    %2100 = vmatpush1.bf16.msra.mxu0 0
    %2101 = vmatprep.subr.bf16.mxu0 0
    %2102 = vmatpush1.bf16.msra.mxu0 0
    %2103 = vmatprep.subr.bf16.mxu0 0
    %2104 = vmatpush1.bf16.msra.mxu0 0
    %2105 = vmatprep.subr.bf16.mxu0 0
    %2106 = vmatpush1.bf16.msra.mxu0 0
    %2107 = vmatprep.subr.bf16.mxu0 0
    %2108 = vmatpush1.bf16.msra.mxu0 0
    %2109 = vmatprep.subr.bf16.mxu0 0
    %2110 = vmatpush1.bf16.msra.mxu0 0
    %2111 = vmatprep.subr.bf16.mxu0 0
    %2112 = vmatpush1.bf16.msra.mxu0 0
    %2113 = vmatprep.subr.bf16.mxu0 0
    %2114 = vmatpush1.bf16.msra.mxu0 0
    %2115 = vmatprep.subr.bf16.mxu0 0
    %2116 = vmatpush1.bf16.msra.mxu0 0
    %2117 = vmatprep.subr.bf16.mxu0 0
    %2118 = vmatpush1.bf16.msra.mxu0 0
    %2119 = vmatprep.subr.bf16.mxu0 0
    %2120 = vmatpush1.bf16.msra.mxu0 0
    %2121 = vmatprep.subr.bf16.mxu0 0
    %2122 = vmatpush1.bf16.msra.mxu0 0
    %2123 = vmatprep.subr.bf16.mxu0 0
    %2124 = vmatpush1.bf16.msra.mxu0 0
    %2125 = vmatprep.mubr.bf16.mxu0 0
    %2126 = vmatmul.mubr.bf16.gmra.mrb[0].mxu0 %v2091
    %v2127 = vpop.f32.mrb[0].mxu0
    %v2128 = vadd.f32 %v2082, %v2127
    %v2129 = vpop.f32.mrb[0].mxu0
    %v2130 = vpop.f32.mrb[0].mxu0
    %v2131 = vpop.f32.mrb[0].mxu0
    %2132 = vdwg.mxu0
    %s2133 = scalar_lea.vmem [#allocation4], 24
    %2134 = vst.msk [vmem:[%s2133] sm:$0xff] %vm129, %v2128
    %s2135 = scalar_lea.vmem %s2, 32
    %v2136 = vld [vmem:[%s2135] sm:$0xff]
    %v2137 = vld [vmem:[#allocation2] sm:$0xff]
    %v2138 = vld [vmem:[#allocation3] sm:$0xff]
    %v2139 = vpack.c.bf16 %v2136, %v2136
    %v2140 = vld [vmem:[%s3] sm:$0xf]
    %v2141 = vpack.c.bf16 %v2137, %v2137
    %v2142 = vld [vmem:[%s4] sm:$0xf]
    %v2143 = vld [vmem:[%s4 + $0x4] sm:$0xf]
    %v2144 = vld [vmem:[%s4 + $0x8] sm:$0xf]
    %v2145 = vld [vmem:[%s4 + $0xc] sm:$0xf]
    %v2150 = vunpack.c.l.b16 %v2142
    %v2151 = vunpack.c.l.b16 %v2143
    %v2152 = vunpack.c.l.b16 %v2144
    %v2153 = vunpack.c.l.b16 %v2145
    %v2154 = vpack.c.b16 %v2151, %v2150
    %v2155 = vpack.c.b16 %v2153, %v2152
    %v2159 = vsel %vm85, %v2141, 0
    %2161 = vmatprep.subr.bf16.mxu0 0
    %2162 = vmatpush1.bf16.msra.mxu0 %v2154
    %2163 = vmatprep.subr.bf16.mxu0 0
    %2164 = vmatpush1.bf16.msra.mxu0 %v2155
    %2165 = vmatprep.subr.bf16.mxu0 0
    %2166 = vmatpush1.bf16.msra.mxu0 0
    %2167 = vmatprep.subr.bf16.mxu0 0
    %2168 = vmatpush1.bf16.msra.mxu0 0
    %2169 = vmatprep.subr.bf16.mxu0 0
    %2170 = vmatpush1.bf16.msra.mxu0 0
    %2171 = vmatprep.subr.bf16.mxu0 0
    %2172 = vmatpush1.bf16.msra.mxu0 0
    %2173 = vmatprep.subr.bf16.mxu0 0
    %2174 = vmatpush1.bf16.msra.mxu0 0
    %2175 = vmatprep.subr.bf16.mxu0 0
    %2176 = vmatpush1.bf16.msra.mxu0 0
    %2177 = vmatprep.subr.bf16.mxu0 0
    %2178 = vmatpush1.bf16.msra.mxu0 0
    %2179 = vmatprep.subr.bf16.mxu0 0
    %2180 = vmatpush1.bf16.msra.mxu0 0
    %2181 = vmatprep.subr.bf16.mxu0 0
    %2182 = vmatpush1.bf16.msra.mxu0 0
    %2183 = vmatprep.subr.bf16.mxu0 0
    %2184 = vmatpush1.bf16.msra.mxu0 0
    %2185 = vmatprep.subr.bf16.mxu0 0
    %2186 = vmatpush1.bf16.msra.mxu0 0
    %2187 = vmatprep.subr.bf16.mxu0 0
    %2188 = vmatpush1.bf16.msra.mxu0 0
    %2189 = vmatprep.subr.bf16.mxu0 0
    %2190 = vmatpush1.bf16.msra.mxu0 0
    %2191 = vmatprep.subr.bf16.mxu0 0
    %2192 = vmatpush1.bf16.msra.mxu0 0
    %2193 = vmatprep.mubr.bf16.mxu0 0
    %2194 = vmatmul.mubr.bf16.gmra.mrb[0].mxu0 %v2159
    %v2195 = vpop.f32.mrb[0].mxu0
    %v2196 = vadd.f32 0.0, %v2195
    %v2197 = vpop.f32.mrb[0].mxu0
    %v2198 = vpop.f32.mrb[0].mxu0
    %v2199 = vpop.f32.mrb[0].mxu0
    %2200 = vdwg.mxu0
    %v2202 = vsel %vm129, %v2139, 0
    %v2205 = vsel %vm133, %v2140, 0
    %2207 = vmatprep.subr.bf16.mxu0 0
    %2208 = vmatpush1.bf16.msra.mxu0 %v2205
    %2209 = vmatprep.subr.bf16.mxu0 0
    %2210 = vmatpush1.bf16.msra.mxu0 0
    %2211 = vmatprep.subr.bf16.mxu0 0
    %2212 = vmatpush1.bf16.msra.mxu0 0
    %2213 = vmatprep.subr.bf16.mxu0 0
    %2214 = vmatpush1.bf16.msra.mxu0 0
    %2215 = vmatprep.subr.bf16.mxu0 0
    %2216 = vmatpush1.bf16.msra.mxu0 0
    %2217 = vmatprep.subr.bf16.mxu0 0
    %2218 = vmatpush1.bf16.msra.mxu0 0
    %2219 = vmatprep.subr.bf16.mxu0 0
    %2220 = vmatpush1.bf16.msra.mxu0 0
    %2221 = vmatprep.subr.bf16.mxu0 0
    %2222 = vmatpush1.bf16.msra.mxu0 0
    %2223 = vmatprep.subr.bf16.mxu0 0
    %2224 = vmatpush1.bf16.msra.mxu0 0
    %2225 = vmatprep.subr.bf16.mxu0 0
    %2226 = vmatpush1.bf16.msra.mxu0 0
    %2227 = vmatprep.subr.bf16.mxu0 0
    %2228 = vmatpush1.bf16.msra.mxu0 0
    %2229 = vmatprep.subr.bf16.mxu0 0
    %2230 = vmatpush1.bf16.msra.mxu0 0
    %2231 = vmatprep.subr.bf16.mxu0 0
    %2232 = vmatpush1.bf16.msra.mxu0 0
    %2233 = vmatprep.subr.bf16.mxu0 0
    %2234 = vmatpush1.bf16.msra.mxu0 0
    %2235 = vmatprep.subr.bf16.mxu0 0
    %2236 = vmatpush1.bf16.msra.mxu0 0
    %2237 = vmatprep.subr.bf16.mxu0 0
    %2238 = vmatpush1.bf16.msra.mxu0 0
    %2239 = vmatprep.mubr.bf16.mxu0 0
    %2240 = vmatmul.mubr.bf16.gmra.mrb[0].mxu0 %v2202
    %v2241 = vpop.f32.mrb[0].mxu0
    %v2242 = vadd.f32 %v2196, %v2241
    %v2243 = vpop.f32.mrb[0].mxu0
    %v2244 = vpop.f32.mrb[0].mxu0
    %v2245 = vpop.f32.mrb[0].mxu0
    %2246 = vdwg.mxu0
    %v2247 = vld [vmem:[%s5] sm:$0x1]
    %v2249 = vlaneseq
    %v2250 = vshrl.u32 %v2249, 7
    %v2251 = vsub.s32 0, %v2250
    %v2252 = vrot.slane %v2247, %v2251
    %v2254 = vadd.f32 %v2242, %v2252
    %v2255 = vxor.u32 %v2254, 2147483648
    %v2256 = vmul.f32 %v2255, 1.442695
    %v2257 = vpow.pop %v2256
    %v2258 = vadd.f32 %v2257, 1.0
    %v2259 = vrcp.pop %v2258
    %v2260 = vmul.f32 1.0, %v2259
    %v2261 = vmul.f32 %v2260, 2.0
    %v2262 = vsub.f32 %v2261, 1.0
    %2264 = vrot.lane.b32.xlu0 %v2138, 32
    %v2265 = vpop.permute.xlu0 %2264
    %v2267 = vmul.f32 %v2260, %v2265
    %2269 = vrot.lane.b32.xlu0 %v2262, 64
    %v2270 = vpop.permute.xlu0 %2269
    %v2272 = vmul.f32 %v2260, %v2270
    %2274 = vrot.lane.b32.xlu0 %v2272, 32
    %v2275 = vpop.permute.xlu0 %2274
    %v2277 = vadd.f32 %v2267, %v2275
    %v2278 = vtanh.pop %v2277
    %2280 = vrot.lane.b32.xlu0 %v2278, 64
    %v2281 = vpop.permute.xlu0 %2280
    %v2283 = vmul.f32 %v2260, %v2281
    %2285 = vrot.lane.b32.xlu0 %v2283, 32
    %v2286 = vpop.permute.xlu0 %2285
    %2288 = vst.msk [vmem:[#allocation2] sm:$0xff] %vm85, %v2286
    %2290 = vrot.lane.b32.xlu0 %v2277, 96
    %v2291 = vpop.permute.xlu0 %2290
    %2293 = vst.msk [vmem:[#allocation3] sm:$0xff] %vm85, %v2291
    %v2294 = vld [vmem:[%s224] sm:$0xff]
    %v2295 = vld [vmem:[%s226] sm:$0xff]
    %v2296 = vpack.c.bf16 %v2283, %v2283
    %v2297 = vld [vmem:[%s6] sm:$0xf]
    %v2298 = vld [vmem:[%s6 + $0x4] sm:$0xf]
    %v2299 = vld [vmem:[%s6 + $0x8] sm:$0xf]
    %v2300 = vld [vmem:[%s6 + $0xc] sm:$0xf]
    %v2301 = vpack.c.bf16 %v2294, %v2294
    %v2302 = vld [vmem:[%s7] sm:$0xf]
    %v2303 = vld [vmem:[%s7 + $0x4] sm:$0xf]
    %v2304 = vld [vmem:[%s7 + $0x8] sm:$0xf]
    %v2305 = vld [vmem:[%s7 + $0xc] sm:$0xf]
    %v2310 = vunpack.c.l.b16 %v2302
    %v2311 = vunpack.c.l.b16 %v2303
    %v2312 = vunpack.c.l.b16 %v2304
    %v2313 = vunpack.c.l.b16 %v2305
    %v2314 = vpack.c.b16 %v2311, %v2310
    %v2315 = vpack.c.b16 %v2313, %v2312
    %v2319 = vsel %vm85, %v2301, 0
    %2321 = vmatprep.subr.bf16.mxu0 0
    %2322 = vmatpush1.bf16.msra.mxu0 %v2314
    %2323 = vmatprep.subr.bf16.mxu0 0
    %2324 = vmatpush1.bf16.msra.mxu0 %v2315
    %2325 = vmatprep.subr.bf16.mxu0 0
    %2326 = vmatpush1.bf16.msra.mxu0 0
    %2327 = vmatprep.subr.bf16.mxu0 0
    %2328 = vmatpush1.bf16.msra.mxu0 0
    %2329 = vmatprep.subr.bf16.mxu0 0
    %2330 = vmatpush1.bf16.msra.mxu0 0
    %2331 = vmatprep.subr.bf16.mxu0 0
    %2332 = vmatpush1.bf16.msra.mxu0 0
    %2333 = vmatprep.subr.bf16.mxu0 0
    %2334 = vmatpush1.bf16.msra.mxu0 0
    %2335 = vmatprep.subr.bf16.mxu0 0
    %2336 = vmatpush1.bf16.msra.mxu0 0
    %2337 = vmatprep.subr.bf16.mxu0 0
    %2338 = vmatpush1.bf16.msra.mxu0 0
    %2339 = vmatprep.subr.bf16.mxu0 0
    %2340 = vmatpush1.bf16.msra.mxu0 0
    %2341 = vmatprep.subr.bf16.mxu0 0
    %2342 = vmatpush1.bf16.msra.mxu0 0
    %2343 = vmatprep.subr.bf16.mxu0 0
    %2344 = vmatpush1.bf16.msra.mxu0 0
    %2345 = vmatprep.subr.bf16.mxu0 0
    %2346 = vmatpush1.bf16.msra.mxu0 0
    %2347 = vmatprep.subr.bf16.mxu0 0
    %2348 = vmatpush1.bf16.msra.mxu0 0
    %2349 = vmatprep.subr.bf16.mxu0 0
    %2350 = vmatpush1.bf16.msra.mxu0 0
    %2351 = vmatprep.subr.bf16.mxu0 0
    %2352 = vmatpush1.bf16.msra.mxu0 0
    %2353 = vmatprep.mubr.bf16.mxu0 0
    %2354 = vmatmul.mubr.bf16.gmra.mrb[0].mxu0 %v2319
    %v2355 = vpop.f32.mrb[0].mxu0
    %v2356 = vadd.f32 0.0, %v2355
    %v2357 = vpop.f32.mrb[0].mxu0
    %v2358 = vpop.f32.mrb[0].mxu0
    %v2359 = vpop.f32.mrb[0].mxu0
    %2360 = vdwg.mxu0
    %2362 = vrot.lane.b32.xlu0 %v2296, 32
    %v2363 = vpop.permute.xlu0 %2362
    %v2368 = vunpack.c.l.b16 %v2297
    %v2369 = vunpack.c.l.b16 %v2298
    %v2370 = vunpack.c.l.b16 %v2299
    %v2371 = vunpack.c.l.b16 %v2300
    %v2372 = vpack.c.b16 %v2369, %v2368
    %v2373 = vpack.c.b16 %v2371, %v2370
    %v2377 = vsel %vm85, %v2363, 0
    %2379 = vmatprep.subr.bf16.mxu0 0
    %2380 = vmatpush1.bf16.msra.mxu0 %v2372
    %2381 = vmatprep.subr.bf16.mxu0 0
    %2382 = vmatpush1.bf16.msra.mxu0 %v2373
    %2383 = vmatprep.subr.bf16.mxu0 0
    %2384 = vmatpush1.bf16.msra.mxu0 0
    %2385 = vmatprep.subr.bf16.mxu0 0
    %2386 = vmatpush1.bf16.msra.mxu0 0
    %2387 = vmatprep.subr.bf16.mxu0 0
    %2388 = vmatpush1.bf16.msra.mxu0 0
    %2389 = vmatprep.subr.bf16.mxu0 0
    %2390 = vmatpush1.bf16.msra.mxu0 0
    %2391 = vmatprep.subr.bf16.mxu0 0
    %2392 = vmatpush1.bf16.msra.mxu0 0
    %2393 = vmatprep.subr.bf16.mxu0 0
    %2394 = vmatpush1.bf16.msra.mxu0 0
    %2395 = vmatprep.subr.bf16.mxu0 0
    %2396 = vmatpush1.bf16.msra.mxu0 0
    %2397 = vmatprep.subr.bf16.mxu0 0
    %2398 = vmatpush1.bf16.msra.mxu0 0
    %2399 = vmatprep.subr.bf16.mxu0 0
    %2400 = vmatpush1.bf16.msra.mxu0 0
    %2401 = vmatprep.subr.bf16.mxu0 0
    %2402 = vmatpush1.bf16.msra.mxu0 0
    %2403 = vmatprep.subr.bf16.mxu0 0
    %2404 = vmatpush1.bf16.msra.mxu0 0
    %2405 = vmatprep.subr.bf16.mxu0 0
    %2406 = vmatpush1.bf16.msra.mxu0 0
    %2407 = vmatprep.subr.bf16.mxu0 0
    %2408 = vmatpush1.bf16.msra.mxu0 0
    %2409 = vmatprep.subr.bf16.mxu0 0
    %2410 = vmatpush1.bf16.msra.mxu0 0
    %2411 = vmatprep.mubr.bf16.mxu0 0
    %2412 = vmatmul.mubr.bf16.gmra.mrb[0].mxu0 %v2377
    %v2413 = vpop.f32.mrb[0].mxu0
    %v2414 = vadd.f32 %v2356, %v2413
    %v2415 = vpop.f32.mrb[0].mxu0
    %v2416 = vpop.f32.mrb[0].mxu0
    %v2417 = vpop.f32.mrb[0].mxu0
    %2418 = vdwg.mxu0
    %v2419 = vld [vmem:[%s8] sm:$0x1]
    %v2421 = vlaneseq
    %v2422 = vshrl.u32 %v2421, 7
    %v2423 = vsub.s32 0, %v2422
    %v2424 = vrot.slane %v2419, %v2423
    %v2426 = vadd.f32 %v2414, %v2424
    %v2427 = vxor.u32 %v2426, 2147483648
    %v2428 = vmul.f32 %v2427, 1.442695
    %v2429 = vpow.pop %v2428
    %v2430 = vadd.f32 %v2429, 1.0
    %v2431 = vrcp.pop %v2430
    %v2432 = vmul.f32 1.0, %v2431
    %v2433 = vmul.f32 %v2432, 2.0
    %v2434 = vsub.f32 %v2433, 1.0
    %2436 = vrot.lane.b32.xlu0 %v2295, 32
    %v2437 = vpop.permute.xlu0 %2436
    %v2439 = vmul.f32 %v2432, %v2437
    %2441 = vrot.lane.b32.xlu0 %v2434, 64
    %v2442 = vpop.permute.xlu0 %2441
    %v2444 = vmul.f32 %v2432, %v2442
    %2446 = vrot.lane.b32.xlu0 %v2444, 32
    %v2447 = vpop.permute.xlu0 %2446
    %v2449 = vadd.f32 %v2439, %v2447
    %v2450 = vtanh.pop %v2449
    %2452 = vrot.lane.b32.xlu0 %v2450, 64
    %v2453 = vpop.permute.xlu0 %2452
    %v2455 = vmul.f32 %v2432, %v2453
    %2457 = vrot.lane.b32.xlu0 %v2455, 32
    %v2458 = vpop.permute.xlu0 %2457
    %2460 = vst.msk [vmem:[%s224] sm:$0xff] %vm85, %v2458
    %2462 = vrot.lane.b32.xlu0 %v2449, 96
    %v2463 = vpop.permute.xlu0 %2462
    %2465 = vst.msk [vmem:[%s226] sm:$0xff] %vm85, %v2463
    %v2466 = vpack.c.bf16 %v2455, %v2455
    %v2467 = vld [vmem:[%s9] sm:$0xf]
    %v2468 = vld [vmem:[%s9 + $0x4] sm:$0xf]
    %v2469 = vld [vmem:[%s9 + $0x8] sm:$0xf]
    %v2470 = vld [vmem:[%s9 + $0xc] sm:$0xf]
    %2472 = vrot.lane.b32.xlu0 %v2466, 32
    %v2473 = vpop.permute.xlu0 %2472
    %v2478 = vunpack.c.l.b16 %v2467
    %v2479 = vunpack.c.l.b16 %v2468
    %v2480 = vunpack.c.l.b16 %v2469
    %v2481 = vunpack.c.l.b16 %v2470
    %v2482 = vpack.c.b16 %v2479, %v2478
    %v2483 = vpack.c.b16 %v2481, %v2480
    %v2487 = vsel %vm85, %v2473, 0
    %2489 = vmatprep.subr.bf16.mxu0 0
    %2490 = vmatpush1.bf16.msra.mxu0 %v2482
    %2491 = vmatprep.subr.bf16.mxu0 0
    %2492 = vmatpush1.bf16.msra.mxu0 %v2483
    %2493 = vmatprep.subr.bf16.mxu0 0
    %2494 = vmatpush1.bf16.msra.mxu0 0
    %2495 = vmatprep.subr.bf16.mxu0 0
    %2496 = vmatpush1.bf16.msra.mxu0 0
    %2497 = vmatprep.subr.bf16.mxu0 0
    %2498 = vmatpush1.bf16.msra.mxu0 0
    %2499 = vmatprep.subr.bf16.mxu0 0
    %2500 = vmatpush1.bf16.msra.mxu0 0
    %2501 = vmatprep.subr.bf16.mxu0 0
    %2502 = vmatpush1.bf16.msra.mxu0 0
    %2503 = vmatprep.subr.bf16.mxu0 0
    %2504 = vmatpush1.bf16.msra.mxu0 0
    %2505 = vmatprep.subr.bf16.mxu0 0
    %2506 = vmatpush1.bf16.msra.mxu0 0
    %2507 = vmatprep.subr.bf16.mxu0 0
    %2508 = vmatpush1.bf16.msra.mxu0 0
    %2509 = vmatprep.subr.bf16.mxu0 0
    %2510 = vmatpush1.bf16.msra.mxu0 0
    %2511 = vmatprep.subr.bf16.mxu0 0
    %2512 = vmatpush1.bf16.msra.mxu0 0
    %2513 = vmatprep.subr.bf16.mxu0 0
    %2514 = vmatpush1.bf16.msra.mxu0 0
    %2515 = vmatprep.subr.bf16.mxu0 0
    %2516 = vmatpush1.bf16.msra.mxu0 0
    %2517 = vmatprep.subr.bf16.mxu0 0
    %2518 = vmatpush1.bf16.msra.mxu0 0
    %2519 = vmatprep.subr.bf16.mxu0 0
    %2520 = vmatpush1.bf16.msra.mxu0 0
    %2521 = vmatprep.mubr.bf16.mxu0 0
    %2522 = vmatmul.mubr.bf16.gmra.mrb[0].mxu0 %v2487
    %v2523 = vpop.f32.mrb[0].mxu0
    %v2524 = vadd.f32 0.0, %v2523
    %v2525 = vpop.f32.mrb[0].mxu0
    %v2526 = vpop.f32.mrb[0].mxu0
    %v2527 = vpop.f32.mrb[0].mxu0
    %2528 = vdwg.mxu0
    %v2529 = vtanh.pop %v2524
    %v2530 = vpack.c.bf16 %v2529, %v2529
    %v2531 = vld [vmem:[%s10] sm:$0xf]
    %v2532 = vld [vmem:[%s10 + $0x4] sm:$0xf]
    %v2533 = vld [vmem:[%s10 + $0x8] sm:$0xf]
    %v2534 = vld [vmem:[%s10 + $0xc] sm:$0xf]
    %v2539 = vunpack.c.l.b16 %v2531
    %v2540 = vunpack.c.l.b16 %v2532
    %v2541 = vunpack.c.l.b16 %v2533
    %v2542 = vunpack.c.l.b16 %v2534
    %v2543 = vpack.c.b16 %v2540, %v2539
    %v2544 = vpack.c.b16 %v2542, %v2541
    %v2548 = vsel %vm85, %v2530, 0
    %2550 = vmatprep.subr.bf16.mxu0 0
    %2551 = vmatpush1.bf16.msra.mxu0 %v2543
    %2552 = vmatprep.subr.bf16.mxu0 0
    %2553 = vmatpush1.bf16.msra.mxu0 %v2544
    %2554 = vmatprep.subr.bf16.mxu0 0
    %2555 = vmatpush1.bf16.msra.mxu0 0
    %2556 = vmatprep.subr.bf16.mxu0 0
    %2557 = vmatpush1.bf16.msra.mxu0 0
    %2558 = vmatprep.subr.bf16.mxu0 0
    %2559 = vmatpush1.bf16.msra.mxu0 0
    %2560 = vmatprep.subr.bf16.mxu0 0
    %2561 = vmatpush1.bf16.msra.mxu0 0
    %2562 = vmatprep.subr.bf16.mxu0 0
    %2563 = vmatpush1.bf16.msra.mxu0 0
    %2564 = vmatprep.subr.bf16.mxu0 0
    %2565 = vmatpush1.bf16.msra.mxu0 0
    %2566 = vmatprep.subr.bf16.mxu0 0
    %2567 = vmatpush1.bf16.msra.mxu0 0
    %2568 = vmatprep.subr.bf16.mxu0 0
    %2569 = vmatpush1.bf16.msra.mxu0 0
    %2570 = vmatprep.subr.bf16.mxu0 0
    %2571 = vmatpush1.bf16.msra.mxu0 0
    %2572 = vmatprep.subr.bf16.mxu0 0
    %2573 = vmatpush1.bf16.msra.mxu0 0
    %2574 = vmatprep.subr.bf16.mxu0 0
    %2575 = vmatpush1.bf16.msra.mxu0 0
    %2576 = vmatprep.subr.bf16.mxu0 0
    %2577 = vmatpush1.bf16.msra.mxu0 0
    %2578 = vmatprep.subr.bf16.mxu0 0
    %2579 = vmatpush1.bf16.msra.mxu0 0
    %2580 = vmatprep.subr.bf16.mxu0 0
    %2581 = vmatpush1.bf16.msra.mxu0 0
    %2582 = vmatprep.mubr.bf16.mxu0 0
    %2583 = vmatmul.mubr.bf16.gmra.mrb[0].mxu0 %v2548
    %v2584 = vpop.f32.mrb[0].mxu0
    %v2585 = vadd.f32 0.0, %v2584
    %v2586 = vpop.f32.mrb[0].mxu0
    %v2587 = vpop.f32.mrb[0].mxu0
    %v2588 = vpop.f32.mrb[0].mxu0
    %2589 = vdwg.mxu0
    %v2590 = vtanh.pop %v2585
    %v2591 = vpack.c.bf16 %v2590, %v2590
    %v2592 = vld [vmem:[%s11] sm:$0xf]
    %v2593 = vld [vmem:[%s11 + $0x4] sm:$0xf]
    %v2594 = vld [vmem:[%s12] sm:$0x1]
    %v2596 = vlaneseq
    %v2597 = vshrl.u32 %v2596, 7
    %v2598 = vsub.s32 0, %v2597
    %v2599 = vrot.slane %v2594, %v2598
    %v2603 = vunpack.c.l.b16 %v2592
    %v2604 = vunpack.c.l.b16 %v2593
    %v2605 = vpack.c.b16 %v2604, %v2603
    %v2608 = vsel %vm539, %v2591, 0
    %2610 = vmatprep.subr.bf16.mxu0 0
    %2611 = vmatpush1.bf16.msra.mxu0 %v2605
    %2612 = vmatprep.subr.bf16.mxu0 0
    %2613 = vmatpush1.bf16.msra.mxu0 0
    %2614 = vmatprep.subr.bf16.mxu0 0
    %2615 = vmatpush1.bf16.msra.mxu0 0
    %2616 = vmatprep.subr.bf16.mxu0 0
    %2617 = vmatpush1.bf16.msra.mxu0 0
    %2618 = vmatprep.subr.bf16.mxu0 0
    %2619 = vmatpush1.bf16.msra.mxu0 0
    %2620 = vmatprep.subr.bf16.mxu0 0
    %2621 = vmatpush1.bf16.msra.mxu0 0
    %2622 = vmatprep.subr.bf16.mxu0 0
    %2623 = vmatpush1.bf16.msra.mxu0 0
    %2624 = vmatprep.subr.bf16.mxu0 0
    %2625 = vmatpush1.bf16.msra.mxu0 0
    %2626 = vmatprep.subr.bf16.mxu0 0
    %2627 = vmatpush1.bf16.msra.mxu0 0
    %2628 = vmatprep.subr.bf16.mxu0 0
    %2629 = vmatpush1.bf16.msra.mxu0 0
    %2630 = vmatprep.subr.bf16.mxu0 0
    %2631 = vmatpush1.bf16.msra.mxu0 0
    %2632 = vmatprep.subr.bf16.mxu0 0
    %2633 = vmatpush1.bf16.msra.mxu0 0
    %2634 = vmatprep.subr.bf16.mxu0 0
    %2635 = vmatpush1.bf16.msra.mxu0 0
    %2636 = vmatprep.subr.bf16.mxu0 0
    %2637 = vmatpush1.bf16.msra.mxu0 0
    %2638 = vmatprep.subr.bf16.mxu0 0
    %2639 = vmatpush1.bf16.msra.mxu0 0
    %2640 = vmatprep.subr.bf16.mxu0 0
    %2641 = vmatpush1.bf16.msra.mxu0 0
    %2642 = vmatprep.mubr.bf16.mxu0 0
    %2643 = vmatmul.mubr.bf16.gmra.mrb[0].mxu0 %v2608
    %v2644 = vpop.f32.mrb[0].mxu0
    %v2645 = vadd.f32 %v2599, %v2644
    %v2646 = vpop.f32.mrb[0].mxu0
    %v2647 = vpop.f32.mrb[0].mxu0
    %v2648 = vpop.f32.mrb[0].mxu0
    %2649 = vdwg.mxu0
    %s2650 = scalar_lea.vmem [#allocation4], 32
    %2651 = vst.msk [vmem:[%s2650] sm:$0xff] %vm129, %v2645
    %s2652 = scalar_lea.vmem %s2, 40
    %v2653 = vld [vmem:[%s2652] sm:$0xff]
    %v2654 = vld [vmem:[#allocation2] sm:$0xff]
    %v2655 = vld [vmem:[#allocation3] sm:$0xff]
    %v2656 = vpack.c.bf16 %v2653, %v2653
    %v2657 = vld [vmem:[%s3] sm:$0xf]
    %v2658 = vpack.c.bf16 %v2654, %v2654
    %v2659 = vld [vmem:[%s4] sm:$0xf]
    %v2660 = vld [vmem:[%s4 + $0x4] sm:$0xf]
    %v2661 = vld [vmem:[%s4 + $0x8] sm:$0xf]
    %v2662 = vld [vmem:[%s4 + $0xc] sm:$0xf]
    %v2667 = vunpack.c.l.b16 %v2659
    %v2668 = vunpack.c.l.b16 %v2660
    %v2669 = vunpack.c.l.b16 %v2661
    %v2670 = vunpack.c.l.b16 %v2662
    %v2671 = vpack.c.b16 %v2668, %v2667
    %v2672 = vpack.c.b16 %v2670, %v2669
    %v2676 = vsel %vm85, %v2658, 0
    %2678 = vmatprep.subr.bf16.mxu0 0
    %2679 = vmatpush1.bf16.msra.mxu0 %v2671
    %2680 = vmatprep.subr.bf16.mxu0 0
    %2681 = vmatpush1.bf16.msra.mxu0 %v2672
    %2682 = vmatprep.subr.bf16.mxu0 0
    %2683 = vmatpush1.bf16.msra.mxu0 0
    %2684 = vmatprep.subr.bf16.mxu0 0
    %2685 = vmatpush1.bf16.msra.mxu0 0
    %2686 = vmatprep.subr.bf16.mxu0 0
    %2687 = vmatpush1.bf16.msra.mxu0 0
    %2688 = vmatprep.subr.bf16.mxu0 0
    %2689 = vmatpush1.bf16.msra.mxu0 0
    %2690 = vmatprep.subr.bf16.mxu0 0
    %2691 = vmatpush1.bf16.msra.mxu0 0
    %2692 = vmatprep.subr.bf16.mxu0 0
    %2693 = vmatpush1.bf16.msra.mxu0 0
    %2694 = vmatprep.subr.bf16.mxu0 0
    %2695 = vmatpush1.bf16.msra.mxu0 0
    %2696 = vmatprep.subr.bf16.mxu0 0
    %2697 = vmatpush1.bf16.msra.mxu0 0
    %2698 = vmatprep.subr.bf16.mxu0 0
    %2699 = vmatpush1.bf16.msra.mxu0 0
    %2700 = vmatprep.subr.bf16.mxu0 0
    %2701 = vmatpush1.bf16.msra.mxu0 0
    %2702 = vmatprep.subr.bf16.mxu0 0
    %2703 = vmatpush1.bf16.msra.mxu0 0
    %2704 = vmatprep.subr.bf16.mxu0 0
    %2705 = vmatpush1.bf16.msra.mxu0 0
    %2706 = vmatprep.subr.bf16.mxu0 0
    %2707 = vmatpush1.bf16.msra.mxu0 0
    %2708 = vmatprep.subr.bf16.mxu0 0
    %2709 = vmatpush1.bf16.msra.mxu0 0
    %2710 = vmatprep.mubr.bf16.mxu0 0
    %2711 = vmatmul.mubr.bf16.gmra.mrb[0].mxu0 %v2676
    %v2712 = vpop.f32.mrb[0].mxu0
    %v2713 = vadd.f32 0.0, %v2712
    %v2714 = vpop.f32.mrb[0].mxu0
    %v2715 = vpop.f32.mrb[0].mxu0
    %v2716 = vpop.f32.mrb[0].mxu0
    %2717 = vdwg.mxu0
    %v2719 = vsel %vm129, %v2656, 0
    %v2722 = vsel %vm133, %v2657, 0
    %2724 = vmatprep.subr.bf16.mxu0 0
    %2725 = vmatpush1.bf16.msra.mxu0 %v2722
    %2726 = vmatprep.subr.bf16.mxu0 0
    %2727 = vmatpush1.bf16.msra.mxu0 0
    %2728 = vmatprep.subr.bf16.mxu0 0
    %2729 = vmatpush1.bf16.msra.mxu0 0
    %2730 = vmatprep.subr.bf16.mxu0 0
    %2731 = vmatpush1.bf16.msra.mxu0 0
    %2732 = vmatprep.subr.bf16.mxu0 0
    %2733 = vmatpush1.bf16.msra.mxu0 0
    %2734 = vmatprep.subr.bf16.mxu0 0
    %2735 = vmatpush1.bf16.msra.mxu0 0
    %2736 = vmatprep.subr.bf16.mxu0 0
    %2737 = vmatpush1.bf16.msra.mxu0 0
    %2738 = vmatprep.subr.bf16.mxu0 0
    %2739 = vmatpush1.bf16.msra.mxu0 0
    %2740 = vmatprep.subr.bf16.mxu0 0
    %2741 = vmatpush1.bf16.msra.mxu0 0
    %2742 = vmatprep.subr.bf16.mxu0 0
    %2743 = vmatpush1.bf16.msra.mxu0 0
    %2744 = vmatprep.subr.bf16.mxu0 0
    %2745 = vmatpush1.bf16.msra.mxu0 0
    %2746 = vmatprep.subr.bf16.mxu0 0
    %2747 = vmatpush1.bf16.msra.mxu0 0
    %2748 = vmatprep.subr.bf16.mxu0 0
    %2749 = vmatpush1.bf16.msra.mxu0 0
    %2750 = vmatprep.subr.bf16.mxu0 0
    %2751 = vmatpush1.bf16.msra.mxu0 0
    %2752 = vmatprep.subr.bf16.mxu0 0
    %2753 = vmatpush1.bf16.msra.mxu0 0
    %2754 = vmatprep.subr.bf16.mxu0 0
    %2755 = vmatpush1.bf16.msra.mxu0 0
    %2756 = vmatprep.mubr.bf16.mxu0 0
    %2757 = vmatmul.mubr.bf16.gmra.mrb[0].mxu0 %v2719
    %v2758 = vpop.f32.mrb[0].mxu0
    %v2759 = vadd.f32 %v2713, %v2758
    %v2760 = vpop.f32.mrb[0].mxu0
    %v2761 = vpop.f32.mrb[0].mxu0
    %v2762 = vpop.f32.mrb[0].mxu0
    %2763 = vdwg.mxu0
    %v2764 = vld [vmem:[%s5] sm:$0x1]
    %v2766 = vlaneseq
    %v2767 = vshrl.u32 %v2766, 7
    %v2768 = vsub.s32 0, %v2767
    %v2769 = vrot.slane %v2764, %v2768
    %v2771 = vadd.f32 %v2759, %v2769
    %v2772 = vxor.u32 %v2771, 2147483648
    %v2773 = vmul.f32 %v2772, 1.442695
    %v2774 = vpow.pop %v2773
    %v2775 = vadd.f32 %v2774, 1.0
    %v2776 = vrcp.pop %v2775
    %v2777 = vmul.f32 1.0, %v2776
    %v2778 = vmul.f32 %v2777, 2.0
    %v2779 = vsub.f32 %v2778, 1.0
    %2781 = vrot.lane.b32.xlu0 %v2655, 32
    %v2782 = vpop.permute.xlu0 %2781
    %v2784 = vmul.f32 %v2777, %v2782
    %2786 = vrot.lane.b32.xlu0 %v2779, 64
    %v2787 = vpop.permute.xlu0 %2786
    %v2789 = vmul.f32 %v2777, %v2787
    %2791 = vrot.lane.b32.xlu0 %v2789, 32
    %v2792 = vpop.permute.xlu0 %2791
    %v2794 = vadd.f32 %v2784, %v2792
    %v2795 = vtanh.pop %v2794
    %2797 = vrot.lane.b32.xlu0 %v2795, 64
    %v2798 = vpop.permute.xlu0 %2797
    %v2800 = vmul.f32 %v2777, %v2798
    %2802 = vrot.lane.b32.xlu0 %v2800, 32
    %v2803 = vpop.permute.xlu0 %2802
    %2805 = vst.msk [vmem:[#allocation2] sm:$0xff] %vm85, %v2803
    %2807 = vrot.lane.b32.xlu0 %v2794, 96
    %v2808 = vpop.permute.xlu0 %2807
    %2810 = vst.msk [vmem:[#allocation3] sm:$0xff] %vm85, %v2808
    %v2811 = vld [vmem:[%s224] sm:$0xff]
    %v2812 = vld [vmem:[%s226] sm:$0xff]
    %v2813 = vpack.c.bf16 %v2800, %v2800
    %v2814 = vld [vmem:[%s6] sm:$0xf]
    %v2815 = vld [vmem:[%s6 + $0x4] sm:$0xf]
    %v2816 = vld [vmem:[%s6 + $0x8] sm:$0xf]
    %v2817 = vld [vmem:[%s6 + $0xc] sm:$0xf]
    %v2818 = vpack.c.bf16 %v2811, %v2811
    %v2819 = vld [vmem:[%s7] sm:$0xf]
    %v2820 = vld [vmem:[%s7 + $0x4] sm:$0xf]
    %v2821 = vld [vmem:[%s7 + $0x8] sm:$0xf]
    %v2822 = vld [vmem:[%s7 + $0xc] sm:$0xf]
    %v2827 = vunpack.c.l.b16 %v2819
    %v2828 = vunpack.c.l.b16 %v2820
    %v2829 = vunpack.c.l.b16 %v2821
    %v2830 = vunpack.c.l.b16 %v2822
    %v2831 = vpack.c.b16 %v2828, %v2827
    %v2832 = vpack.c.b16 %v2830, %v2829
    %v2836 = vsel %vm85, %v2818, 0
    %2838 = vmatprep.subr.bf16.mxu0 0
    %2839 = vmatpush1.bf16.msra.mxu0 %v2831
    %2840 = vmatprep.subr.bf16.mxu0 0
    %2841 = vmatpush1.bf16.msra.mxu0 %v2832
    %2842 = vmatprep.subr.bf16.mxu0 0
    %2843 = vmatpush1.bf16.msra.mxu0 0
    %2844 = vmatprep.subr.bf16.mxu0 0
    %2845 = vmatpush1.bf16.msra.mxu0 0
    %2846 = vmatprep.subr.bf16.mxu0 0
    %2847 = vmatpush1.bf16.msra.mxu0 0
    %2848 = vmatprep.subr.bf16.mxu0 0
    %2849 = vmatpush1.bf16.msra.mxu0 0
    %2850 = vmatprep.subr.bf16.mxu0 0
    %2851 = vmatpush1.bf16.msra.mxu0 0
    %2852 = vmatprep.subr.bf16.mxu0 0
    %2853 = vmatpush1.bf16.msra.mxu0 0
    %2854 = vmatprep.subr.bf16.mxu0 0
    %2855 = vmatpush1.bf16.msra.mxu0 0
    %2856 = vmatprep.subr.bf16.mxu0 0
    %2857 = vmatpush1.bf16.msra.mxu0 0
    %2858 = vmatprep.subr.bf16.mxu0 0
    %2859 = vmatpush1.bf16.msra.mxu0 0
    %2860 = vmatprep.subr.bf16.mxu0 0
    %2861 = vmatpush1.bf16.msra.mxu0 0
    %2862 = vmatprep.subr.bf16.mxu0 0
    %2863 = vmatpush1.bf16.msra.mxu0 0
    %2864 = vmatprep.subr.bf16.mxu0 0
    %2865 = vmatpush1.bf16.msra.mxu0 0
    %2866 = vmatprep.subr.bf16.mxu0 0
    %2867 = vmatpush1.bf16.msra.mxu0 0
    %2868 = vmatprep.subr.bf16.mxu0 0
    %2869 = vmatpush1.bf16.msra.mxu0 0
    %2870 = vmatprep.mubr.bf16.mxu0 0
    %2871 = vmatmul.mubr.bf16.gmra.mrb[0].mxu0 %v2836
    %v2872 = vpop.f32.mrb[0].mxu0
    %v2873 = vadd.f32 0.0, %v2872
    %v2874 = vpop.f32.mrb[0].mxu0
    %v2875 = vpop.f32.mrb[0].mxu0
    %v2876 = vpop.f32.mrb[0].mxu0
    %2877 = vdwg.mxu0
    %2879 = vrot.lane.b32.xlu0 %v2813, 32
    %v2880 = vpop.permute.xlu0 %2879
    %v2885 = vunpack.c.l.b16 %v2814
    %v2886 = vunpack.c.l.b16 %v2815
    %v2887 = vunpack.c.l.b16 %v2816
    %v2888 = vunpack.c.l.b16 %v2817
    %v2889 = vpack.c.b16 %v2886, %v2885
    %v2890 = vpack.c.b16 %v2888, %v2887
    %v2894 = vsel %vm85, %v2880, 0
    %2896 = vmatprep.subr.bf16.mxu0 0
    %2897 = vmatpush1.bf16.msra.mxu0 %v2889
    %2898 = vmatprep.subr.bf16.mxu0 0
    %2899 = vmatpush1.bf16.msra.mxu0 %v2890
    %2900 = vmatprep.subr.bf16.mxu0 0
    %2901 = vmatpush1.bf16.msra.mxu0 0
    %2902 = vmatprep.subr.bf16.mxu0 0
    %2903 = vmatpush1.bf16.msra.mxu0 0
    %2904 = vmatprep.subr.bf16.mxu0 0
    %2905 = vmatpush1.bf16.msra.mxu0 0
    %2906 = vmatprep.subr.bf16.mxu0 0
    %2907 = vmatpush1.bf16.msra.mxu0 0
    %2908 = vmatprep.subr.bf16.mxu0 0
    %2909 = vmatpush1.bf16.msra.mxu0 0
    %2910 = vmatprep.subr.bf16.mxu0 0
    %2911 = vmatpush1.bf16.msra.mxu0 0
    %2912 = vmatprep.subr.bf16.mxu0 0
    %2913 = vmatpush1.bf16.msra.mxu0 0
    %2914 = vmatprep.subr.bf16.mxu0 0
    %2915 = vmatpush1.bf16.msra.mxu0 0
    %2916 = vmatprep.subr.bf16.mxu0 0
    %2917 = vmatpush1.bf16.msra.mxu0 0
    %2918 = vmatprep.subr.bf16.mxu0 0
    %2919 = vmatpush1.bf16.msra.mxu0 0
    %2920 = vmatprep.subr.bf16.mxu0 0
    %2921 = vmatpush1.bf16.msra.mxu0 0
    %2922 = vmatprep.subr.bf16.mxu0 0
    %2923 = vmatpush1.bf16.msra.mxu0 0
    %2924 = vmatprep.subr.bf16.mxu0 0
    %2925 = vmatpush1.bf16.msra.mxu0 0
    %2926 = vmatprep.subr.bf16.mxu0 0
    %2927 = vmatpush1.bf16.msra.mxu0 0
    %2928 = vmatprep.mubr.bf16.mxu0 0
    %2929 = vmatmul.mubr.bf16.gmra.mrb[0].mxu0 %v2894
    %v2930 = vpop.f32.mrb[0].mxu0
    %v2931 = vadd.f32 %v2873, %v2930
    %v2932 = vpop.f32.mrb[0].mxu0
    %v2933 = vpop.f32.mrb[0].mxu0
    %v2934 = vpop.f32.mrb[0].mxu0
    %2935 = vdwg.mxu0
    %v2936 = vld [vmem:[%s8] sm:$0x1]
    %v2938 = vlaneseq
    %v2939 = vshrl.u32 %v2938, 7
    %v2940 = vsub.s32 0, %v2939
    %v2941 = vrot.slane %v2936, %v2940
    %v2943 = vadd.f32 %v2931, %v2941
    %v2944 = vxor.u32 %v2943, 2147483648
    %v2945 = vmul.f32 %v2944, 1.442695
    %v2946 = vpow.pop %v2945
    %v2947 = vadd.f32 %v2946, 1.0
    %v2948 = vrcp.pop %v2947
    %v2949 = vmul.f32 1.0, %v2948
    %v2950 = vmul.f32 %v2949, 2.0
    %v2951 = vsub.f32 %v2950, 1.0
    %2953 = vrot.lane.b32.xlu0 %v2812, 32
    %v2954 = vpop.permute.xlu0 %2953
    %v2956 = vmul.f32 %v2949, %v2954
    %2958 = vrot.lane.b32.xlu0 %v2951, 64
    %v2959 = vpop.permute.xlu0 %2958
    %v2961 = vmul.f32 %v2949, %v2959
    %2963 = vrot.lane.b32.xlu0 %v2961, 32
    %v2964 = vpop.permute.xlu0 %2963
    %v2966 = vadd.f32 %v2956, %v2964
    %v2967 = vtanh.pop %v2966
    %2969 = vrot.lane.b32.xlu0 %v2967, 64
    %v2970 = vpop.permute.xlu0 %2969
    %v2972 = vmul.f32 %v2949, %v2970
    %2974 = vrot.lane.b32.xlu0 %v2972, 32
    %v2975 = vpop.permute.xlu0 %2974
    %2977 = vst.msk [vmem:[%s224] sm:$0xff] %vm85, %v2975
    %2979 = vrot.lane.b32.xlu0 %v2966, 96
    %v2980 = vpop.permute.xlu0 %2979
    %2982 = vst.msk [vmem:[%s226] sm:$0xff] %vm85, %v2980
    %v2983 = vpack.c.bf16 %v2972, %v2972
    %v2984 = vld [vmem:[%s9] sm:$0xf]
    %v2985 = vld [vmem:[%s9 + $0x4] sm:$0xf]
    %v2986 = vld [vmem:[%s9 + $0x8] sm:$0xf]
    %v2987 = vld [vmem:[%s9 + $0xc] sm:$0xf]
    %2989 = vrot.lane.b32.xlu0 %v2983, 32
    %v2990 = vpop.permute.xlu0 %2989
    %v2995 = vunpack.c.l.b16 %v2984
    %v2996 = vunpack.c.l.b16 %v2985
    %v2997 = vunpack.c.l.b16 %v2986
    %v2998 = vunpack.c.l.b16 %v2987
    %v2999 = vpack.c.b16 %v2996, %v2995
    %v3000 = vpack.c.b16 %v2998, %v2997
    %v3004 = vsel %vm85, %v2990, 0
    %3006 = vmatprep.subr.bf16.mxu0 0
    %3007 = vmatpush1.bf16.msra.mxu0 %v2999
    %3008 = vmatprep.subr.bf16.mxu0 0
    %3009 = vmatpush1.bf16.msra.mxu0 %v3000
    %3010 = vmatprep.subr.bf16.mxu0 0
    %3011 = vmatpush1.bf16.msra.mxu0 0
    %3012 = vmatprep.subr.bf16.mxu0 0
    %3013 = vmatpush1.bf16.msra.mxu0 0
    %3014 = vmatprep.subr.bf16.mxu0 0
    %3015 = vmatpush1.bf16.msra.mxu0 0
    %3016 = vmatprep.subr.bf16.mxu0 0
    %3017 = vmatpush1.bf16.msra.mxu0 0
    %3018 = vmatprep.subr.bf16.mxu0 0
    %3019 = vmatpush1.bf16.msra.mxu0 0
    %3020 = vmatprep.subr.bf16.mxu0 0
    %3021 = vmatpush1.bf16.msra.mxu0 0
    %3022 = vmatprep.subr.bf16.mxu0 0
    %3023 = vmatpush1.bf16.msra.mxu0 0
    %3024 = vmatprep.subr.bf16.mxu0 0
    %3025 = vmatpush1.bf16.msra.mxu0 0
    %3026 = vmatprep.subr.bf16.mxu0 0
    %3027 = vmatpush1.bf16.msra.mxu0 0
    %3028 = vmatprep.subr.bf16.mxu0 0
    %3029 = vmatpush1.bf16.msra.mxu0 0
    %3030 = vmatprep.subr.bf16.mxu0 0
    %3031 = vmatpush1.bf16.msra.mxu0 0
    %3032 = vmatprep.subr.bf16.mxu0 0
    %3033 = vmatpush1.bf16.msra.mxu0 0
    %3034 = vmatprep.subr.bf16.mxu0 0
    %3035 = vmatpush1.bf16.msra.mxu0 0
    %3036 = vmatprep.subr.bf16.mxu0 0
    %3037 = vmatpush1.bf16.msra.mxu0 0
    %3038 = vmatprep.mubr.bf16.mxu0 0
    %3039 = vmatmul.mubr.bf16.gmra.mrb[0].mxu0 %v3004
    %v3040 = vpop.f32.mrb[0].mxu0
    %v3041 = vadd.f32 0.0, %v3040
    %v3042 = vpop.f32.mrb[0].mxu0
    %v3043 = vpop.f32.mrb[0].mxu0
    %v3044 = vpop.f32.mrb[0].mxu0
    %3045 = vdwg.mxu0
    %v3046 = vtanh.pop %v3041
    %v3047 = vpack.c.bf16 %v3046, %v3046
    %v3048 = vld [vmem:[%s10] sm:$0xf]
    %v3049 = vld [vmem:[%s10 + $0x4] sm:$0xf]
    %v3050 = vld [vmem:[%s10 + $0x8] sm:$0xf]
    %v3051 = vld [vmem:[%s10 + $0xc] sm:$0xf]
    %v3056 = vunpack.c.l.b16 %v3048
    %v3057 = vunpack.c.l.b16 %v3049
    %v3058 = vunpack.c.l.b16 %v3050
    %v3059 = vunpack.c.l.b16 %v3051
    %v3060 = vpack.c.b16 %v3057, %v3056
    %v3061 = vpack.c.b16 %v3059, %v3058
    %v3065 = vsel %vm85, %v3047, 0
    %3067 = vmatprep.subr.bf16.mxu0 0
    %3068 = vmatpush1.bf16.msra.mxu0 %v3060
    %3069 = vmatprep.subr.bf16.mxu0 0
    %3070 = vmatpush1.bf16.msra.mxu0 %v3061
    %3071 = vmatprep.subr.bf16.mxu0 0
    %3072 = vmatpush1.bf16.msra.mxu0 0
    %3073 = vmatprep.subr.bf16.mxu0 0
    %3074 = vmatpush1.bf16.msra.mxu0 0
    %3075 = vmatprep.subr.bf16.mxu0 0
    %3076 = vmatpush1.bf16.msra.mxu0 0
    %3077 = vmatprep.subr.bf16.mxu0 0
    %3078 = vmatpush1.bf16.msra.mxu0 0
    %3079 = vmatprep.subr.bf16.mxu0 0
    %3080 = vmatpush1.bf16.msra.mxu0 0
    %3081 = vmatprep.subr.bf16.mxu0 0
    %3082 = vmatpush1.bf16.msra.mxu0 0
    %3083 = vmatprep.subr.bf16.mxu0 0
    %3084 = vmatpush1.bf16.msra.mxu0 0
    %3085 = vmatprep.subr.bf16.mxu0 0
    %3086 = vmatpush1.bf16.msra.mxu0 0
    %3087 = vmatprep.subr.bf16.mxu0 0
    %3088 = vmatpush1.bf16.msra.mxu0 0
    %3089 = vmatprep.subr.bf16.mxu0 0
    %3090 = vmatpush1.bf16.msra.mxu0 0
    %3091 = vmatprep.subr.bf16.mxu0 0
    %3092 = vmatpush1.bf16.msra.mxu0 0
    %3093 = vmatprep.subr.bf16.mxu0 0
    %3094 = vmatpush1.bf16.msra.mxu0 0
    %3095 = vmatprep.subr.bf16.mxu0 0
    %3096 = vmatpush1.bf16.msra.mxu0 0
    %3097 = vmatprep.subr.bf16.mxu0 0
    %3098 = vmatpush1.bf16.msra.mxu0 0
    %3099 = vmatprep.mubr.bf16.mxu0 0
    %3100 = vmatmul.mubr.bf16.gmra.mrb[0].mxu0 %v3065
    %v3101 = vpop.f32.mrb[0].mxu0
    %v3102 = vadd.f32 0.0, %v3101
    %v3103 = vpop.f32.mrb[0].mxu0
    %v3104 = vpop.f32.mrb[0].mxu0
    %v3105 = vpop.f32.mrb[0].mxu0
    %3106 = vdwg.mxu0
    %v3107 = vtanh.pop %v3102
    %v3108 = vpack.c.bf16 %v3107, %v3107
    %v3109 = vld [vmem:[%s11] sm:$0xf]
    %v3110 = vld [vmem:[%s11 + $0x4] sm:$0xf]
    %v3111 = vld [vmem:[%s12] sm:$0x1]
    %v3113 = vlaneseq
    %v3114 = vshrl.u32 %v3113, 7
    %v3115 = vsub.s32 0, %v3114
    %v3116 = vrot.slane %v3111, %v3115
    %v3120 = vunpack.c.l.b16 %v3109
    %v3121 = vunpack.c.l.b16 %v3110
    %v3122 = vpack.c.b16 %v3121, %v3120
    %v3125 = vsel %vm539, %v3108, 0
    %3127 = vmatprep.subr.bf16.mxu0 0
    %3128 = vmatpush1.bf16.msra.mxu0 %v3122
    %3129 = vmatprep.subr.bf16.mxu0 0
    %3130 = vmatpush1.bf16.msra.mxu0 0
    %3131 = vmatprep.subr.bf16.mxu0 0
    %3132 = vmatpush1.bf16.msra.mxu0 0
    %3133 = vmatprep.subr.bf16.mxu0 0
    %3134 = vmatpush1.bf16.msra.mxu0 0
    %3135 = vmatprep.subr.bf16.mxu0 0
    %3136 = vmatpush1.bf16.msra.mxu0 0
    %3137 = vmatprep.subr.bf16.mxu0 0
    %3138 = vmatpush1.bf16.msra.mxu0 0
    %3139 = vmatprep.subr.bf16.mxu0 0
    %3140 = vmatpush1.bf16.msra.mxu0 0
    %3141 = vmatprep.subr.bf16.mxu0 0
    %3142 = vmatpush1.bf16.msra.mxu0 0
    %3143 = vmatprep.subr.bf16.mxu0 0
    %3144 = vmatpush1.bf16.msra.mxu0 0
    %3145 = vmatprep.subr.bf16.mxu0 0
    %3146 = vmatpush1.bf16.msra.mxu0 0
    %3147 = vmatprep.subr.bf16.mxu0 0
    %3148 = vmatpush1.bf16.msra.mxu0 0
    %3149 = vmatprep.subr.bf16.mxu0 0
    %3150 = vmatpush1.bf16.msra.mxu0 0
    %3151 = vmatprep.subr.bf16.mxu0 0
    %3152 = vmatpush1.bf16.msra.mxu0 0
    %3153 = vmatprep.subr.bf16.mxu0 0
    %3154 = vmatpush1.bf16.msra.mxu0 0
    %3155 = vmatprep.subr.bf16.mxu0 0
    %3156 = vmatpush1.bf16.msra.mxu0 0
    %3157 = vmatprep.subr.bf16.mxu0 0
    %3158 = vmatpush1.bf16.msra.mxu0 0
    %3159 = vmatprep.mubr.bf16.mxu0 0
    %3160 = vmatmul.mubr.bf16.gmra.mrb[0].mxu0 %v3125
    %v3161 = vpop.f32.mrb[0].mxu0
    %v3162 = vadd.f32 %v3116, %v3161
    %v3163 = vpop.f32.mrb[0].mxu0
    %v3164 = vpop.f32.mrb[0].mxu0
    %v3165 = vpop.f32.mrb[0].mxu0
    %3166 = vdwg.mxu0
    %s3167 = scalar_lea.vmem [#allocation4], 40
    %3168 = vst.msk [vmem:[%s3167] sm:$0xff] %vm129, %v3162
    %s3169 = scalar_lea.vmem %s2, 48
    %v3170 = vld [vmem:[%s3169] sm:$0xff]
    %v3171 = vld [vmem:[#allocation2] sm:$0xff]
    %v3172 = vld [vmem:[#allocation3] sm:$0xff]
    %v3173 = vpack.c.bf16 %v3170, %v3170
    %v3174 = vld [vmem:[%s3] sm:$0xf]
    %v3175 = vpack.c.bf16 %v3171, %v3171
    %v3176 = vld [vmem:[%s4] sm:$0xf]
    %v3177 = vld [vmem:[%s4 + $0x4] sm:$0xf]
    %v3178 = vld [vmem:[%s4 + $0x8] sm:$0xf]
    %v3179 = vld [vmem:[%s4 + $0xc] sm:$0xf]
    %v3184 = vunpack.c.l.b16 %v3176
    %v3185 = vunpack.c.l.b16 %v3177
    %v3186 = vunpack.c.l.b16 %v3178
    %v3187 = vunpack.c.l.b16 %v3179
    %v3188 = vpack.c.b16 %v3185, %v3184
    %v3189 = vpack.c.b16 %v3187, %v3186
    %v3193 = vsel %vm85, %v3175, 0
    %3195 = vmatprep.subr.bf16.mxu0 0
    %3196 = vmatpush1.bf16.msra.mxu0 %v3188
    %3197 = vmatprep.subr.bf16.mxu0 0
    %3198 = vmatpush1.bf16.msra.mxu0 %v3189
    %3199 = vmatprep.subr.bf16.mxu0 0
    %3200 = vmatpush1.bf16.msra.mxu0 0
    %3201 = vmatprep.subr.bf16.mxu0 0
    %3202 = vmatpush1.bf16.msra.mxu0 0
    %3203 = vmatprep.subr.bf16.mxu0 0
    %3204 = vmatpush1.bf16.msra.mxu0 0
    %3205 = vmatprep.subr.bf16.mxu0 0
    %3206 = vmatpush1.bf16.msra.mxu0 0
    %3207 = vmatprep.subr.bf16.mxu0 0
    %3208 = vmatpush1.bf16.msra.mxu0 0
    %3209 = vmatprep.subr.bf16.mxu0 0
    %3210 = vmatpush1.bf16.msra.mxu0 0
    %3211 = vmatprep.subr.bf16.mxu0 0
    %3212 = vmatpush1.bf16.msra.mxu0 0
    %3213 = vmatprep.subr.bf16.mxu0 0
    %3214 = vmatpush1.bf16.msra.mxu0 0
    %3215 = vmatprep.subr.bf16.mxu0 0
    %3216 = vmatpush1.bf16.msra.mxu0 0
    %3217 = vmatprep.subr.bf16.mxu0 0
    %3218 = vmatpush1.bf16.msra.mxu0 0
    %3219 = vmatprep.subr.bf16.mxu0 0
    %3220 = vmatpush1.bf16.msra.mxu0 0
    %3221 = vmatprep.subr.bf16.mxu0 0
    %3222 = vmatpush1.bf16.msra.mxu0 0
    %3223 = vmatprep.subr.bf16.mxu0 0
    %3224 = vmatpush1.bf16.msra.mxu0 0
    %3225 = vmatprep.subr.bf16.mxu0 0
    %3226 = vmatpush1.bf16.msra.mxu0 0
    %3227 = vmatprep.mubr.bf16.mxu0 0
    %3228 = vmatmul.mubr.bf16.gmra.mrb[0].mxu0 %v3193
    %v3229 = vpop.f32.mrb[0].mxu0
    %v3230 = vadd.f32 0.0, %v3229
    %v3231 = vpop.f32.mrb[0].mxu0
    %v3232 = vpop.f32.mrb[0].mxu0
    %v3233 = vpop.f32.mrb[0].mxu0
    %3234 = vdwg.mxu0
    %v3236 = vsel %vm129, %v3173, 0
    %v3239 = vsel %vm133, %v3174, 0
    %3241 = vmatprep.subr.bf16.mxu0 0
    %3242 = vmatpush1.bf16.msra.mxu0 %v3239
    %3243 = vmatprep.subr.bf16.mxu0 0
    %3244 = vmatpush1.bf16.msra.mxu0 0
    %3245 = vmatprep.subr.bf16.mxu0 0
    %3246 = vmatpush1.bf16.msra.mxu0 0
    %3247 = vmatprep.subr.bf16.mxu0 0
    %3248 = vmatpush1.bf16.msra.mxu0 0
    %3249 = vmatprep.subr.bf16.mxu0 0
    %3250 = vmatpush1.bf16.msra.mxu0 0
    %3251 = vmatprep.subr.bf16.mxu0 0
    %3252 = vmatpush1.bf16.msra.mxu0 0
    %3253 = vmatprep.subr.bf16.mxu0 0
    %3254 = vmatpush1.bf16.msra.mxu0 0
    %3255 = vmatprep.subr.bf16.mxu0 0
    %3256 = vmatpush1.bf16.msra.mxu0 0
    %3257 = vmatprep.subr.bf16.mxu0 0
    %3258 = vmatpush1.bf16.msra.mxu0 0
    %3259 = vmatprep.subr.bf16.mxu0 0
    %3260 = vmatpush1.bf16.msra.mxu0 0
    %3261 = vmatprep.subr.bf16.mxu0 0
    %3262 = vmatpush1.bf16.msra.mxu0 0
    %3263 = vmatprep.subr.bf16.mxu0 0
    %3264 = vmatpush1.bf16.msra.mxu0 0
    %3265 = vmatprep.subr.bf16.mxu0 0
    %3266 = vmatpush1.bf16.msra.mxu0 0
    %3267 = vmatprep.subr.bf16.mxu0 0
    %3268 = vmatpush1.bf16.msra.mxu0 0
    %3269 = vmatprep.subr.bf16.mxu0 0
    %3270 = vmatpush1.bf16.msra.mxu0 0
    %3271 = vmatprep.subr.bf16.mxu0 0
    %3272 = vmatpush1.bf16.msra.mxu0 0
    %3273 = vmatprep.mubr.bf16.mxu0 0
    %3274 = vmatmul.mubr.bf16.gmra.mrb[0].mxu0 %v3236
    %v3275 = vpop.f32.mrb[0].mxu0
    %v3276 = vadd.f32 %v3230, %v3275
    %v3277 = vpop.f32.mrb[0].mxu0
    %v3278 = vpop.f32.mrb[0].mxu0
    %v3279 = vpop.f32.mrb[0].mxu0
    %3280 = vdwg.mxu0
    %v3281 = vld [vmem:[%s5] sm:$0x1]
    %v3283 = vlaneseq
    %v3284 = vshrl.u32 %v3283, 7
    %v3285 = vsub.s32 0, %v3284
    %v3286 = vrot.slane %v3281, %v3285
    %v3288 = vadd.f32 %v3276, %v3286
    %v3289 = vxor.u32 %v3288, 2147483648
    %v3290 = vmul.f32 %v3289, 1.442695
    %v3291 = vpow.pop %v3290
    %v3292 = vadd.f32 %v3291, 1.0
    %v3293 = vrcp.pop %v3292
    %v3294 = vmul.f32 1.0, %v3293
    %v3295 = vmul.f32 %v3294, 2.0
    %v3296 = vsub.f32 %v3295, 1.0
    %3298 = vrot.lane.b32.xlu0 %v3172, 32
    %v3299 = vpop.permute.xlu0 %3298
    %v3301 = vmul.f32 %v3294, %v3299
    %3303 = vrot.lane.b32.xlu0 %v3296, 64
    %v3304 = vpop.permute.xlu0 %3303
    %v3306 = vmul.f32 %v3294, %v3304
    %3308 = vrot.lane.b32.xlu0 %v3306, 32
    %v3309 = vpop.permute.xlu0 %3308
    %v3311 = vadd.f32 %v3301, %v3309
    %v3312 = vtanh.pop %v3311
    %3314 = vrot.lane.b32.xlu0 %v3312, 64
    %v3315 = vpop.permute.xlu0 %3314
    %v3317 = vmul.f32 %v3294, %v3315
    %3319 = vrot.lane.b32.xlu0 %v3317, 32
    %v3320 = vpop.permute.xlu0 %3319
    %3322 = vst.msk [vmem:[#allocation2] sm:$0xff] %vm85, %v3320
    %3324 = vrot.lane.b32.xlu0 %v3311, 96
    %v3325 = vpop.permute.xlu0 %3324
    %3327 = vst.msk [vmem:[#allocation3] sm:$0xff] %vm85, %v3325
    %v3328 = vld [vmem:[%s224] sm:$0xff]
    %v3329 = vld [vmem:[%s226] sm:$0xff]
    %v3330 = vpack.c.bf16 %v3317, %v3317
    %v3331 = vld [vmem:[%s6] sm:$0xf]
    %v3332 = vld [vmem:[%s6 + $0x4] sm:$0xf]
    %v3333 = vld [vmem:[%s6 + $0x8] sm:$0xf]
    %v3334 = vld [vmem:[%s6 + $0xc] sm:$0xf]
    %v3335 = vpack.c.bf16 %v3328, %v3328
    %v3336 = vld [vmem:[%s7] sm:$0xf]
    %v3337 = vld [vmem:[%s7 + $0x4] sm:$0xf]
    %v3338 = vld [vmem:[%s7 + $0x8] sm:$0xf]
    %v3339 = vld [vmem:[%s7 + $0xc] sm:$0xf]
    %v3344 = vunpack.c.l.b16 %v3336
    %v3345 = vunpack.c.l.b16 %v3337
    %v3346 = vunpack.c.l.b16 %v3338
    %v3347 = vunpack.c.l.b16 %v3339
    %v3348 = vpack.c.b16 %v3345, %v3344
    %v3349 = vpack.c.b16 %v3347, %v3346
    %v3353 = vsel %vm85, %v3335, 0
    %3355 = vmatprep.subr.bf16.mxu0 0
    %3356 = vmatpush1.bf16.msra.mxu0 %v3348
    %3357 = vmatprep.subr.bf16.mxu0 0
    %3358 = vmatpush1.bf16.msra.mxu0 %v3349
    %3359 = vmatprep.subr.bf16.mxu0 0
    %3360 = vmatpush1.bf16.msra.mxu0 0
    %3361 = vmatprep.subr.bf16.mxu0 0
    %3362 = vmatpush1.bf16.msra.mxu0 0
    %3363 = vmatprep.subr.bf16.mxu0 0
    %3364 = vmatpush1.bf16.msra.mxu0 0
    %3365 = vmatprep.subr.bf16.mxu0 0
    %3366 = vmatpush1.bf16.msra.mxu0 0
    %3367 = vmatprep.subr.bf16.mxu0 0
    %3368 = vmatpush1.bf16.msra.mxu0 0
    %3369 = vmatprep.subr.bf16.mxu0 0
    %3370 = vmatpush1.bf16.msra.mxu0 0
    %3371 = vmatprep.subr.bf16.mxu0 0
    %3372 = vmatpush1.bf16.msra.mxu0 0
    %3373 = vmatprep.subr.bf16.mxu0 0
    %3374 = vmatpush1.bf16.msra.mxu0 0
    %3375 = vmatprep.subr.bf16.mxu0 0
    %3376 = vmatpush1.bf16.msra.mxu0 0
    %3377 = vmatprep.subr.bf16.mxu0 0
    %3378 = vmatpush1.bf16.msra.mxu0 0
    %3379 = vmatprep.subr.bf16.mxu0 0
    %3380 = vmatpush1.bf16.msra.mxu0 0
    %3381 = vmatprep.subr.bf16.mxu0 0
    %3382 = vmatpush1.bf16.msra.mxu0 0
    %3383 = vmatprep.subr.bf16.mxu0 0
    %3384 = vmatpush1.bf16.msra.mxu0 0
    %3385 = vmatprep.subr.bf16.mxu0 0
    %3386 = vmatpush1.bf16.msra.mxu0 0
    %3387 = vmatprep.mubr.bf16.mxu0 0
    %3388 = vmatmul.mubr.bf16.gmra.mrb[0].mxu0 %v3353
    %v3389 = vpop.f32.mrb[0].mxu0
    %v3390 = vadd.f32 0.0, %v3389
    %v3391 = vpop.f32.mrb[0].mxu0
    %v3392 = vpop.f32.mrb[0].mxu0
    %v3393 = vpop.f32.mrb[0].mxu0
    %3394 = vdwg.mxu0
    %3396 = vrot.lane.b32.xlu0 %v3330, 32
    %v3397 = vpop.permute.xlu0 %3396
    %v3402 = vunpack.c.l.b16 %v3331
    %v3403 = vunpack.c.l.b16 %v3332
    %v3404 = vunpack.c.l.b16 %v3333
    %v3405 = vunpack.c.l.b16 %v3334
    %v3406 = vpack.c.b16 %v3403, %v3402
    %v3407 = vpack.c.b16 %v3405, %v3404
    %v3411 = vsel %vm85, %v3397, 0
    %3413 = vmatprep.subr.bf16.mxu0 0
    %3414 = vmatpush1.bf16.msra.mxu0 %v3406
    %3415 = vmatprep.subr.bf16.mxu0 0
    %3416 = vmatpush1.bf16.msra.mxu0 %v3407
    %3417 = vmatprep.subr.bf16.mxu0 0
    %3418 = vmatpush1.bf16.msra.mxu0 0
    %3419 = vmatprep.subr.bf16.mxu0 0
    %3420 = vmatpush1.bf16.msra.mxu0 0
    %3421 = vmatprep.subr.bf16.mxu0 0
    %3422 = vmatpush1.bf16.msra.mxu0 0
    %3423 = vmatprep.subr.bf16.mxu0 0
    %3424 = vmatpush1.bf16.msra.mxu0 0
    %3425 = vmatprep.subr.bf16.mxu0 0
    %3426 = vmatpush1.bf16.msra.mxu0 0
    %3427 = vmatprep.subr.bf16.mxu0 0
    %3428 = vmatpush1.bf16.msra.mxu0 0
    %3429 = vmatprep.subr.bf16.mxu0 0
    %3430 = vmatpush1.bf16.msra.mxu0 0
    %3431 = vmatprep.subr.bf16.mxu0 0
    %3432 = vmatpush1.bf16.msra.mxu0 0
    %3433 = vmatprep.subr.bf16.mxu0 0
    %3434 = vmatpush1.bf16.msra.mxu0 0
    %3435 = vmatprep.subr.bf16.mxu0 0
    %3436 = vmatpush1.bf16.msra.mxu0 0
    %3437 = vmatprep.subr.bf16.mxu0 0
    %3438 = vmatpush1.bf16.msra.mxu0 0
    %3439 = vmatprep.subr.bf16.mxu0 0
    %3440 = vmatpush1.bf16.msra.mxu0 0
    %3441 = vmatprep.subr.bf16.mxu0 0
    %3442 = vmatpush1.bf16.msra.mxu0 0
    %3443 = vmatprep.subr.bf16.mxu0 0
    %3444 = vmatpush1.bf16.msra.mxu0 0
    %3445 = vmatprep.mubr.bf16.mxu0 0
    %3446 = vmatmul.mubr.bf16.gmra.mrb[0].mxu0 %v3411
    %v3447 = vpop.f32.mrb[0].mxu0
    %v3448 = vadd.f32 %v3390, %v3447
    %v3449 = vpop.f32.mrb[0].mxu0
    %v3450 = vpop.f32.mrb[0].mxu0
    %v3451 = vpop.f32.mrb[0].mxu0
    %3452 = vdwg.mxu0
    %v3453 = vld [vmem:[%s8] sm:$0x1]
    %v3455 = vlaneseq
    %v3456 = vshrl.u32 %v3455, 7
    %v3457 = vsub.s32 0, %v3456
    %v3458 = vrot.slane %v3453, %v3457
    %v3460 = vadd.f32 %v3448, %v3458
    %v3461 = vxor.u32 %v3460, 2147483648
    %v3462 = vmul.f32 %v3461, 1.442695
    %v3463 = vpow.pop %v3462
    %v3464 = vadd.f32 %v3463, 1.0
    %v3465 = vrcp.pop %v3464
    %v3466 = vmul.f32 1.0, %v3465
    %v3467 = vmul.f32 %v3466, 2.0
    %v3468 = vsub.f32 %v3467, 1.0
    %3470 = vrot.lane.b32.xlu0 %v3329, 32
    %v3471 = vpop.permute.xlu0 %3470
    %v3473 = vmul.f32 %v3466, %v3471
    %3475 = vrot.lane.b32.xlu0 %v3468, 64
    %v3476 = vpop.permute.xlu0 %3475
    %v3478 = vmul.f32 %v3466, %v3476
    %3480 = vrot.lane.b32.xlu0 %v3478, 32
    %v3481 = vpop.permute.xlu0 %3480
    %v3483 = vadd.f32 %v3473, %v3481
    %v3484 = vtanh.pop %v3483
    %3486 = vrot.lane.b32.xlu0 %v3484, 64
    %v3487 = vpop.permute.xlu0 %3486
    %v3489 = vmul.f32 %v3466, %v3487
    %3491 = vrot.lane.b32.xlu0 %v3489, 32
    %v3492 = vpop.permute.xlu0 %3491
    %3494 = vst.msk [vmem:[%s224] sm:$0xff] %vm85, %v3492
    %3496 = vrot.lane.b32.xlu0 %v3483, 96
    %v3497 = vpop.permute.xlu0 %3496
    %3499 = vst.msk [vmem:[%s226] sm:$0xff] %vm85, %v3497
    %v3500 = vpack.c.bf16 %v3489, %v3489
    %v3501 = vld [vmem:[%s9] sm:$0xf]
    %v3502 = vld [vmem:[%s9 + $0x4] sm:$0xf]
    %v3503 = vld [vmem:[%s9 + $0x8] sm:$0xf]
    %v3504 = vld [vmem:[%s9 + $0xc] sm:$0xf]
    %3506 = vrot.lane.b32.xlu0 %v3500, 32
    %v3507 = vpop.permute.xlu0 %3506
    %v3512 = vunpack.c.l.b16 %v3501
    %v3513 = vunpack.c.l.b16 %v3502
    %v3514 = vunpack.c.l.b16 %v3503
    %v3515 = vunpack.c.l.b16 %v3504
    %v3516 = vpack.c.b16 %v3513, %v3512
    %v3517 = vpack.c.b16 %v3515, %v3514
    %v3521 = vsel %vm85, %v3507, 0
    %3523 = vmatprep.subr.bf16.mxu0 0
    %3524 = vmatpush1.bf16.msra.mxu0 %v3516
    %3525 = vmatprep.subr.bf16.mxu0 0
    %3526 = vmatpush1.bf16.msra.mxu0 %v3517
    %3527 = vmatprep.subr.bf16.mxu0 0
    %3528 = vmatpush1.bf16.msra.mxu0 0
    %3529 = vmatprep.subr.bf16.mxu0 0
    %3530 = vmatpush1.bf16.msra.mxu0 0
    %3531 = vmatprep.subr.bf16.mxu0 0
    %3532 = vmatpush1.bf16.msra.mxu0 0
    %3533 = vmatprep.subr.bf16.mxu0 0
    %3534 = vmatpush1.bf16.msra.mxu0 0
    %3535 = vmatprep.subr.bf16.mxu0 0
    %3536 = vmatpush1.bf16.msra.mxu0 0
    %3537 = vmatprep.subr.bf16.mxu0 0
    %3538 = vmatpush1.bf16.msra.mxu0 0
    %3539 = vmatprep.subr.bf16.mxu0 0
    %3540 = vmatpush1.bf16.msra.mxu0 0
    %3541 = vmatprep.subr.bf16.mxu0 0
    %3542 = vmatpush1.bf16.msra.mxu0 0
    %3543 = vmatprep.subr.bf16.mxu0 0
    %3544 = vmatpush1.bf16.msra.mxu0 0
    %3545 = vmatprep.subr.bf16.mxu0 0
    %3546 = vmatpush1.bf16.msra.mxu0 0
    %3547 = vmatprep.subr.bf16.mxu0 0
    %3548 = vmatpush1.bf16.msra.mxu0 0
    %3549 = vmatprep.subr.bf16.mxu0 0
    %3550 = vmatpush1.bf16.msra.mxu0 0
    %3551 = vmatprep.subr.bf16.mxu0 0
    %3552 = vmatpush1.bf16.msra.mxu0 0
    %3553 = vmatprep.subr.bf16.mxu0 0
    %3554 = vmatpush1.bf16.msra.mxu0 0
    %3555 = vmatprep.mubr.bf16.mxu0 0
    %3556 = vmatmul.mubr.bf16.gmra.mrb[0].mxu0 %v3521
    %v3557 = vpop.f32.mrb[0].mxu0
    %v3558 = vadd.f32 0.0, %v3557
    %v3559 = vpop.f32.mrb[0].mxu0
    %v3560 = vpop.f32.mrb[0].mxu0
    %v3561 = vpop.f32.mrb[0].mxu0
    %3562 = vdwg.mxu0
    %v3563 = vtanh.pop %v3558
    %v3564 = vpack.c.bf16 %v3563, %v3563
    %v3565 = vld [vmem:[%s10] sm:$0xf]
    %v3566 = vld [vmem:[%s10 + $0x4] sm:$0xf]
    %v3567 = vld [vmem:[%s10 + $0x8] sm:$0xf]
    %v3568 = vld [vmem:[%s10 + $0xc] sm:$0xf]
    %v3573 = vunpack.c.l.b16 %v3565
    %v3574 = vunpack.c.l.b16 %v3566
    %v3575 = vunpack.c.l.b16 %v3567
    %v3576 = vunpack.c.l.b16 %v3568
    %v3577 = vpack.c.b16 %v3574, %v3573
    %v3578 = vpack.c.b16 %v3576, %v3575
    %v3582 = vsel %vm85, %v3564, 0
    %3584 = vmatprep.subr.bf16.mxu0 0
    %3585 = vmatpush1.bf16.msra.mxu0 %v3577
    %3586 = vmatprep.subr.bf16.mxu0 0
    %3587 = vmatpush1.bf16.msra.mxu0 %v3578
    %3588 = vmatprep.subr.bf16.mxu0 0
    %3589 = vmatpush1.bf16.msra.mxu0 0
    %3590 = vmatprep.subr.bf16.mxu0 0
    %3591 = vmatpush1.bf16.msra.mxu0 0
    %3592 = vmatprep.subr.bf16.mxu0 0
    %3593 = vmatpush1.bf16.msra.mxu0 0
    %3594 = vmatprep.subr.bf16.mxu0 0
    %3595 = vmatpush1.bf16.msra.mxu0 0
    %3596 = vmatprep.subr.bf16.mxu0 0
    %3597 = vmatpush1.bf16.msra.mxu0 0
    %3598 = vmatprep.subr.bf16.mxu0 0
    %3599 = vmatpush1.bf16.msra.mxu0 0
    %3600 = vmatprep.subr.bf16.mxu0 0
    %3601 = vmatpush1.bf16.msra.mxu0 0
    %3602 = vmatprep.subr.bf16.mxu0 0
    %3603 = vmatpush1.bf16.msra.mxu0 0
    %3604 = vmatprep.subr.bf16.mxu0 0
    %3605 = vmatpush1.bf16.msra.mxu0 0
    %3606 = vmatprep.subr.bf16.mxu0 0
    %3607 = vmatpush1.bf16.msra.mxu0 0
    %3608 = vmatprep.subr.bf16.mxu0 0
    %3609 = vmatpush1.bf16.msra.mxu0 0
    %3610 = vmatprep.subr.bf16.mxu0 0
    %3611 = vmatpush1.bf16.msra.mxu0 0
    %3612 = vmatprep.subr.bf16.mxu0 0
    %3613 = vmatpush1.bf16.msra.mxu0 0
    %3614 = vmatprep.subr.bf16.mxu0 0
    %3615 = vmatpush1.bf16.msra.mxu0 0
    %3616 = vmatprep.mubr.bf16.mxu0 0
    %3617 = vmatmul.mubr.bf16.gmra.mrb[0].mxu0 %v3582
    %v3618 = vpop.f32.mrb[0].mxu0
    %v3619 = vadd.f32 0.0, %v3618
    %v3620 = vpop.f32.mrb[0].mxu0
    %v3621 = vpop.f32.mrb[0].mxu0
    %v3622 = vpop.f32.mrb[0].mxu0
    %3623 = vdwg.mxu0
    %v3624 = vtanh.pop %v3619
    %v3625 = vpack.c.bf16 %v3624, %v3624
    %v3626 = vld [vmem:[%s11] sm:$0xf]
    %v3627 = vld [vmem:[%s11 + $0x4] sm:$0xf]
    %v3628 = vld [vmem:[%s12] sm:$0x1]
    %v3630 = vlaneseq
    %v3631 = vshrl.u32 %v3630, 7
    %v3632 = vsub.s32 0, %v3631
    %v3633 = vrot.slane %v3628, %v3632
    %v3637 = vunpack.c.l.b16 %v3626
    %v3638 = vunpack.c.l.b16 %v3627
    %v3639 = vpack.c.b16 %v3638, %v3637
    %v3642 = vsel %vm539, %v3625, 0
    %3644 = vmatprep.subr.bf16.mxu0 0
    %3645 = vmatpush1.bf16.msra.mxu0 %v3639
    %3646 = vmatprep.subr.bf16.mxu0 0
    %3647 = vmatpush1.bf16.msra.mxu0 0
    %3648 = vmatprep.subr.bf16.mxu0 0
    %3649 = vmatpush1.bf16.msra.mxu0 0
    %3650 = vmatprep.subr.bf16.mxu0 0
    %3651 = vmatpush1.bf16.msra.mxu0 0
    %3652 = vmatprep.subr.bf16.mxu0 0
    %3653 = vmatpush1.bf16.msra.mxu0 0
    %3654 = vmatprep.subr.bf16.mxu0 0
    %3655 = vmatpush1.bf16.msra.mxu0 0
    %3656 = vmatprep.subr.bf16.mxu0 0
    %3657 = vmatpush1.bf16.msra.mxu0 0
    %3658 = vmatprep.subr.bf16.mxu0 0
    %3659 = vmatpush1.bf16.msra.mxu0 0
    %3660 = vmatprep.subr.bf16.mxu0 0
    %3661 = vmatpush1.bf16.msra.mxu0 0
    %3662 = vmatprep.subr.bf16.mxu0 0
    %3663 = vmatpush1.bf16.msra.mxu0 0
    %3664 = vmatprep.subr.bf16.mxu0 0
    %3665 = vmatpush1.bf16.msra.mxu0 0
    %3666 = vmatprep.subr.bf16.mxu0 0
    %3667 = vmatpush1.bf16.msra.mxu0 0
    %3668 = vmatprep.subr.bf16.mxu0 0
    %3669 = vmatpush1.bf16.msra.mxu0 0
    %3670 = vmatprep.subr.bf16.mxu0 0
    %3671 = vmatpush1.bf16.msra.mxu0 0
    %3672 = vmatprep.subr.bf16.mxu0 0
    %3673 = vmatpush1.bf16.msra.mxu0 0
    %3674 = vmatprep.subr.bf16.mxu0 0
    %3675 = vmatpush1.bf16.msra.mxu0 0
    %3676 = vmatprep.mubr.bf16.mxu0 0
    %3677 = vmatmul.mubr.bf16.gmra.mrb[0].mxu0 %v3642
    %v3678 = vpop.f32.mrb[0].mxu0
    %v3679 = vadd.f32 %v3633, %v3678
    %v3680 = vpop.f32.mrb[0].mxu0
    %v3681 = vpop.f32.mrb[0].mxu0
    %v3682 = vpop.f32.mrb[0].mxu0
    %3683 = vdwg.mxu0
    %s3684 = scalar_lea.vmem [#allocation4], 48
    %3685 = vst.msk [vmem:[%s3684] sm:$0xff] %vm129, %v3679
    %s3686 = scalar_lea.vmem %s2, 56
    %v3687 = vld [vmem:[%s3686] sm:$0xff]
    %v3688 = vld [vmem:[#allocation2] sm:$0xff]
    %v3689 = vld [vmem:[#allocation3] sm:$0xff]
    %v3690 = vpack.c.bf16 %v3687, %v3687
    %v3691 = vld [vmem:[%s3] sm:$0xf]
    %v3692 = vpack.c.bf16 %v3688, %v3688
    %v3693 = vld [vmem:[%s4] sm:$0xf]
    %v3694 = vld [vmem:[%s4 + $0x4] sm:$0xf]
    %v3695 = vld [vmem:[%s4 + $0x8] sm:$0xf]
    %v3696 = vld [vmem:[%s4 + $0xc] sm:$0xf]
    %v3701 = vunpack.c.l.b16 %v3693
    %v3702 = vunpack.c.l.b16 %v3694
    %v3703 = vunpack.c.l.b16 %v3695
    %v3704 = vunpack.c.l.b16 %v3696
    %v3705 = vpack.c.b16 %v3702, %v3701
    %v3706 = vpack.c.b16 %v3704, %v3703
    %v3710 = vsel %vm85, %v3692, 0
    %3712 = vmatprep.subr.bf16.mxu0 0
    %3713 = vmatpush1.bf16.msra.mxu0 %v3705
    %3714 = vmatprep.subr.bf16.mxu0 0
    %3715 = vmatpush1.bf16.msra.mxu0 %v3706
    %3716 = vmatprep.subr.bf16.mxu0 0
    %3717 = vmatpush1.bf16.msra.mxu0 0
    %3718 = vmatprep.subr.bf16.mxu0 0
    %3719 = vmatpush1.bf16.msra.mxu0 0
    %3720 = vmatprep.subr.bf16.mxu0 0
    %3721 = vmatpush1.bf16.msra.mxu0 0
    %3722 = vmatprep.subr.bf16.mxu0 0
    %3723 = vmatpush1.bf16.msra.mxu0 0
    %3724 = vmatprep.subr.bf16.mxu0 0
    %3725 = vmatpush1.bf16.msra.mxu0 0
    %3726 = vmatprep.subr.bf16.mxu0 0
    %3727 = vmatpush1.bf16.msra.mxu0 0
    %3728 = vmatprep.subr.bf16.mxu0 0
    %3729 = vmatpush1.bf16.msra.mxu0 0
    %3730 = vmatprep.subr.bf16.mxu0 0
    %3731 = vmatpush1.bf16.msra.mxu0 0
    %3732 = vmatprep.subr.bf16.mxu0 0
    %3733 = vmatpush1.bf16.msra.mxu0 0
    %3734 = vmatprep.subr.bf16.mxu0 0
    %3735 = vmatpush1.bf16.msra.mxu0 0
    %3736 = vmatprep.subr.bf16.mxu0 0
    %3737 = vmatpush1.bf16.msra.mxu0 0
    %3738 = vmatprep.subr.bf16.mxu0 0
    %3739 = vmatpush1.bf16.msra.mxu0 0
    %3740 = vmatprep.subr.bf16.mxu0 0
    %3741 = vmatpush1.bf16.msra.mxu0 0
    %3742 = vmatprep.subr.bf16.mxu0 0
    %3743 = vmatpush1.bf16.msra.mxu0 0
    %3744 = vmatprep.mubr.bf16.mxu0 0
    %3745 = vmatmul.mubr.bf16.gmra.mrb[0].mxu0 %v3710
    %v3746 = vpop.f32.mrb[0].mxu0
    %v3747 = vadd.f32 0.0, %v3746
    %v3748 = vpop.f32.mrb[0].mxu0
    %v3749 = vpop.f32.mrb[0].mxu0
    %v3750 = vpop.f32.mrb[0].mxu0
    %3751 = vdwg.mxu0
    %v3753 = vsel %vm129, %v3690, 0
    %v3756 = vsel %vm133, %v3691, 0
    %3758 = vmatprep.subr.bf16.mxu0 0
    %3759 = vmatpush1.bf16.msra.mxu0 %v3756
    %3760 = vmatprep.subr.bf16.mxu0 0
    %3761 = vmatpush1.bf16.msra.mxu0 0
    %3762 = vmatprep.subr.bf16.mxu0 0
    %3763 = vmatpush1.bf16.msra.mxu0 0
    %3764 = vmatprep.subr.bf16.mxu0 0
    %3765 = vmatpush1.bf16.msra.mxu0 0
    %3766 = vmatprep.subr.bf16.mxu0 0
    %3767 = vmatpush1.bf16.msra.mxu0 0
    %3768 = vmatprep.subr.bf16.mxu0 0
    %3769 = vmatpush1.bf16.msra.mxu0 0
    %3770 = vmatprep.subr.bf16.mxu0 0
    %3771 = vmatpush1.bf16.msra.mxu0 0
    %3772 = vmatprep.subr.bf16.mxu0 0
    %3773 = vmatpush1.bf16.msra.mxu0 0
    %3774 = vmatprep.subr.bf16.mxu0 0
    %3775 = vmatpush1.bf16.msra.mxu0 0
    %3776 = vmatprep.subr.bf16.mxu0 0
    %3777 = vmatpush1.bf16.msra.mxu0 0
    %3778 = vmatprep.subr.bf16.mxu0 0
    %3779 = vmatpush1.bf16.msra.mxu0 0
    %3780 = vmatprep.subr.bf16.mxu0 0
    %3781 = vmatpush1.bf16.msra.mxu0 0
    %3782 = vmatprep.subr.bf16.mxu0 0
    %3783 = vmatpush1.bf16.msra.mxu0 0
    %3784 = vmatprep.subr.bf16.mxu0 0
    %3785 = vmatpush1.bf16.msra.mxu0 0
    %3786 = vmatprep.subr.bf16.mxu0 0
    %3787 = vmatpush1.bf16.msra.mxu0 0
    %3788 = vmatprep.subr.bf16.mxu0 0
    %3789 = vmatpush1.bf16.msra.mxu0 0
    %3790 = vmatprep.mubr.bf16.mxu0 0
    %3791 = vmatmul.mubr.bf16.gmra.mrb[0].mxu0 %v3753
    %v3792 = vpop.f32.mrb[0].mxu0
    %v3793 = vadd.f32 %v3747, %v3792
    %v3794 = vpop.f32.mrb[0].mxu0
    %v3795 = vpop.f32.mrb[0].mxu0
    %v3796 = vpop.f32.mrb[0].mxu0
    %3797 = vdwg.mxu0
    %v3798 = vld [vmem:[%s5] sm:$0x1]
    %v3800 = vlaneseq
    %v3801 = vshrl.u32 %v3800, 7
    %v3802 = vsub.s32 0, %v3801
    %v3803 = vrot.slane %v3798, %v3802
    %v3805 = vadd.f32 %v3793, %v3803
    %v3806 = vxor.u32 %v3805, 2147483648
    %v3807 = vmul.f32 %v3806, 1.442695
    %v3808 = vpow.pop %v3807
    %v3809 = vadd.f32 %v3808, 1.0
    %v3810 = vrcp.pop %v3809
    %v3811 = vmul.f32 1.0, %v3810
    %v3812 = vmul.f32 %v3811, 2.0
    %v3813 = vsub.f32 %v3812, 1.0
    %3815 = vrot.lane.b32.xlu0 %v3689, 32
    %v3816 = vpop.permute.xlu0 %3815
    %v3818 = vmul.f32 %v3811, %v3816
    %3820 = vrot.lane.b32.xlu0 %v3813, 64
    %v3821 = vpop.permute.xlu0 %3820
    %v3823 = vmul.f32 %v3811, %v3821
    %3825 = vrot.lane.b32.xlu0 %v3823, 32
    %v3826 = vpop.permute.xlu0 %3825
    %v3828 = vadd.f32 %v3818, %v3826
    %v3829 = vtanh.pop %v3828
    %3831 = vrot.lane.b32.xlu0 %v3829, 64
    %v3832 = vpop.permute.xlu0 %3831
    %v3834 = vmul.f32 %v3811, %v3832
    %3836 = vrot.lane.b32.xlu0 %v3834, 32
    %v3837 = vpop.permute.xlu0 %3836
    %3839 = vst.msk [vmem:[#allocation2] sm:$0xff] %vm85, %v3837
    %3841 = vrot.lane.b32.xlu0 %v3828, 96
    %v3842 = vpop.permute.xlu0 %3841
    %3844 = vst.msk [vmem:[#allocation3] sm:$0xff] %vm85, %v3842
    %v3845 = vld [vmem:[%s224] sm:$0xff]
    %v3846 = vld [vmem:[%s226] sm:$0xff]
    %v3847 = vpack.c.bf16 %v3834, %v3834
    %v3848 = vld [vmem:[%s6] sm:$0xf]
    %v3849 = vld [vmem:[%s6 + $0x4] sm:$0xf]
    %v3850 = vld [vmem:[%s6 + $0x8] sm:$0xf]
    %v3851 = vld [vmem:[%s6 + $0xc] sm:$0xf]
    %v3852 = vpack.c.bf16 %v3845, %v3845
    %v3853 = vld [vmem:[%s7] sm:$0xf]
    %v3854 = vld [vmem:[%s7 + $0x4] sm:$0xf]
    %v3855 = vld [vmem:[%s7 + $0x8] sm:$0xf]
    %v3856 = vld [vmem:[%s7 + $0xc] sm:$0xf]
    %v3861 = vunpack.c.l.b16 %v3853
    %v3862 = vunpack.c.l.b16 %v3854
    %v3863 = vunpack.c.l.b16 %v3855
    %v3864 = vunpack.c.l.b16 %v3856
    %v3865 = vpack.c.b16 %v3862, %v3861
    %v3866 = vpack.c.b16 %v3864, %v3863
    %v3870 = vsel %vm85, %v3852, 0
    %3872 = vmatprep.subr.bf16.mxu0 0
    %3873 = vmatpush1.bf16.msra.mxu0 %v3865
    %3874 = vmatprep.subr.bf16.mxu0 0
    %3875 = vmatpush1.bf16.msra.mxu0 %v3866
    %3876 = vmatprep.subr.bf16.mxu0 0
    %3877 = vmatpush1.bf16.msra.mxu0 0
    %3878 = vmatprep.subr.bf16.mxu0 0
    %3879 = vmatpush1.bf16.msra.mxu0 0
    %3880 = vmatprep.subr.bf16.mxu0 0
    %3881 = vmatpush1.bf16.msra.mxu0 0
    %3882 = vmatprep.subr.bf16.mxu0 0
    %3883 = vmatpush1.bf16.msra.mxu0 0
    %3884 = vmatprep.subr.bf16.mxu0 0
    %3885 = vmatpush1.bf16.msra.mxu0 0
    %3886 = vmatprep.subr.bf16.mxu0 0
    %3887 = vmatpush1.bf16.msra.mxu0 0
    %3888 = vmatprep.subr.bf16.mxu0 0
    %3889 = vmatpush1.bf16.msra.mxu0 0
    %3890 = vmatprep.subr.bf16.mxu0 0
    %3891 = vmatpush1.bf16.msra.mxu0 0
    %3892 = vmatprep.subr.bf16.mxu0 0
    %3893 = vmatpush1.bf16.msra.mxu0 0
    %3894 = vmatprep.subr.bf16.mxu0 0
    %3895 = vmatpush1.bf16.msra.mxu0 0
    %3896 = vmatprep.subr.bf16.mxu0 0
    %3897 = vmatpush1.bf16.msra.mxu0 0
    %3898 = vmatprep.subr.bf16.mxu0 0
    %3899 = vmatpush1.bf16.msra.mxu0 0
    %3900 = vmatprep.subr.bf16.mxu0 0
    %3901 = vmatpush1.bf16.msra.mxu0 0
    %3902 = vmatprep.subr.bf16.mxu0 0
    %3903 = vmatpush1.bf16.msra.mxu0 0
    %3904 = vmatprep.mubr.bf16.mxu0 0
    %3905 = vmatmul.mubr.bf16.gmra.mrb[0].mxu0 %v3870
    %v3906 = vpop.f32.mrb[0].mxu0
    %v3907 = vadd.f32 0.0, %v3906
    %v3908 = vpop.f32.mrb[0].mxu0
    %v3909 = vpop.f32.mrb[0].mxu0
    %v3910 = vpop.f32.mrb[0].mxu0
    %3911 = vdwg.mxu0
    %3913 = vrot.lane.b32.xlu0 %v3847, 32
    %v3914 = vpop.permute.xlu0 %3913
    %v3919 = vunpack.c.l.b16 %v3848
    %v3920 = vunpack.c.l.b16 %v3849
    %v3921 = vunpack.c.l.b16 %v3850
    %v3922 = vunpack.c.l.b16 %v3851
    %v3923 = vpack.c.b16 %v3920, %v3919
    %v3924 = vpack.c.b16 %v3922, %v3921
    %v3928 = vsel %vm85, %v3914, 0
    %3930 = vmatprep.subr.bf16.mxu0 0
    %3931 = vmatpush1.bf16.msra.mxu0 %v3923
    %3932 = vmatprep.subr.bf16.mxu0 0
    %3933 = vmatpush1.bf16.msra.mxu0 %v3924
    %3934 = vmatprep.subr.bf16.mxu0 0
    %3935 = vmatpush1.bf16.msra.mxu0 0
    %3936 = vmatprep.subr.bf16.mxu0 0
    %3937 = vmatpush1.bf16.msra.mxu0 0
    %3938 = vmatprep.subr.bf16.mxu0 0
    %3939 = vmatpush1.bf16.msra.mxu0 0
    %3940 = vmatprep.subr.bf16.mxu0 0
    %3941 = vmatpush1.bf16.msra.mxu0 0
    %3942 = vmatprep.subr.bf16.mxu0 0
    %3943 = vmatpush1.bf16.msra.mxu0 0
    %3944 = vmatprep.subr.bf16.mxu0 0
    %3945 = vmatpush1.bf16.msra.mxu0 0
    %3946 = vmatprep.subr.bf16.mxu0 0
    %3947 = vmatpush1.bf16.msra.mxu0 0
    %3948 = vmatprep.subr.bf16.mxu0 0
    %3949 = vmatpush1.bf16.msra.mxu0 0
    %3950 = vmatprep.subr.bf16.mxu0 0
    %3951 = vmatpush1.bf16.msra.mxu0 0
    %3952 = vmatprep.subr.bf16.mxu0 0
    %3953 = vmatpush1.bf16.msra.mxu0 0
    %3954 = vmatprep.subr.bf16.mxu0 0
    %3955 = vmatpush1.bf16.msra.mxu0 0
    %3956 = vmatprep.subr.bf16.mxu0 0
    %3957 = vmatpush1.bf16.msra.mxu0 0
    %3958 = vmatprep.subr.bf16.mxu0 0
    %3959 = vmatpush1.bf16.msra.mxu0 0
    %3960 = vmatprep.subr.bf16.mxu0 0
    %3961 = vmatpush1.bf16.msra.mxu0 0
    %3962 = vmatprep.mubr.bf16.mxu0 0
    %3963 = vmatmul.mubr.bf16.gmra.mrb[0].mxu0 %v3928
    %v3964 = vpop.f32.mrb[0].mxu0
    %v3965 = vadd.f32 %v3907, %v3964
    %v3966 = vpop.f32.mrb[0].mxu0
    %v3967 = vpop.f32.mrb[0].mxu0
    %v3968 = vpop.f32.mrb[0].mxu0
    %3969 = vdwg.mxu0
    %v3970 = vld [vmem:[%s8] sm:$0x1]
    %v3972 = vlaneseq
    %v3973 = vshrl.u32 %v3972, 7
    %v3974 = vsub.s32 0, %v3973
    %v3975 = vrot.slane %v3970, %v3974
    %v3977 = vadd.f32 %v3965, %v3975
    %v3978 = vxor.u32 %v3977, 2147483648
    %v3979 = vmul.f32 %v3978, 1.442695
    %v3980 = vpow.pop %v3979
    %v3981 = vadd.f32 %v3980, 1.0
    %v3982 = vrcp.pop %v3981
    %v3983 = vmul.f32 1.0, %v3982
    %v3984 = vmul.f32 %v3983, 2.0
    %v3985 = vsub.f32 %v3984, 1.0
    %3987 = vrot.lane.b32.xlu0 %v3846, 32
    %v3988 = vpop.permute.xlu0 %3987
    %v3990 = vmul.f32 %v3983, %v3988
    %3992 = vrot.lane.b32.xlu0 %v3985, 64
    %v3993 = vpop.permute.xlu0 %3992
    %v3995 = vmul.f32 %v3983, %v3993
    %3997 = vrot.lane.b32.xlu0 %v3995, 32
    %v3998 = vpop.permute.xlu0 %3997
    %v4000 = vadd.f32 %v3990, %v3998
    %v4001 = vtanh.pop %v4000
    %4003 = vrot.lane.b32.xlu0 %v4001, 64
    %v4004 = vpop.permute.xlu0 %4003
    %v4006 = vmul.f32 %v3983, %v4004
    %4008 = vrot.lane.b32.xlu0 %v4006, 32
    %v4009 = vpop.permute.xlu0 %4008
    %4011 = vst.msk [vmem:[%s224] sm:$0xff] %vm85, %v4009
    %4013 = vrot.lane.b32.xlu0 %v4000, 96
    %v4014 = vpop.permute.xlu0 %4013
    %4016 = vst.msk [vmem:[%s226] sm:$0xff] %vm85, %v4014
    %v4017 = vpack.c.bf16 %v4006, %v4006
    %v4018 = vld [vmem:[%s9] sm:$0xf]
    %v4019 = vld [vmem:[%s9 + $0x4] sm:$0xf]
    %v4020 = vld [vmem:[%s9 + $0x8] sm:$0xf]
    %v4021 = vld [vmem:[%s9 + $0xc] sm:$0xf]
    %4023 = vrot.lane.b32.xlu0 %v4017, 32
    %v4024 = vpop.permute.xlu0 %4023
    %v4029 = vunpack.c.l.b16 %v4018
    %v4030 = vunpack.c.l.b16 %v4019
    %v4031 = vunpack.c.l.b16 %v4020
    %v4032 = vunpack.c.l.b16 %v4021
    %v4033 = vpack.c.b16 %v4030, %v4029
    %v4034 = vpack.c.b16 %v4032, %v4031
    %v4038 = vsel %vm85, %v4024, 0
    %4040 = vmatprep.subr.bf16.mxu0 0
    %4041 = vmatpush1.bf16.msra.mxu0 %v4033
    %4042 = vmatprep.subr.bf16.mxu0 0
    %4043 = vmatpush1.bf16.msra.mxu0 %v4034
    %4044 = vmatprep.subr.bf16.mxu0 0
    %4045 = vmatpush1.bf16.msra.mxu0 0
    %4046 = vmatprep.subr.bf16.mxu0 0
    %4047 = vmatpush1.bf16.msra.mxu0 0
    %4048 = vmatprep.subr.bf16.mxu0 0
    %4049 = vmatpush1.bf16.msra.mxu0 0
    %4050 = vmatprep.subr.bf16.mxu0 0
    %4051 = vmatpush1.bf16.msra.mxu0 0
    %4052 = vmatprep.subr.bf16.mxu0 0
    %4053 = vmatpush1.bf16.msra.mxu0 0
    %4054 = vmatprep.subr.bf16.mxu0 0
    %4055 = vmatpush1.bf16.msra.mxu0 0
    %4056 = vmatprep.subr.bf16.mxu0 0
    %4057 = vmatpush1.bf16.msra.mxu0 0
    %4058 = vmatprep.subr.bf16.mxu0 0
    %4059 = vmatpush1.bf16.msra.mxu0 0
    %4060 = vmatprep.subr.bf16.mxu0 0
    %4061 = vmatpush1.bf16.msra.mxu0 0
    %4062 = vmatprep.subr.bf16.mxu0 0
    %4063 = vmatpush1.bf16.msra.mxu0 0
    %4064 = vmatprep.subr.bf16.mxu0 0
    %4065 = vmatpush1.bf16.msra.mxu0 0
    %4066 = vmatprep.subr.bf16.mxu0 0
    %4067 = vmatpush1.bf16.msra.mxu0 0
    %4068 = vmatprep.subr.bf16.mxu0 0
    %4069 = vmatpush1.bf16.msra.mxu0 0
    %4070 = vmatprep.subr.bf16.mxu0 0
    %4071 = vmatpush1.bf16.msra.mxu0 0
    %4072 = vmatprep.mubr.bf16.mxu0 0
    %4073 = vmatmul.mubr.bf16.gmra.mrb[0].mxu0 %v4038
    %v4074 = vpop.f32.mrb[0].mxu0
    %v4075 = vadd.f32 0.0, %v4074
    %v4076 = vpop.f32.mrb[0].mxu0
    %v4077 = vpop.f32.mrb[0].mxu0
    %v4078 = vpop.f32.mrb[0].mxu0
    %4079 = vdwg.mxu0
    %v4080 = vtanh.pop %v4075
    %v4081 = vpack.c.bf16 %v4080, %v4080
    %v4082 = vld [vmem:[%s10] sm:$0xf]
    %v4083 = vld [vmem:[%s10 + $0x4] sm:$0xf]
    %v4084 = vld [vmem:[%s10 + $0x8] sm:$0xf]
    %v4085 = vld [vmem:[%s10 + $0xc] sm:$0xf]
    %v4090 = vunpack.c.l.b16 %v4082
    %v4091 = vunpack.c.l.b16 %v4083
    %v4092 = vunpack.c.l.b16 %v4084
    %v4093 = vunpack.c.l.b16 %v4085
    %v4094 = vpack.c.b16 %v4091, %v4090
    %v4095 = vpack.c.b16 %v4093, %v4092
    %v4099 = vsel %vm85, %v4081, 0
    %4101 = vmatprep.subr.bf16.mxu0 0
    %4102 = vmatpush1.bf16.msra.mxu0 %v4094
    %4103 = vmatprep.subr.bf16.mxu0 0
    %4104 = vmatpush1.bf16.msra.mxu0 %v4095
    %4105 = vmatprep.subr.bf16.mxu0 0
    %4106 = vmatpush1.bf16.msra.mxu0 0
    %4107 = vmatprep.subr.bf16.mxu0 0
    %4108 = vmatpush1.bf16.msra.mxu0 0
    %4109 = vmatprep.subr.bf16.mxu0 0
    %4110 = vmatpush1.bf16.msra.mxu0 0
    %4111 = vmatprep.subr.bf16.mxu0 0
    %4112 = vmatpush1.bf16.msra.mxu0 0
    %4113 = vmatprep.subr.bf16.mxu0 0
    %4114 = vmatpush1.bf16.msra.mxu0 0
    %4115 = vmatprep.subr.bf16.mxu0 0
    %4116 = vmatpush1.bf16.msra.mxu0 0
    %4117 = vmatprep.subr.bf16.mxu0 0
    %4118 = vmatpush1.bf16.msra.mxu0 0
    %4119 = vmatprep.subr.bf16.mxu0 0
    %4120 = vmatpush1.bf16.msra.mxu0 0
    %4121 = vmatprep.subr.bf16.mxu0 0
    %4122 = vmatpush1.bf16.msra.mxu0 0
    %4123 = vmatprep.subr.bf16.mxu0 0
    %4124 = vmatpush1.bf16.msra.mxu0 0
    %4125 = vmatprep.subr.bf16.mxu0 0
    %4126 = vmatpush1.bf16.msra.mxu0 0
    %4127 = vmatprep.subr.bf16.mxu0 0
    %4128 = vmatpush1.bf16.msra.mxu0 0
    %4129 = vmatprep.subr.bf16.mxu0 0
    %4130 = vmatpush1.bf16.msra.mxu0 0
    %4131 = vmatprep.subr.bf16.mxu0 0
    %4132 = vmatpush1.bf16.msra.mxu0 0
    %4133 = vmatprep.mubr.bf16.mxu0 0
    %4134 = vmatmul.mubr.bf16.gmra.mrb[0].mxu0 %v4099
    %v4135 = vpop.f32.mrb[0].mxu0
    %v4136 = vadd.f32 0.0, %v4135
    %v4137 = vpop.f32.mrb[0].mxu0
    %v4138 = vpop.f32.mrb[0].mxu0
    %v4139 = vpop.f32.mrb[0].mxu0
    %4140 = vdwg.mxu0
    %v4141 = vtanh.pop %v4136
    %v4142 = vpack.c.bf16 %v4141, %v4141
    %v4143 = vld [vmem:[%s11] sm:$0xf]
    %v4144 = vld [vmem:[%s11 + $0x4] sm:$0xf]
    %v4145 = vld [vmem:[%s12] sm:$0x1]
    %v4147 = vlaneseq
    %v4148 = vshrl.u32 %v4147, 7
    %v4149 = vsub.s32 0, %v4148
    %v4150 = vrot.slane %v4145, %v4149
    %v4154 = vunpack.c.l.b16 %v4143
    %v4155 = vunpack.c.l.b16 %v4144
    %v4156 = vpack.c.b16 %v4155, %v4154
    %v4159 = vsel %vm539, %v4142, 0
    %4161 = vmatprep.subr.bf16.mxu0 0
    %4162 = vmatpush1.bf16.msra.mxu0 %v4156
    %4163 = vmatprep.subr.bf16.mxu0 0
    %4164 = vmatpush1.bf16.msra.mxu0 0
    %4165 = vmatprep.subr.bf16.mxu0 0
    %4166 = vmatpush1.bf16.msra.mxu0 0
    %4167 = vmatprep.subr.bf16.mxu0 0
    %4168 = vmatpush1.bf16.msra.mxu0 0
    %4169 = vmatprep.subr.bf16.mxu0 0
    %4170 = vmatpush1.bf16.msra.mxu0 0
    %4171 = vmatprep.subr.bf16.mxu0 0
    %4172 = vmatpush1.bf16.msra.mxu0 0
    %4173 = vmatprep.subr.bf16.mxu0 0
    %4174 = vmatpush1.bf16.msra.mxu0 0
    %4175 = vmatprep.subr.bf16.mxu0 0
    %4176 = vmatpush1.bf16.msra.mxu0 0
    %4177 = vmatprep.subr.bf16.mxu0 0
    %4178 = vmatpush1.bf16.msra.mxu0 0
    %4179 = vmatprep.subr.bf16.mxu0 0
    %4180 = vmatpush1.bf16.msra.mxu0 0
    %4181 = vmatprep.subr.bf16.mxu0 0
    %4182 = vmatpush1.bf16.msra.mxu0 0
    %4183 = vmatprep.subr.bf16.mxu0 0
    %4184 = vmatpush1.bf16.msra.mxu0 0
    %4185 = vmatprep.subr.bf16.mxu0 0
    %4186 = vmatpush1.bf16.msra.mxu0 0
    %4187 = vmatprep.subr.bf16.mxu0 0
    %4188 = vmatpush1.bf16.msra.mxu0 0
    %4189 = vmatprep.subr.bf16.mxu0 0
    %4190 = vmatpush1.bf16.msra.mxu0 0
    %4191 = vmatprep.subr.bf16.mxu0 0
    %4192 = vmatpush1.bf16.msra.mxu0 0
    %4193 = vmatprep.mubr.bf16.mxu0 0
    %4194 = vmatmul.mubr.bf16.gmra.mrb[0].mxu0 %v4159
    %v4195 = vpop.f32.mrb[0].mxu0
    %v4196 = vadd.f32 %v4150, %v4195
    %v4197 = vpop.f32.mrb[0].mxu0
    %v4198 = vpop.f32.mrb[0].mxu0
    %v4199 = vpop.f32.mrb[0].mxu0
    %4200 = vdwg.mxu0
    %s4201 = scalar_lea.vmem [#allocation4], 56
    %4202 = vst.msk [vmem:[%s4201] sm:$0xff] %vm129, %v4196
    // Predicated region
    $region58: #{fclstm_forward_seq.1} parent=1 // pred_check
      %p4203 = pneg %p50
    $region59: #{fclstm_forward_seq.1} parent=1 // pred_check_branch
      %4205 = sbr.rel (%p4203) target = $region61
    $region60: #{fclstm_forward_seq.1} parent=1 // pred_region
      %v4206 = vld [vmem:[#allocation2] sm:$0xff]
      %v4207 = vld [vmem:[#allocation2 + $0x8] sm:$0xff]
      %4208 = vst.msk [vmem:[#allocation6] sm:$0xff] %vm85, %v4206
      %4209 = vst.msk [vmem:[#allocation6 + $0x8] sm:$0xff] %vm85, %v4207
      %v4210 = vld [vmem:[#allocation3] sm:$0xff]
      %v4211 = vld [vmem:[#allocation3 + $0x8] sm:$0xff]
      %4212 = vst.msk [vmem:[#allocation8] sm:$0xff] %vm85, %v4210
      %4213 = vst.msk [vmem:[#allocation8 + $0x8] sm:$0xff] %vm85, %v4211
    $region61: #{fclstm_forward_seq.1} parent=1 // pred_fallthru
      _
    // Predicated region
    $region62: #{fclstm_forward_seq.1} parent=1 // pred_check
      _
    $region63: #{fclstm_forward_seq.1} parent=1 // pred_check_branch
      %4215 = sbr.rel (0) target = $region65
    $region64: #{fclstm_forward_seq.1} parent=1 // pred_region
      %s4217 = ssub.s32 1024, 1024
      %4218 = vsyncadd [#allocation5], %s4217
      %s4219 = sshll.u32 [#allocation4], 4
      %s4220 = int_to_ptr.vmem [resolvable:$true] %s4219
      %4225 = dma.vmem_to_hbm [thread:$0]  %s4220, 1024, %s13, [#allocation5], 128, 128, 8
    $region65: #{fclstm_forward_seq.1} parent=1 // pred_fallthru
      _
    // Predicated region
    $region66: #{fclstm_forward_seq.1} parent=1 // pred_check
      _
    $region67: #{fclstm_forward_seq.1} parent=1 // pred_check_branch
      %4227 = sbr.rel (0) target = $region69
    $region68: #{fclstm_forward_seq.1} parent=1 // pred_region
      %s4229 = ssub.s32 256, 256
      %4230 = vsyncadd [#allocation7], %s4229
      %s4231 = sshll.u32 [#allocation6], 4
      %s4232 = int_to_ptr.vmem [resolvable:$true] %s4231
      %4237 = dma.vmem_to_hbm [thread:$0]  %s4232, 256, %s14, [#allocation7], 128, 128, 8
    $region69: #{fclstm_forward_seq.1} parent=1 // pred_fallthru
      _
    // Predicated region
    $region70: #{fclstm_forward_seq.1} parent=1 // pred_check
      _
    $region71: #{fclstm_forward_seq.1} parent=1 // pred_check_branch
      %4239 = sbr.rel (0) target = $region73
    $region72: #{fclstm_forward_seq.1} parent=1 // pred_region
      %s4241 = ssub.s32 256, 256
      %4242 = vsyncadd [#allocation7], %s4241
      %s4243 = sshll.u32 [#allocation8], 4
      %s4244 = int_to_ptr.vmem [resolvable:$true] %s4243
      %4249 = dma.vmem_to_hbm [thread:$0]  %s4244, 256, %s15, [#allocation7], 128, 128, 8
    $region73: #{fclstm_forward_seq.1} parent=1 // pred_fallthru
      _
    // Predicated region
    $region74: #{fclstm_forward_seq.1} parent=1 // pred_check
      _
    $region75: #{fclstm_forward_seq.1} parent=1 // pred_check_branch
      %4251 = sbr.rel (0) target = $region77
    $region76: #{fclstm_forward_seq.1} parent=1 // pred_region
      %4252 = dma.done [#allocation5], 1024
    $region77: #{fclstm_forward_seq.1} parent=1 // pred_fallthru
      _
    // Predicated region
    $region78: #{fclstm_forward_seq.1} parent=1 // pred_check
      _
    $region79: #{fclstm_forward_seq.1} parent=1 // pred_check_branch
      %4254 = sbr.rel (0) target = $region81
    $region80: #{fclstm_forward_seq.1} parent=1 // pred_region
      %4255 = dma.done [#allocation7], 256
    $region81: #{fclstm_forward_seq.1} parent=1 // pred_fallthru
      _
    // Predicated region
    $region82: #{fclstm_forward_seq.1} parent=1 // pred_check
      _
    $region83: #{fclstm_forward_seq.1} parent=1 // pred_check_branch
      %4257 = sbr.rel (0) target = $region85
    $region84: #{fclstm_forward_seq.1} parent=1 // pred_region
      %4258 = dma.done [#allocation7], 256
    $region85: #{fclstm_forward_seq.1} parent=1 // pred_fallthru
      _
    %4259 = vsyncpa [#allocation5], 1
    %4260 = vsyncpa [#allocation7], 1

</llo_original>
